<compile_context>
chip_gen: v6e
topology: v6e:2x2x1
jax: 0.10.0
libtpu: 0.0.40
codegen_flags: <defaults>
</compile_context>

<pallas_src>
import functools

import jax
import jax.numpy as jnp
from jax.experimental import pallas as pl
from jax.experimental.pallas import tpu as pltpu


_LANE = 128
_COMPUTE_DTYPE = jnp.bfloat16  # streaming dtype for x and W


def _round_up(x, m):
    return (x + m - 1) // m * m


def _largest_div_mult_of_lane(dim, cap):
    """Largest divisor of `dim` that is a multiple of 128 and <= cap, else `dim`."""
    cap = min(dim, cap)
    t = cap - cap % _LANE
    while t >= _LANE:
        if dim % t == 0:
            return t
        t -= _LANE
    return dim  # full extent is always a legal block


def _tpu_vmem_capacity_bytes():
    """Physical VMEM capacity, conservatively defaulting to 64 MiB (v7x-sized)."""
    getter = getattr(pltpu, "get_tpu_info", None)
    if getter is not None:
        try:
            cap = int(getattr(getter(), "vmem_capacity_bytes", 0))
            if cap > 0:
                return cap
        except Exception:
            pass
    return 64 * 1024 * 1024


@functools.lru_cache(maxsize=None)
def _tiling_config():
    """(vmem_limit_bytes, weight_budget_bytes, n_split) chosen per TPU generation.

    v5e/v6e (128 MiB VMEM, 1 TC):  vmem_limit ~96 MiB, weight budget ~72 MiB,
                                    n_split=1 (full-width tn, bigger DMA rows).
    v7x     (64 MiB VMEM, 2 TCs):  vmem_limit ~48 MiB, weight budget ~36 MiB,
                                    n_split=2 (parallel N axis shards across TCs).
    """
    cap = _tpu_vmem_capacity_bytes()
    vmem_limit = (cap * 3) // 4
    weight_budget = (vmem_limit * 3) // 4
    n_split = 2 if cap <= 64 * 1024 * 1024 else 1
    return vmem_limit, weight_budget, n_split


def _choose_tiles(K, N, itemsize, *, weight_budget, n_split):
    """Pick (tk, tn) so 2x (tk*tn) double-buffered weight tiles fit `weight_budget`
    and the N axis splits into >= n_split tiles."""
    tn_cap = N // n_split if N >= _LANE * n_split else N
    tn = _largest_div_mult_of_lane(N, max(tn_cap, _LANE))
    per_buffer = weight_budget // 2
    tk_cap = max(_LANE, per_buffer // (tn * itemsize))
    tk = _largest_div_mult_of_lane(K, tk_cap)
    return tk, tn


def _linear_kernel(x_ref, w_ref, b_ref, o_ref, acc_ref, *, leaky, slope):
    """One (n-tile, k-tile) step of y = x @ W + b, optional LeakyReLU epilogue."""
    k = pl.program_id(1)

    @pl.when(k == 0)
    def _():
        acc_ref[...] = jnp.zeros_like(acc_ref)

    # bf16 x bf16 -> f32 accumulation on the MXU.
    acc_ref[...] += jnp.dot(
        x_ref[...], w_ref[...], preferred_element_type=jnp.float32
    )

    @pl.when(k == pl.num_programs(1) - 1)
    def _():
        y = acc_ref[...] + b_ref[...]
        if leaky:
            y = jnp.where(y >= 0, y, slope * y)
        o_ref[...] = y.astype(o_ref.dtype)


def prepare_linear_params(w, b):
    """One-time weight prep (hoisted out of the forward): pad N to a multiple of
    128 for lane-dense stores and cast to bf16 for streaming."""
    K, N = w.shape
    assert b.shape == (N,)
    N_pad = _round_up(N, _LANE)
    if N_pad != N:
        w = jnp.pad(w, ((0, 0), (0, N_pad - N)))
        b = jnp.pad(b, (0, N_pad - N))
    return {
        "w": jnp.asarray(w, _COMPUTE_DTYPE),
        "b": jnp.asarray(b, jnp.float32).reshape(1, N_pad),
        "n_valid": int(N),
    }


def prepare_darknet_params(params):
    """Call once; reuse the result for every forward pass."""
    return {
        "fc1": prepare_linear_params(params["w1"], params["b1"]),
        "fc2": prepare_linear_params(params["w2"], params["b2"]),
    }


def pallas_linear(x, prep, *, leaky=False, slope=0.01, out_dtype=jnp.float32):
    """y = x @ W + b (optionally followed by LeakyReLU) with pre-prepared weights."""
    w, b2d, n_valid = prep["w"], prep["b"], prep["n_valid"]
    B, K = x.shape
    K2, N_pad = w.shape
    assert K == K2 and b2d.shape == (1, N_pad) and N_pad % _LANE == 0
    assert w.dtype == _COMPUTE_DTYPE, "weights must be prepared via prepare_linear_params"

    # Activations are tiny (B x K); casting them here is negligible vs. the weight stream.
    if x.dtype != _COMPUTE_DTYPE:
        x = x.astype(_COMPUTE_DTYPE)

    vmem_limit, weight_budget, n_split = _tiling_config()
    itemsize = jnp.dtype(_COMPUTE_DTYPE).itemsize
    tk, tn = _choose_tiles(K, N_pad, itemsize,
                           weight_budget=weight_budget, n_split=n_split)
    assert K % tk == 0 and N_pad % tn == 0
    grid = (N_pad // tn, K // tk)

    cost = pl.CostEstimate(
        flops=2 * B * K * N_pad,
        transcendentals=0,
        bytes_accessed=(K * N_pad * itemsize              # weight stream (dominant)
                        + B * K * itemsize                # activations
                        + N_pad * 4                       # bias
                        + B * N_pad * jnp.dtype(out_dtype).itemsize),
    )

    kernel = functools.partial(_linear_kernel, leaky=leaky, slope=slope)
    out = pl.pallas_call(
        kernel,
        out_shape=jax.ShapeDtypeStruct((B, N_pad), out_dtype),
        grid_spec=pltpu.PrefetchScalarGridSpec(
            num_scalar_prefetch=0,
            grid=grid,
            in_specs=[
                pl.BlockSpec((B, tk), lambda j, k: (0, k)),   # activations (tiny)
                pl.BlockSpec((tk, tn), lambda j, k: (k, j)),  # weights (the big stream)
                pl.BlockSpec((1, tn), lambda j, k: (0, j)),   # bias
            ],
            out_specs=pl.BlockSpec((B, tn), lambda j, k: (0, j)),
            scratch_shapes=[pltpu.VMEM((B, tn), jnp.float32)],
        ),
        compiler_params=pltpu.CompilerParams(
            dimension_semantics=("parallel", "arbitrary"),
            vmem_limit_bytes=vmem_limit,
        ),
        cost_estimate=cost,
    )(x, w, b2d)

    return out if N_pad == n_valid else out[:, :n_valid]


def darknet_forward(x_nchw, prepared_params, *, negative_slope=0.01):
    """DarkNet.forward: x -> conv -> Flatten -> Linear -> Dropout -> LeakyReLU -> Linear."""
    # TODO(synk): `self.conv = convolution_layers` is an externally injected submodule
    # (not defined in this class); treated as identity, so x_nchw is already the
    # (B, C, S, S) conv feature map feeding the fully-connected head.
    B = x_nchw.shape[0]
    x = x_nchw.reshape(B, -1)  # nn.Flatten()

    # Linear(in, hidden) -> Dropout(0.1) [identity at inference] -> LeakyReLU (fused).
    h = pallas_linear(
        x, prepared_params["fc1"], leaky=True, slope=negative_slope,
        out_dtype=jnp.bfloat16,
    )
    # Linear(hidden, 7*7*(2*(1+4)+num_cls)); N padded internally, sliced back.
    y = pallas_linear(h, prepared_params["fc2"], leaky=False, out_dtype=jnp.float32)
    return y


def _reference_forward(x_nchw, params, *, negative_slope=0.01):
    """Mixed-precision (bf16 operands, f32 accumulate) reference matching the kernel."""
    B = x_nchw.shape[0]
    x = x_nchw.reshape(B, -1).astype(jnp.bfloat16)
    w1 = params["w1"].astype(jnp.bfloat16)
    w2 = params["w2"].astype(jnp.bfloat16)
    h = jnp.dot(x, w1, preferred_element_type=jnp.float32) + params["b1"]
    h = jnp.where(h >= 0, h, negative_slope * h).astype(jnp.bfloat16)
    return jnp.dot(h, w2, preferred_element_type=jnp.float32) + params["b2"]


if __name__ == "__main__":
    # Small shapes consistent with the module's structure (original sizes are
    # C=1024, S=7, hidden=4096, num_cls=20; scaled down here to stay small).
    B, C, S = 2, 128, 7
    HIDDEN = 512
    NUM_CLS = 20
    IN_FEATURES = C * S * S                          # flatten dim (orig: 1024*7*7)
    OUT_FEATURES = S * S * (2 * (1 + 4) + NUM_CLS)   # 7*7*30 = 1470 (padded to 1536 inside)

    key = jax.random.PRNGKey(0)
    kx, k1, k2, k3, k4 = jax.random.split(key, 5)
    x = jax.random.normal(kx, (B, C, S, S), dtype=jnp.float32)
    params = {
        "w1": jax.random.normal(k1, (IN_FEATURES, HIDDEN), jnp.float32)
        * (1.0 / jnp.sqrt(IN_FEATURES)),
        "b1": jax.random.normal(k2, (HIDDEN,), jnp.float32) * 0.01,
        "w2": jax.random.normal(k3, (HIDDEN, OUT_FEATURES), jnp.float32)
        * (1.0 / jnp.sqrt(HIDDEN)),
        "b2": jax.random.normal(k4, (OUT_FEATURES,), jnp.float32) * 0.01,
    }

    # One-time weight prep (cast + pad) hoisted out of the per-forward path.
    prepared = prepare_darknet_params(params)
    jax.block_until_ready(prepared)

    y = darknet_forward(x, prepared)
    jax.block_until_ready(y)

    assert y.shape == (B, OUT_FEATURES), y.shape
    y_ref = _reference_forward(x, params)
    assert jnp.allclose(y, y_ref, rtol=2e-2, atol=2e-2), "mismatch vs. reference"

    print("KERNEL_OK")
</pallas_src>

<mosaic_0001>
module attributes {stable_mosaic.version = 11 : i64} {
  func.func @_linear_kernel(%arg0: i32, %arg1: i32, %arg2: memref<2x6272xbf16, #tpu.memory_space<vmem>>, %arg3: memref<6272x256xbf16, #tpu.memory_space<vmem>>, %arg4: memref<1x256xf32, #tpu.memory_space<vmem>>, %arg5: memref<2x256xbf16, #tpu.memory_space<vmem>>, %arg6: memref<2x256xf32, #tpu.memory_space<vmem>>) attributes {dimension_semantics = [#tpu.dimension_semantics<parallel>, #tpu.dimension_semantics<arbitrary>], iteration_bounds = array<i64: 2, 1>, scalar_prefetch = 0 : i64, scratch_operands = 1 : i64, tpu.core_type = #tpu.core_type<tc>, window_params = [{transform_indices = @transform_0, window_bounds = array<i64: 2, 6272>}, {transform_indices = @transform_1, window_bounds = array<i64: 6272, 256>}, {transform_indices = @transform_2, window_bounds = array<i64: 1, 256>}, {transform_indices = @transform_3, window_bounds = array<i64: 2, 256>}]} {
    %c0_i32 = arith.constant 0 : i32
    %0 = arith.cmpi eq, %arg1, %c0_i32 : i32
    %1 = arith.extui %0 : i1 to i32
    %c0_i32_0 = arith.constant 0 : i32
    %2 = arith.cmpi ne, %1, %c0_i32_0 : i32
    scf.if %2 {
      %cst_10 = arith.constant 0.000000e+00 : f32
      %12 = vector.broadcast %cst_10 : f32 to vector<2x256xf32>
      %c0_11 = arith.constant 0 : index
      %c0_12 = arith.constant 0 : index
      %13 = vector.load %arg6[%c0_11, %c0_12] : memref<2x256xf32, #tpu.memory_space<vmem>>, vector<2x256xf32>
      tpu.vector_store %arg6[%c0_11, %c0_12], %12 {strides = array<i32>} : memref<2x256xf32, #tpu.memory_space<vmem>>, vector<2x256xf32>,
    } else {
    }
    %c0 = arith.constant 0 : index
    %c0_1 = arith.constant 0 : index
    %3 = vector.load %arg6[%c0, %c0_1] : memref<2x256xf32, #tpu.memory_space<vmem>>, vector<2x256xf32>
    %c0_2 = arith.constant 0 : index
    %c0_3 = arith.constant 0 : index
    %4 = vector.load %arg2[%c0_2, %c0_3] : memref<2x6272xbf16, #tpu.memory_space<vmem>>, vector<2x6272xbf16>
    %c0_4 = arith.constant 0 : index
    %c0_5 = arith.constant 0 : index
    %5 = vector.load %arg3[%c0_4, %c0_5] : memref<6272x256xbf16, #tpu.memory_space<vmem>>, vector<6272x256xbf16>
    %cst = arith.constant dense<0.000000e+00> : vector<2x256xf32>
    %6 = tpu.matmul %4, %5, %cst {dimension_numbers = #tpu.dot_dimension_numbers<[1], [0], [0], [1], [0, 0, 1, 1], [], []>} : vector<2x6272xbf16>, vector<6272x256xbf16>, vector<2x256xf32> -> vector<2x256xf32>
    %7 = arith.addf %3, %6 : vector<2x256xf32>
    %c0_6 = arith.constant 0 : index
    %c0_7 = arith.constant 0 : index
    %8 = vector.load %arg6[%c0_6, %c0_7] : memref<2x256xf32, #tpu.memory_space<vmem>>, vector<2x256xf32>
    tpu.vector_store %arg6[%c0_6, %c0_7], %7 {strides = array<i32>} : memref<2x256xf32, #tpu.memory_space<vmem>>, vector<2x256xf32>,
    %c0_i32_8 = arith.constant 0 : i32
    %9 = arith.cmpi eq, %arg1, %c0_i32_8 : i32
    %10 = arith.extui %9 : i1 to i32
    %c0_i32_9 = arith.constant 0 : i32
    %11 = arith.cmpi ne, %10, %c0_i32_9 : i32
    scf.if %11 {
      %c0_10 = arith.constant 0 : index
      %c0_11 = arith.constant 0 : index
      %12 = vector.load %arg6[%c0_10, %c0_11] : memref<2x256xf32, #tpu.memory_space<vmem>>, vector<2x256xf32>
      %c0_12 = arith.constant 0 : index
      %c0_13 = arith.constant 0 : index
      %13 = vector.load %arg4[%c0_12, %c0_13] : memref<1x256xf32, #tpu.memory_space<vmem>>, vector<1x256xf32>
      %14 = vector.broadcast %13 : vector<1x256xf32> to vector<2x256xf32>
      %15 = arith.addf %12, %14 : vector<2x256xf32>
      %cst_14 = arith.constant 0.000000e+00 : f32
      %16 = vector.broadcast %cst_14 : f32 to vector<2x256xf32>
      %17 = arith.cmpf oge, %15, %16 : vector<2x256xf32>
      %cst_15 = arith.constant 0.00999999977 : f32
      %18 = vector.broadcast %cst_15 : f32 to vector<2x256xf32>
      %19 = arith.mulf %18, %15 : vector<2x256xf32>
      %20 = arith.select %17, %15, %19 : vector<2x256xi1>, vector<2x256xf32>
      %21 = arith.truncf %20 : vector<2x256xf32> to vector<2x256xbf16>
      %c0_16 = arith.constant 0 : index
      %c0_17 = arith.constant 0 : index
      %22 = vector.load %arg5[%c0_16, %c0_17] : memref<2x256xbf16, #tpu.memory_space<vmem>>, vector<2x256xbf16>
      tpu.vector_store %arg5[%c0_16, %c0_17], %21 {strides = array<i32>} : memref<2x256xbf16, #tpu.memory_space<vmem>>, vector<2x256xbf16>,
    } else {
    }
    return
  }
  func.func @transform_0(%arg0: i32, %arg1: i32) -> (i32, i32) {
    %c0_i32 = arith.constant 0 : i32
    %c0_i32_0 = arith.constant 0 : i32
    return %c0_i32, %arg1 : i32, i32
  }
  func.func @transform_1(%arg0: i32, %arg1: i32) -> (i32, i32) {
    %c0_i32 = arith.constant 0 : i32
    return %arg1, %arg0 : i32, i32
  }
  func.func @transform_2(%arg0: i32, %arg1: i32) -> (i32, i32) {
    %c0_i32 = arith.constant 0 : i32
    %c0_i32_0 = arith.constant 0 : i32
    return %c0_i32, %arg0 : i32, i32
  }
  func.func @transform_3(%arg0: i32, %arg1: i32) -> (i32, i32) {
    %c0_i32 = arith.constant 0 : i32
    %c0_i32_0 = arith.constant 0 : i32
    return %c0_i32, %arg0 : i32, i32
  }
}

</mosaic_0001>

<llo_original>
// kernel: tpu_custom_call.1
$region0: #{tpu_custom_call.1}
  #allocation0 [shape = 'u32[]', space=smem, size = 0x4, offset = 0x4, fixed_abs, tag = 'smem constant byte address 0x4 - core index']
  #allocation1 [shape = 'u32[144,128]{1,0:T(1,128)}', space=vmem, size = 0x12000, scoped, tag = 'internal scratch']
  #allocation2 [shape = 'f32[2,256]{1,0:T(2,128)}', space=vmem, size = 0x800, scoped, tag = 'scratch operand']
  %s0 = inlined_call_operand.hbm [shape: bf16[2,6272], index: 0, kind: input, shape index: {}]
  %s1 = inlined_call_operand.hbm [shape: bf16[6272,512], index: 1, kind: input, shape index: {}]
  %s2 = inlined_call_operand.hbm [shape: f32[1,512], index: 2, kind: input, shape index: {}]
  %s3 = inlined_call_operand.hbm [shape: bf16[2,512], index: 3, kind: output, shape index: {}]
  %s4 = sld [smem:[#allocation0]]
  $region65: #{tpu_custom_call.1} parent=0
    _
  %s6 = ssub.s32 1, %s4
  %s7 = scalar_select 0, %s6, %s4
  $region1: #{tpu_custom_call.1} parent=0
    #allocation3 [shape = 'u8[25088]{0}', space=vmem, size = 0x6400, scoped, tag = 'input window, operand 0, single buffered']
    #allocation4 [shape = 's32[2]{0}', space=sflag, size = 0x8, scoped, tag = 'scoped memory for tpu_custom_call.1']
    #allocation5 [shape = 's32[2]{0}', space=sflag, size = 0x8, scoped, tag = 'scoped memory for tpu_custom_call.1']
    #allocation6 [shape = 'u8[6422528]{0}', space=vmem, size = 0x620000, scoped, tag = 'input window, operand 1']
    #allocation7 [shape = 's32[2]{0}', space=sflag, size = 0x8, scoped, tag = 'scoped memory for tpu_custom_call.1']
    #allocation8 [shape = 'u8[2048]{0}', space=vmem, size = 0x800, scoped, tag = 'input window, operand 2']
    #allocation9 [shape = 'u8[2048]{0}', space=vmem, size = 0x800, scoped, tag = 'output window, operand 0']
    %8 = vsyncpa [#allocation4], 0
    %9 = vsyncpa [#allocation7], 0
    %s10 = scalar_lea.sflag [#allocation7], 1
    %11 = vsyncpa %s10, 0
    %12 = vsyncpa [#allocation5], 0
    %s13 = scalar_lea.sflag [#allocation5], 1
    %14 = vsyncpa %s13, 0
    loop: start=0, step=1, limit=4
    $region2: #{tpu_custom_call.1} parent=1 // loop_pre_header
      _
    $region3: #{tpu_custom_call.1} parent=1 // loop_header
      %s16 = sphi 0, %s20
      %p17 = scmp.ge.s32.totalorder %s16, 4
      %s23 = sphi 0, %s35
      %s24 = sphi 0, %s31
      %s25 = sphi 0, %s23
      %s26 = sphi 0, %s24
      %s27 = sphi 0, %s25
      %s28 = sphi 0, %s26
      %s38 = sphi 0, %s40
      %s41 = sphi 0, %s38
      %s42 = sphi 0, %s41
      %s58 = sphi 0, %s42
      %s66 = sphi 0, %s68
      %s69 = sphi 0, %s66
      %s70 = sphi 0, %s69
      %s86 = sphi 0, %s70
      %s92 = sphi 0, %s94
      %s95 = sphi 0, %s92
      %s96 = sphi 0, %s95
      %s112 = sphi 0, %s96
      %s118 = sphi 0, %s120
      %s121 = sphi 0, %s118
      %s122 = sphi 0, %s121
      %s138 = sphi 0, %s122
    $region4: #{tpu_custom_call.1} parent=1 // loop_header_branch
      %19 = sbr.rel (%p17) target = $region8
    $region5: #{tpu_custom_call.1} parent=1 // loop_body
      %s21 = ssub.s32 %s16, 1
      %s22 = ssub.s32 %s16, 2
      %s29 = sadd.s32 1, %s24
      %p30 = scmp.ge.s32.totalorder %s29, 1
      %s31 = scalar_select %p30, 0, %s29
      %s32 = sadd.s32 1, %s23
      %s33 = scalar_select %p30, %s32, %s23
      %p34 = scmp.ge.s32.totalorder %s33, 2
      %s35 = scalar_select %p34, 0, %s33
      %s36 = ssub.s32 %s24, %s31
      %p37 = scmp.eq.s32.totalorder %s36, 0
      %s39 = sadd.s32 %s38, 1
      %s40 = scalar_select %p37, %s38, %s39
      %p43 = pneg %p37
      %p44 = scmp.eq.s32.totalorder %s16, 1
      %p45 = por %p43, %p44
      %p46 = scmp.ne.s32.totalorder %s38, %s41
      %p47 = scmp.eq.s32.totalorder %s16, 0
      %p48 = por %p46, %p47
      %p49 = scmp.ne.s32.totalorder %s38, %s41
      %p50 = scmp.eq.s32.totalorder %s21, 1
      %p51 = por %p49, %p50
      %p52 = scmp.ne.s32.totalorder %s41, %s42
      %p53 = scmp.eq.s32.totalorder %s21, 0
      %p54 = por %p52, %p53
      %p55 = scmp.ne.s32.totalorder %s41, %s42
      %p56 = scmp.eq.s32.totalorder %s22, 1
      %p57 = por %p55, %p56
      %p59 = scmp.ne.s32.totalorder %s42, %s58
      %p60 = scmp.eq.s32.totalorder %s22, 0
      %p61 = por %p59, %p60
      %s62 = ssub.s32 %s24, %s31
      %s63 = ssub.s32 %s23, %s35
      %s64 = sor.u32 %s62, %s63
      %p65 = scmp.eq.s32.totalorder %s64, 0
      %s67 = sadd.s32 %s66, 1
      %s68 = scalar_select %p65, %s66, %s67
      %p71 = pneg %p65
      %p72 = scmp.eq.s32.totalorder %s16, 1
      %p73 = por %p71, %p72
      %p74 = scmp.ne.s32.totalorder %s66, %s69
      %p75 = scmp.eq.s32.totalorder %s16, 0
      %p76 = por %p74, %p75
      %p77 = scmp.ne.s32.totalorder %s66, %s69
      %p78 = scmp.eq.s32.totalorder %s21, 1
      %p79 = por %p77, %p78
      %p80 = scmp.ne.s32.totalorder %s69, %s70
      %p81 = scmp.eq.s32.totalorder %s21, 0
      %p82 = por %p80, %p81
      %p83 = scmp.ne.s32.totalorder %s69, %s70
      %p84 = scmp.eq.s32.totalorder %s22, 1
      %p85 = por %p83, %p84
      %p87 = scmp.ne.s32.totalorder %s70, %s86
      %p88 = scmp.eq.s32.totalorder %s22, 0
      %p89 = por %p87, %p88
      %s90 = ssub.s32 %s23, %s35
      %p91 = scmp.eq.s32.totalorder %s90, 0
      %s93 = sadd.s32 %s92, 1
      %s94 = scalar_select %p91, %s92, %s93
      %p97 = pneg %p91
      %p98 = scmp.eq.s32.totalorder %s16, 1
      %p99 = por %p97, %p98
      %p100 = scmp.ne.s32.totalorder %s92, %s95
      %p101 = scmp.eq.s32.totalorder %s16, 0
      %p102 = por %p100, %p101
      %p103 = scmp.ne.s32.totalorder %s92, %s95
      %p104 = scmp.eq.s32.totalorder %s21, 1
      %p105 = por %p103, %p104
      %p106 = scmp.ne.s32.totalorder %s95, %s96
      %p107 = scmp.eq.s32.totalorder %s21, 0
      %p108 = por %p106, %p107
      %p109 = scmp.ne.s32.totalorder %s95, %s96
      %p110 = scmp.eq.s32.totalorder %s22, 1
      %p111 = por %p109, %p110
      %p113 = scmp.ne.s32.totalorder %s96, %s112
      %p114 = scmp.eq.s32.totalorder %s22, 0
      %p115 = por %p113, %p114
      %s116 = ssub.s32 %s23, %s35
      %p117 = scmp.eq.s32.totalorder %s116, 0
      %s119 = sadd.s32 %s118, 1
      %s120 = scalar_select %p117, %s118, %s119
      %p123 = pneg %p117
      %p124 = scmp.eq.s32.totalorder %s16, 1
      %p125 = por %p123, %p124
      %p126 = scmp.ne.s32.totalorder %s118, %s121
      %p127 = scmp.eq.s32.totalorder %s16, 0
      %p128 = por %p126, %p127
      %p129 = scmp.ne.s32.totalorder %s118, %s121
      %p130 = scmp.eq.s32.totalorder %s21, 1
      %p131 = por %p129, %p130
      %p132 = scmp.ne.s32.totalorder %s121, %s122
      %p133 = scmp.eq.s32.totalorder %s21, 0
      %p134 = por %p132, %p133
      %p135 = scmp.ne.s32.totalorder %s121, %s122
      %p136 = scmp.eq.s32.totalorder %s22, 1
      %p137 = por %p135, %p136
      %p139 = scmp.ne.s32.totalorder %s122, %s138
      %p140 = scmp.eq.s32.totalorder %s22, 0
      %p141 = por %p139, %p140
      %p142 = scmp.le.s32.totalorder 1, %s16
      %p143 = scmp.lt.s32.totalorder %s16, 3
      %p144 = pnand %p142, %p143
      %p145 = pneg %p144
      // Predicated region
      $region9: #{tpu_custom_call.1} parent=5 // pred_check
        _
      $region10: #{tpu_custom_call.1} parent=5 // pred_check_branch
        %147 = sbr.rel (%p144) target = $region12
      $region11: #{tpu_custom_call.1} parent=5 // pred_region
        %s148 = ssub.s32 %s16, 1
        // Predicated region
        $region13: #{tpu_custom_call.1} parent=11 // pred_check
          %p149 = pneg %p54
        $region14: #{tpu_custom_call.1} parent=11 // pred_check_branch
          %151 = sbr.rel (%p149) target = $region16
        $region15: #{tpu_custom_call.1} parent=11 // pred_region
          %s152 = smul.u32 49, %s26
          %s154 = ssub.s32 784, 784
          %155 = vsyncadd [#allocation4], %s154
          %s156 = smul.addr %s152, 16
          %s157 = scalar_lea.hbm %s0, %s156
          %s159 = sshll.u32 [#allocation3], 4
          %s160 = int_to_ptr.vmem [resolvable:$true] %s159
          %162 = dma.hbm_to_vmem [thread:$0]  %s157, 784, %s160, [#allocation4]
        $region16: #{tpu_custom_call.1} parent=11 // pred_fallthru
          _
      $region12: #{tpu_custom_call.1} parent=5 // pred_fallthru
        _
      %p163 = scmp.lt.s32.totalorder %s16, 2
      // Predicated region
      $region17: #{tpu_custom_call.1} parent=5 // pred_check
        %p164 = pneg %p163
      $region18: #{tpu_custom_call.1} parent=5 // pred_check_branch
        %166 = sbr.rel (%p164) target = $region20
      $region19: #{tpu_custom_call.1} parent=5 // pred_region
        // Predicated region
        $region21: #{tpu_custom_call.1} parent=19 // pred_check
          %p167 = pneg %p76
        $region22: #{tpu_custom_call.1} parent=19 // pred_check_branch
          %169 = sbr.rel (%p167) target = $region24
        $region23: #{tpu_custom_call.1} parent=19 // pred_region
          %s170 = sand.u32 %s16, 1
          %s171 = scalar_lea.sflag [#allocation7], %s170
          %s172 = sand.u32 %s66, 1
          %s173 = smul.addr %s172, 6272
          %s174 = scalar_lea.vmem [#allocation6], %s173
          %s175 = smul.u32 784, %s24
          %s176 = smul.u32 2, %s23
          %s178 = ssub.s32 100352, 100352
          %179 = vsyncadd %s171, %s178
          %s180 = smul.addr %s175, 4
          %s181 = sadd.s32 %s176, %s180
          %s182 = smul.addr %s181, 64
          %s183 = scalar_lea.hbm %s1, %s182
          %s184 = sshll.u32 %s174, 4
          %s185 = int_to_ptr.vmem [resolvable:$true] %s184
          %190 = dma.hbm_to_vmem [thread:$0]  %s183, 100352, %s185, %s171, 256, 128, 8
        $region24: #{tpu_custom_call.1} parent=19 // pred_fallthru
          _
        // Predicated region
        $region25: #{tpu_custom_call.1} parent=19 // pred_check
          %p191 = pneg %p102
        $region26: #{tpu_custom_call.1} parent=19 // pred_check_branch
          %193 = sbr.rel (%p191) target = $region28
        $region27: #{tpu_custom_call.1} parent=19 // pred_region
          %s194 = sand.u32 %s16, 1
          %s195 = scalar_lea.sflag [#allocation7], %s194
          %s196 = sand.u32 %s92, 1
          %s197 = smul.addr %s196, 2
          %s198 = scalar_lea.vmem [#allocation8], %s197
          %s199 = smul.u32 2, %s23
          %s201 = ssub.s32 32, 32
          %202 = vsyncadd %s195, %s201
          %s203 = smul.addr %s199, 16
          %s204 = scalar_lea.hbm %s2, %s203
          %s206 = sshll.u32 %s198, 4
          %s207 = int_to_ptr.vmem [resolvable:$true] %s206
          %209 = dma.hbm_to_vmem [thread:$0]  %s204, 32, %s207, %s195
        $region28: #{tpu_custom_call.1} parent=19 // pred_fallthru
          _
      $region20: #{tpu_custom_call.1} parent=5 // pred_fallthru
        _
      %p210 = scmp.le.s32.totalorder 1, %s16
      %p211 = scmp.lt.s32.totalorder %s16, 3
      %p212 = pnand %p210, %p211
      %p213 = pneg %p212
      // Predicated region
      $region29: #{tpu_custom_call.1} parent=5 // pred_check
        _
      $region30: #{tpu_custom_call.1} parent=5 // pred_check_branch
        %215 = sbr.rel (%p212) target = $region32
      $region31: #{tpu_custom_call.1} parent=5 // pred_region
        %s216 = ssub.s32 %s16, 1
        // Predicated region
        $region33: #{tpu_custom_call.1} parent=31 // pred_check
          %p217 = pneg %p54
        $region34: #{tpu_custom_call.1} parent=31 // pred_check_branch
          %219 = sbr.rel (%p217) target = $region36
        $region35: #{tpu_custom_call.1} parent=31 // pred_region
          %220 = dma.done [#allocation4], 784
        $region36: #{tpu_custom_call.1} parent=31 // pred_fallthru
          _
        %s221 = sand.u32 %s21, 1
        %s222 = scalar_lea.sflag [#allocation7], %s221
        %s223 = sand.u32 %s69, 1
        %s224 = smul.addr %s223, 6272
        %s225 = scalar_lea.vmem [#allocation6], %s224
        // Predicated region
        $region37: #{tpu_custom_call.1} parent=31 // pred_check
          %p226 = pneg %p82
        $region38: #{tpu_custom_call.1} parent=31 // pred_check_branch
          %228 = sbr.rel (%p226) target = $region40
        $region39: #{tpu_custom_call.1} parent=31 // pred_region
          %229 = dma.done %s222, 100352
        $region40: #{tpu_custom_call.1} parent=31 // pred_fallthru
          _
        %s230 = sand.u32 %s21, 1
        %s231 = scalar_lea.sflag [#allocation7], %s230
        %s232 = sand.u32 %s95, 1
        %s233 = smul.addr %s232, 2
        %s234 = scalar_lea.vmem [#allocation8], %s233
        // Predicated region
        $region41: #{tpu_custom_call.1} parent=31 // pred_check
          %p235 = pneg %p108
        $region42: #{tpu_custom_call.1} parent=31 // pred_check_branch
          %237 = sbr.rel (%p235) target = $region44
        $region43: #{tpu_custom_call.1} parent=31 // pred_region
          %238 = dma.done %s231, 32
        $region44: #{tpu_custom_call.1} parent=31 // pred_fallthru
          _
        %p239 = pneg %p54
        %p240 = pneg %p51
        %s241 = sand.u32 %s21, 1
        %s242 = scalar_lea.sflag [#allocation7], %s241
        %s243 = sand.u32 %s69, 1
        %s244 = smul.addr %s243, 6272
        %s245 = scalar_lea.vmem [#allocation6], %s244
        %p246 = pneg %p82
        %p247 = pneg %p79
        %s248 = sand.u32 %s21, 1
        %s249 = scalar_lea.sflag [#allocation7], %s248
        %s250 = sand.u32 %s95, 1
        %s251 = smul.addr %s250, 2
        %s252 = scalar_lea.vmem [#allocation8], %s251
        %p253 = pneg %p108
        %p254 = pneg %p105
        %p255 = pneg %p134
        %p256 = pneg %p131
        %s257 = sand.u32 %s121, 1
        %s258 = scalar_lea.sflag [#allocation5], %s257
        %s259 = sand.u32 %s121, 1
        %s260 = smul.addr %s259, 2
        %s261 = scalar_lea.vmem [#allocation9], %s260
        %s262 = smul.u32 49, %s26
        %s263 = smul.u32 784, %s26
        %s264 = smul.u32 2, %s25
        %s265 = smul.u32 2, %s25
        %s266 = smul.u32 2, %s25
        %p268 = scmp.eq.s32.totalorder %s26, 0
        // Predicated region
        $region45: #{tpu_custom_call.1} parent=31 // pred_check
          %p269 = pneg %p268
        $region46: #{tpu_custom_call.1} parent=31 // pred_check_branch
          %271 = sbr.rel (%p269) target = $region48
        $region47: #{tpu_custom_call.1} parent=31 // pred_region
          %272 = vst [vmem:[#allocation2] sm:$0xf] 0.0
        $region48: #{tpu_custom_call.1} parent=31 // pred_fallthru
          _
        %v273 = vld [vmem:[#allocation2] sm:$0xf]
        %v274 = vld [vmem:[#allocation3] sm:$0xff]
        %v275 = vld [vmem:[#allocation3 + $0x8] sm:$0xff]
        %v276 = vld [vmem:[#allocation3 + $0x10] sm:$0xff]
        %v277 = vld [vmem:[#allocation3 + $0x18] sm:$0xff]
        %v278 = vld [vmem:[#allocation3 + $0x20] sm:$0xff]
        %v279 = vld [vmem:[#allocation3 + $0x28] sm:$0xff]
        %v280 = vld [vmem:[#allocation3 + $0x30] sm:$0x1]
        %v281 = vld [vmem:[%s225] sm:$0xff]
        %v282 = vld [vmem:[%s225 + $0x8] sm:$0xff]
        %v283 = vld [vmem:[%s225 + $0x10] sm:$0xff]
        %v284 = vld [vmem:[%s225 + $0x18] sm:$0xff]
        %v285 = vld [vmem:[%s225 + $0x20] sm:$0xff]
        %v286 = vld [vmem:[%s225 + $0x28] sm:$0xff]
        %v287 = vld [vmem:[%s225 + $0x30] sm:$0xff]
        %v288 = vld [vmem:[%s225 + $0x38] sm:$0xff]
        %v289 = vld [vmem:[%s225 + $0x40] sm:$0xff]
        %v290 = vld [vmem:[%s225 + $0x48] sm:$0xff]
        %v291 = vld [vmem:[%s225 + $0x50] sm:$0xff]
        %v292 = vld [vmem:[%s225 + $0x58] sm:$0xff]
        %v293 = vld [vmem:[%s225 + $0x60] sm:$0xff]
        %v294 = vld [vmem:[%s225 + $0x68] sm:$0xff]
        %v295 = vld [vmem:[%s225 + $0x70] sm:$0xff]
        %v296 = vld [vmem:[%s225 + $0x78] sm:$0xff]
        %v297 = vld [vmem:[%s225 + $0x80] sm:$0xff]
        %v298 = vld [vmem:[%s225 + $0x88] sm:$0xff]
        %v299 = vld [vmem:[%s225 + $0x90] sm:$0xff]
        %v300 = vld [vmem:[%s225 + $0x98] sm:$0xff]
        %v301 = vld [vmem:[%s225 + $0xa0] sm:$0xff]
        %v302 = vld [vmem:[%s225 + $0xa8] sm:$0xff]
        %v303 = vld [vmem:[%s225 + $0xb0] sm:$0xff]
        %v304 = vld [vmem:[%s225 + $0xb8] sm:$0xff]
        %v305 = vld [vmem:[%s225 + $0xc0] sm:$0xff]
        %v306 = vld [vmem:[%s225 + $0xc8] sm:$0xff]
        %v307 = vld [vmem:[%s225 + $0xd0] sm:$0xff]
        %v308 = vld [vmem:[%s225 + $0xd8] sm:$0xff]
        %v309 = vld [vmem:[%s225 + $0xe0] sm:$0xff]
        %v310 = vld [vmem:[%s225 + $0xe8] sm:$0xff]
        %v311 = vld [vmem:[%s225 + $0xf0] sm:$0xff]
        %v312 = vld [vmem:[%s225 + $0xf8] sm:$0xff]
        %v313 = vld [vmem:[%s225 + $0x100] sm:$0xff]
        %v314 = vld [vmem:[%s225 + $0x108] sm:$0xff]
        %v315 = vld [vmem:[%s225 + $0x110] sm:$0xff]
        %v316 = vld [vmem:[%s225 + $0x118] sm:$0xff]
        %v317 = vld [vmem:[%s225 + $0x120] sm:$0xff]
        %v318 = vld [vmem:[%s225 + $0x128] sm:$0xff]
        %v319 = vld [vmem:[%s225 + $0x130] sm:$0xff]
        %v320 = vld [vmem:[%s225 + $0x138] sm:$0xff]
        %v321 = vld [vmem:[%s225 + $0x140] sm:$0xff]
        %v322 = vld [vmem:[%s225 + $0x148] sm:$0xff]
        %v323 = vld [vmem:[%s225 + $0x150] sm:$0xff]
        %v324 = vld [vmem:[%s225 + $0x158] sm:$0xff]
        %v325 = vld [vmem:[%s225 + $0x160] sm:$0xff]
        %v326 = vld [vmem:[%s225 + $0x168] sm:$0xff]
        %v327 = vld [vmem:[%s225 + $0x170] sm:$0xff]
        %v328 = vld [vmem:[%s225 + $0x178] sm:$0xff]
        %v329 = vld [vmem:[%s225 + $0x180] sm:$0xff]
        %v330 = vld [vmem:[%s225 + $0x188] sm:$0xff]
        %v331 = vld [vmem:[%s225 + $0x190] sm:$0xff]
        %v332 = vld [vmem:[%s225 + $0x198] sm:$0xff]
        %v333 = vld [vmem:[%s225 + $0x1a0] sm:$0xff]
        %v334 = vld [vmem:[%s225 + $0x1a8] sm:$0xff]
        %v335 = vld [vmem:[%s225 + $0x1b0] sm:$0xff]
        %v336 = vld [vmem:[%s225 + $0x1b8] sm:$0xff]
        %v337 = vld [vmem:[%s225 + $0x1c0] sm:$0xff]
        %v338 = vld [vmem:[%s225 + $0x1c8] sm:$0xff]
        %v339 = vld [vmem:[%s225 + $0x1d0] sm:$0xff]
        %v340 = vld [vmem:[%s225 + $0x1d8] sm:$0xff]
        %v341 = vld [vmem:[%s225 + $0x1e0] sm:$0xff]
        %v342 = vld [vmem:[%s225 + $0x1e8] sm:$0xff]
        %v343 = vld [vmem:[%s225 + $0x1f0] sm:$0xff]
        %v344 = vld [vmem:[%s225 + $0x1f8] sm:$0xff]
        %v345 = vld [vmem:[%s225 + $0x200] sm:$0xff]
        %v346 = vld [vmem:[%s225 + $0x208] sm:$0xff]
        %v347 = vld [vmem:[%s225 + $0x210] sm:$0xff]
        %v348 = vld [vmem:[%s225 + $0x218] sm:$0xff]
        %v349 = vld [vmem:[%s225 + $0x220] sm:$0xff]
        %v350 = vld [vmem:[%s225 + $0x228] sm:$0xff]
        %v351 = vld [vmem:[%s225 + $0x230] sm:$0xff]
        %v352 = vld [vmem:[%s225 + $0x238] sm:$0xff]
        %v353 = vld [vmem:[%s225 + $0x240] sm:$0xff]
        %v354 = vld [vmem:[%s225 + $0x248] sm:$0xff]
        %v355 = vld [vmem:[%s225 + $0x250] sm:$0xff]
        %v356 = vld [vmem:[%s225 + $0x258] sm:$0xff]
        %v357 = vld [vmem:[%s225 + $0x260] sm:$0xff]
        %v358 = vld [vmem:[%s225 + $0x268] sm:$0xff]
        %v359 = vld [vmem:[%s225 + $0x270] sm:$0xff]
        %v360 = vld [vmem:[%s225 + $0x278] sm:$0xff]
        %v361 = vld [vmem:[%s225 + $0x280] sm:$0xff]
        %v362 = vld [vmem:[%s225 + $0x288] sm:$0xff]
        %v363 = vld [vmem:[%s225 + $0x290] sm:$0xff]
        %v364 = vld [vmem:[%s225 + $0x298] sm:$0xff]
        %v365 = vld [vmem:[%s225 + $0x2a0] sm:$0xff]
        %v366 = vld [vmem:[%s225 + $0x2a8] sm:$0xff]
        %v367 = vld [vmem:[%s225 + $0x2b0] sm:$0xff]
        %v368 = vld [vmem:[%s225 + $0x2b8] sm:$0xff]
        %v369 = vld [vmem:[%s225 + $0x2c0] sm:$0xff]
        %v370 = vld [vmem:[%s225 + $0x2c8] sm:$0xff]
        %v371 = vld [vmem:[%s225 + $0x2d0] sm:$0xff]
        %v372 = vld [vmem:[%s225 + $0x2d8] sm:$0xff]
        %v373 = vld [vmem:[%s225 + $0x2e0] sm:$0xff]
        %v374 = vld [vmem:[%s225 + $0x2e8] sm:$0xff]
        %v375 = vld [vmem:[%s225 + $0x2f0] sm:$0xff]
        %v376 = vld [vmem:[%s225 + $0x2f8] sm:$0xff]
        %v377 = vld [vmem:[%s225 + $0x300] sm:$0xff]
        %v378 = vld [vmem:[%s225 + $0x308] sm:$0xff]
        %v379 = vld [vmem:[%s225 + $0x310] sm:$0xff]
        %v380 = vld [vmem:[%s225 + $0x318] sm:$0xff]
        %v381 = vld [vmem:[%s225 + $0x320] sm:$0xff]
        %v382 = vld [vmem:[%s225 + $0x328] sm:$0xff]
        %v383 = vld [vmem:[%s225 + $0x330] sm:$0xff]
        %v384 = vld [vmem:[%s225 + $0x338] sm:$0xff]
        %v385 = vld [vmem:[%s225 + $0x340] sm:$0xff]
        %v386 = vld [vmem:[%s225 + $0x348] sm:$0xff]
        %v387 = vld [vmem:[%s225 + $0x350] sm:$0xff]
        %v388 = vld [vmem:[%s225 + $0x358] sm:$0xff]
        %v389 = vld [vmem:[%s225 + $0x360] sm:$0xff]
        %v390 = vld [vmem:[%s225 + $0x368] sm:$0xff]
        %v391 = vld [vmem:[%s225 + $0x370] sm:$0xff]
        %v392 = vld [vmem:[%s225 + $0x378] sm:$0xff]
        %v393 = vld [vmem:[%s225 + $0x380] sm:$0xff]
        %v394 = vld [vmem:[%s225 + $0x388] sm:$0xff]
        %v395 = vld [vmem:[%s225 + $0x390] sm:$0xff]
        %v396 = vld [vmem:[%s225 + $0x398] sm:$0xff]
        %v397 = vld [vmem:[%s225 + $0x3a0] sm:$0xff]
        %v398 = vld [vmem:[%s225 + $0x3a8] sm:$0xff]
        %v399 = vld [vmem:[%s225 + $0x3b0] sm:$0xff]
        %v400 = vld [vmem:[%s225 + $0x3b8] sm:$0xff]
        %v401 = vld [vmem:[%s225 + $0x3c0] sm:$0xff]
        %v402 = vld [vmem:[%s225 + $0x3c8] sm:$0xff]
        %v403 = vld [vmem:[%s225 + $0x3d0] sm:$0xff]
        %v404 = vld [vmem:[%s225 + $0x3d8] sm:$0xff]
        %v405 = vld [vmem:[%s225 + $0x3e0] sm:$0xff]
        %v406 = vld [vmem:[%s225 + $0x3e8] sm:$0xff]
        %v407 = vld [vmem:[%s225 + $0x3f0] sm:$0xff]
        %v408 = vld [vmem:[%s225 + $0x3f8] sm:$0xff]
        %v409 = vld [vmem:[%s225 + $0x400] sm:$0xff]
        %v410 = vld [vmem:[%s225 + $0x408] sm:$0xff]
        %v411 = vld [vmem:[%s225 + $0x410] sm:$0xff]
        %v412 = vld [vmem:[%s225 + $0x418] sm:$0xff]
        %v413 = vld [vmem:[%s225 + $0x420] sm:$0xff]
        %v414 = vld [vmem:[%s225 + $0x428] sm:$0xff]
        %v415 = vld [vmem:[%s225 + $0x430] sm:$0xff]
        %v416 = vld [vmem:[%s225 + $0x438] sm:$0xff]
        %v417 = vld [vmem:[%s225 + $0x440] sm:$0xff]
        %v418 = vld [vmem:[%s225 + $0x448] sm:$0xff]
        %v419 = vld [vmem:[%s225 + $0x450] sm:$0xff]
        %v420 = vld [vmem:[%s225 + $0x458] sm:$0xff]
        %v421 = vld [vmem:[%s225 + $0x460] sm:$0xff]
        %v422 = vld [vmem:[%s225 + $0x468] sm:$0xff]
        %v423 = vld [vmem:[%s225 + $0x470] sm:$0xff]
        %v424 = vld [vmem:[%s225 + $0x478] sm:$0xff]
        %v425 = vld [vmem:[%s225 + $0x480] sm:$0xff]
        %v426 = vld [vmem:[%s225 + $0x488] sm:$0xff]
        %v427 = vld [vmem:[%s225 + $0x490] sm:$0xff]
        %v428 = vld [vmem:[%s225 + $0x498] sm:$0xff]
        %v429 = vld [vmem:[%s225 + $0x4a0] sm:$0xff]
        %v430 = vld [vmem:[%s225 + $0x4a8] sm:$0xff]
        %v431 = vld [vmem:[%s225 + $0x4b0] sm:$0xff]
        %v432 = vld [vmem:[%s225 + $0x4b8] sm:$0xff]
        %v433 = vld [vmem:[%s225 + $0x4c0] sm:$0xff]
        %v434 = vld [vmem:[%s225 + $0x4c8] sm:$0xff]
        %v435 = vld [vmem:[%s225 + $0x4d0] sm:$0xff]
        %v436 = vld [vmem:[%s225 + $0x4d8] sm:$0xff]
        %v437 = vld [vmem:[%s225 + $0x4e0] sm:$0xff]
        %v438 = vld [vmem:[%s225 + $0x4e8] sm:$0xff]
        %v439 = vld [vmem:[%s225 + $0x4f0] sm:$0xff]
        %v440 = vld [vmem:[%s225 + $0x4f8] sm:$0xff]
        %v441 = vld [vmem:[%s225 + $0x500] sm:$0xff]
        %v442 = vld [vmem:[%s225 + $0x508] sm:$0xff]
        %v443 = vld [vmem:[%s225 + $0x510] sm:$0xff]
        %v444 = vld [vmem:[%s225 + $0x518] sm:$0xff]
        %v445 = vld [vmem:[%s225 + $0x520] sm:$0xff]
        %v446 = vld [vmem:[%s225 + $0x528] sm:$0xff]
        %v447 = vld [vmem:[%s225 + $0x530] sm:$0xff]
        %v448 = vld [vmem:[%s225 + $0x538] sm:$0xff]
        %v449 = vld [vmem:[%s225 + $0x540] sm:$0xff]
        %v450 = vld [vmem:[%s225 + $0x548] sm:$0xff]
        %v451 = vld [vmem:[%s225 + $0x550] sm:$0xff]
        %v452 = vld [vmem:[%s225 + $0x558] sm:$0xff]
        %v453 = vld [vmem:[%s225 + $0x560] sm:$0xff]
        %v454 = vld [vmem:[%s225 + $0x568] sm:$0xff]
        %v455 = vld [vmem:[%s225 + $0x570] sm:$0xff]
        %v456 = vld [vmem:[%s225 + $0x578] sm:$0xff]
        %v457 = vld [vmem:[%s225 + $0x580] sm:$0xff]
        %v458 = vld [vmem:[%s225 + $0x588] sm:$0xff]
        %v459 = vld [vmem:[%s225 + $0x590] sm:$0xff]
        %v460 = vld [vmem:[%s225 + $0x598] sm:$0xff]
        %v461 = vld [vmem:[%s225 + $0x5a0] sm:$0xff]
        %v462 = vld [vmem:[%s225 + $0x5a8] sm:$0xff]
        %v463 = vld [vmem:[%s225 + $0x5b0] sm:$0xff]
        %v464 = vld [vmem:[%s225 + $0x5b8] sm:$0xff]
        %v465 = vld [vmem:[%s225 + $0x5c0] sm:$0xff]
        %v466 = vld [vmem:[%s225 + $0x5c8] sm:$0xff]
        %v467 = vld [vmem:[%s225 + $0x5d0] sm:$0xff]
        %v468 = vld [vmem:[%s225 + $0x5d8] sm:$0xff]
        %v469 = vld [vmem:[%s225 + $0x5e0] sm:$0xff]
        %v470 = vld [vmem:[%s225 + $0x5e8] sm:$0xff]
        %v471 = vld [vmem:[%s225 + $0x5f0] sm:$0xff]
        %v472 = vld [vmem:[%s225 + $0x5f8] sm:$0xff]
        %v473 = vld [vmem:[%s225 + $0x600] sm:$0xff]
        %v474 = vld [vmem:[%s225 + $0x608] sm:$0xff]
        %v475 = vld [vmem:[%s225 + $0x610] sm:$0xff]
        %v476 = vld [vmem:[%s225 + $0x618] sm:$0xff]
        %v477 = vld [vmem:[%s225 + $0x620] sm:$0xff]
        %v478 = vld [vmem:[%s225 + $0x628] sm:$0xff]
        %v479 = vld [vmem:[%s225 + $0x630] sm:$0xff]
        %v480 = vld [vmem:[%s225 + $0x638] sm:$0xff]
        %v481 = vld [vmem:[%s225 + $0x640] sm:$0xff]
        %v482 = vld [vmem:[%s225 + $0x648] sm:$0xff]
        %v483 = vld [vmem:[%s225 + $0x650] sm:$0xff]
        %v484 = vld [vmem:[%s225 + $0x658] sm:$0xff]
        %v485 = vld [vmem:[%s225 + $0x660] sm:$0xff]
        %v486 = vld [vmem:[%s225 + $0x668] sm:$0xff]
        %v487 = vld [vmem:[%s225 + $0x670] sm:$0xff]
        %v488 = vld [vmem:[%s225 + $0x678] sm:$0xff]
        %v489 = vld [vmem:[%s225 + $0x680] sm:$0xff]
        %v490 = vld [vmem:[%s225 + $0x688] sm:$0xff]
        %v491 = vld [vmem:[%s225 + $0x690] sm:$0xff]
        %v492 = vld [vmem:[%s225 + $0x698] sm:$0xff]
        %v493 = vld [vmem:[%s225 + $0x6a0] sm:$0xff]
        %v494 = vld [vmem:[%s225 + $0x6a8] sm:$0xff]
        %v495 = vld [vmem:[%s225 + $0x6b0] sm:$0xff]
        %v496 = vld [vmem:[%s225 + $0x6b8] sm:$0xff]
        %v497 = vld [vmem:[%s225 + $0x6c0] sm:$0xff]
        %v498 = vld [vmem:[%s225 + $0x6c8] sm:$0xff]
        %v499 = vld [vmem:[%s225 + $0x6d0] sm:$0xff]
        %v500 = vld [vmem:[%s225 + $0x6d8] sm:$0xff]
        %v501 = vld [vmem:[%s225 + $0x6e0] sm:$0xff]
        %v502 = vld [vmem:[%s225 + $0x6e8] sm:$0xff]
        %v503 = vld [vmem:[%s225 + $0x6f0] sm:$0xff]
        %v504 = vld [vmem:[%s225 + $0x6f8] sm:$0xff]
        %v505 = vld [vmem:[%s225 + $0x700] sm:$0xff]
        %v506 = vld [vmem:[%s225 + $0x708] sm:$0xff]
        %v507 = vld [vmem:[%s225 + $0x710] sm:$0xff]
        %v508 = vld [vmem:[%s225 + $0x718] sm:$0xff]
        %v509 = vld [vmem:[%s225 + $0x720] sm:$0xff]
        %v510 = vld [vmem:[%s225 + $0x728] sm:$0xff]
        %v511 = vld [vmem:[%s225 + $0x730] sm:$0xff]
        %v512 = vld [vmem:[%s225 + $0x738] sm:$0xff]
        %v513 = vld [vmem:[%s225 + $0x740] sm:$0xff]
        %v514 = vld [vmem:[%s225 + $0x748] sm:$0xff]
        %v515 = vld [vmem:[%s225 + $0x750] sm:$0xff]
        %v516 = vld [vmem:[%s225 + $0x758] sm:$0xff]
        %v517 = vld [vmem:[%s225 + $0x760] sm:$0xff]
        %v518 = vld [vmem:[%s225 + $0x768] sm:$0xff]
        %v519 = vld [vmem:[%s225 + $0x770] sm:$0xff]
        %v520 = vld [vmem:[%s225 + $0x778] sm:$0xff]
        %v521 = vld [vmem:[%s225 + $0x780] sm:$0xff]
        %v522 = vld [vmem:[%s225 + $0x788] sm:$0xff]
        %v523 = vld [vmem:[%s225 + $0x790] sm:$0xff]
        %v524 = vld [vmem:[%s225 + $0x798] sm:$0xff]
        %v525 = vld [vmem:[%s225 + $0x7a0] sm:$0xff]
        %v526 = vld [vmem:[%s225 + $0x7a8] sm:$0xff]
        %v527 = vld [vmem:[%s225 + $0x7b0] sm:$0xff]
        %v528 = vld [vmem:[%s225 + $0x7b8] sm:$0xff]
        %v529 = vld [vmem:[%s225 + $0x7c0] sm:$0xff]
        %v530 = vld [vmem:[%s225 + $0x7c8] sm:$0xff]
        %v531 = vld [vmem:[%s225 + $0x7d0] sm:$0xff]
        %v532 = vld [vmem:[%s225 + $0x7d8] sm:$0xff]
        %v533 = vld [vmem:[%s225 + $0x7e0] sm:$0xff]
        %v534 = vld [vmem:[%s225 + $0x7e8] sm:$0xff]
        %v535 = vld [vmem:[%s225 + $0x7f0] sm:$0xff]
        %v536 = vld [vmem:[%s225 + $0x7f8] sm:$0xff]
        %v537 = vld [vmem:[%s225 + $0x800] sm:$0xff]
        %v538 = vld [vmem:[%s225 + $0x808] sm:$0xff]
        %v539 = vld [vmem:[%s225 + $0x810] sm:$0xff]
        %v540 = vld [vmem:[%s225 + $0x818] sm:$0xff]
        %v541 = vld [vmem:[%s225 + $0x820] sm:$0xff]
        %v542 = vld [vmem:[%s225 + $0x828] sm:$0xff]
        %v543 = vld [vmem:[%s225 + $0x830] sm:$0xff]
        %v544 = vld [vmem:[%s225 + $0x838] sm:$0xff]
        %v545 = vld [vmem:[%s225 + $0x840] sm:$0xff]
        %v546 = vld [vmem:[%s225 + $0x848] sm:$0xff]
        %v547 = vld [vmem:[%s225 + $0x850] sm:$0xff]
        %v548 = vld [vmem:[%s225 + $0x858] sm:$0xff]
        %v549 = vld [vmem:[%s225 + $0x860] sm:$0xff]
        %v550 = vld [vmem:[%s225 + $0x868] sm:$0xff]
        %v551 = vld [vmem:[%s225 + $0x870] sm:$0xff]
        %v552 = vld [vmem:[%s225 + $0x878] sm:$0xff]
        %v553 = vld [vmem:[%s225 + $0x880] sm:$0xff]
        %v554 = vld [vmem:[%s225 + $0x888] sm:$0xff]
        %v555 = vld [vmem:[%s225 + $0x890] sm:$0xff]
        %v556 = vld [vmem:[%s225 + $0x898] sm:$0xff]
        %v557 = vld [vmem:[%s225 + $0x8a0] sm:$0xff]
        %v558 = vld [vmem:[%s225 + $0x8a8] sm:$0xff]
        %v559 = vld [vmem:[%s225 + $0x8b0] sm:$0xff]
        %v560 = vld [vmem:[%s225 + $0x8b8] sm:$0xff]
        %v561 = vld [vmem:[%s225 + $0x8c0] sm:$0xff]
        %v562 = vld [vmem:[%s225 + $0x8c8] sm:$0xff]
        %v563 = vld [vmem:[%s225 + $0x8d0] sm:$0xff]
        %v564 = vld [vmem:[%s225 + $0x8d8] sm:$0xff]
        %v565 = vld [vmem:[%s225 + $0x8e0] sm:$0xff]
        %v566 = vld [vmem:[%s225 + $0x8e8] sm:$0xff]
        %v567 = vld [vmem:[%s225 + $0x8f0] sm:$0xff]
        %v568 = vld [vmem:[%s225 + $0x8f8] sm:$0xff]
        %v569 = vld [vmem:[%s225 + $0x900] sm:$0xff]
        %v570 = vld [vmem:[%s225 + $0x908] sm:$0xff]
        %v571 = vld [vmem:[%s225 + $0x910] sm:$0xff]
        %v572 = vld [vmem:[%s225 + $0x918] sm:$0xff]
        %v573 = vld [vmem:[%s225 + $0x920] sm:$0xff]
        %v574 = vld [vmem:[%s225 + $0x928] sm:$0xff]
        %v575 = vld [vmem:[%s225 + $0x930] sm:$0xff]
        %v576 = vld [vmem:[%s225 + $0x938] sm:$0xff]
        %v577 = vld [vmem:[%s225 + $0x940] sm:$0xff]
        %v578 = vld [vmem:[%s225 + $0x948] sm:$0xff]
        %v579 = vld [vmem:[%s225 + $0x950] sm:$0xff]
        %v580 = vld [vmem:[%s225 + $0x958] sm:$0xff]
        %v581 = vld [vmem:[%s225 + $0x960] sm:$0xff]
        %v582 = vld [vmem:[%s225 + $0x968] sm:$0xff]
        %v583 = vld [vmem:[%s225 + $0x970] sm:$0xff]
        %v584 = vld [vmem:[%s225 + $0x978] sm:$0xff]
        %v585 = vld [vmem:[%s225 + $0x980] sm:$0xff]
        %v586 = vld [vmem:[%s225 + $0x988] sm:$0xff]
        %v587 = vld [vmem:[%s225 + $0x990] sm:$0xff]
        %v588 = vld [vmem:[%s225 + $0x998] sm:$0xff]
        %v589 = vld [vmem:[%s225 + $0x9a0] sm:$0xff]
        %v590 = vld [vmem:[%s225 + $0x9a8] sm:$0xff]
        %v591 = vld [vmem:[%s225 + $0x9b0] sm:$0xff]
        %v592 = vld [vmem:[%s225 + $0x9b8] sm:$0xff]
        %v593 = vld [vmem:[%s225 + $0x9c0] sm:$0xff]
        %v594 = vld [vmem:[%s225 + $0x9c8] sm:$0xff]
        %v595 = vld [vmem:[%s225 + $0x9d0] sm:$0xff]
        %v596 = vld [vmem:[%s225 + $0x9d8] sm:$0xff]
        %v597 = vld [vmem:[%s225 + $0x9e0] sm:$0xff]
        %v598 = vld [vmem:[%s225 + $0x9e8] sm:$0xff]
        %v599 = vld [vmem:[%s225 + $0x9f0] sm:$0xff]
        %v600 = vld [vmem:[%s225 + $0x9f8] sm:$0xff]
        %v601 = vld [vmem:[%s225 + $0xa00] sm:$0xff]
        %v602 = vld [vmem:[%s225 + $0xa08] sm:$0xff]
        %v603 = vld [vmem:[%s225 + $0xa10] sm:$0xff]
        %v604 = vld [vmem:[%s225 + $0xa18] sm:$0xff]
        %v605 = vld [vmem:[%s225 + $0xa20] sm:$0xff]
        %v606 = vld [vmem:[%s225 + $0xa28] sm:$0xff]
        %v607 = vld [vmem:[%s225 + $0xa30] sm:$0xff]
        %v608 = vld [vmem:[%s225 + $0xa38] sm:$0xff]
        %v609 = vld [vmem:[%s225 + $0xa40] sm:$0xff]
        %v610 = vld [vmem:[%s225 + $0xa48] sm:$0xff]
        %v611 = vld [vmem:[%s225 + $0xa50] sm:$0xff]
        %v612 = vld [vmem:[%s225 + $0xa58] sm:$0xff]
        %v613 = vld [vmem:[%s225 + $0xa60] sm:$0xff]
        %v614 = vld [vmem:[%s225 + $0xa68] sm:$0xff]
        %v615 = vld [vmem:[%s225 + $0xa70] sm:$0xff]
        %v616 = vld [vmem:[%s225 + $0xa78] sm:$0xff]
        %v617 = vld [vmem:[%s225 + $0xa80] sm:$0xff]
        %v618 = vld [vmem:[%s225 + $0xa88] sm:$0xff]
        %v619 = vld [vmem:[%s225 + $0xa90] sm:$0xff]
        %v620 = vld [vmem:[%s225 + $0xa98] sm:$0xff]
        %v621 = vld [vmem:[%s225 + $0xaa0] sm:$0xff]
        %v622 = vld [vmem:[%s225 + $0xaa8] sm:$0xff]
        %v623 = vld [vmem:[%s225 + $0xab0] sm:$0xff]
        %v624 = vld [vmem:[%s225 + $0xab8] sm:$0xff]
        %v625 = vld [vmem:[%s225 + $0xac0] sm:$0xff]
        %v626 = vld [vmem:[%s225 + $0xac8] sm:$0xff]
        %v627 = vld [vmem:[%s225 + $0xad0] sm:$0xff]
        %v628 = vld [vmem:[%s225 + $0xad8] sm:$0xff]
        %v629 = vld [vmem:[%s225 + $0xae0] sm:$0xff]
        %v630 = vld [vmem:[%s225 + $0xae8] sm:$0xff]
        %v631 = vld [vmem:[%s225 + $0xaf0] sm:$0xff]
        %v632 = vld [vmem:[%s225 + $0xaf8] sm:$0xff]
        %v633 = vld [vmem:[%s225 + $0xb00] sm:$0xff]
        %v634 = vld [vmem:[%s225 + $0xb08] sm:$0xff]
        %v635 = vld [vmem:[%s225 + $0xb10] sm:$0xff]
        %v636 = vld [vmem:[%s225 + $0xb18] sm:$0xff]
        %v637 = vld [vmem:[%s225 + $0xb20] sm:$0xff]
        %v638 = vld [vmem:[%s225 + $0xb28] sm:$0xff]
        %v639 = vld [vmem:[%s225 + $0xb30] sm:$0xff]
        %v640 = vld [vmem:[%s225 + $0xb38] sm:$0xff]
        %v641 = vld [vmem:[%s225 + $0xb40] sm:$0xff]
        %v642 = vld [vmem:[%s225 + $0xb48] sm:$0xff]
        %v643 = vld [vmem:[%s225 + $0xb50] sm:$0xff]
        %v644 = vld [vmem:[%s225 + $0xb58] sm:$0xff]
        %v645 = vld [vmem:[%s225 + $0xb60] sm:$0xff]
        %v646 = vld [vmem:[%s225 + $0xb68] sm:$0xff]
        %v647 = vld [vmem:[%s225 + $0xb70] sm:$0xff]
        %v648 = vld [vmem:[%s225 + $0xb78] sm:$0xff]
        %v649 = vld [vmem:[%s225 + $0xb80] sm:$0xff]
        %v650 = vld [vmem:[%s225 + $0xb88] sm:$0xff]
        %v651 = vld [vmem:[%s225 + $0xb90] sm:$0xff]
        %v652 = vld [vmem:[%s225 + $0xb98] sm:$0xff]
        %v653 = vld [vmem:[%s225 + $0xba0] sm:$0xff]
        %v654 = vld [vmem:[%s225 + $0xba8] sm:$0xff]
        %v655 = vld [vmem:[%s225 + $0xbb0] sm:$0xff]
        %v656 = vld [vmem:[%s225 + $0xbb8] sm:$0xff]
        %v657 = vld [vmem:[%s225 + $0xbc0] sm:$0xff]
        %v658 = vld [vmem:[%s225 + $0xbc8] sm:$0xff]
        %v659 = vld [vmem:[%s225 + $0xbd0] sm:$0xff]
        %v660 = vld [vmem:[%s225 + $0xbd8] sm:$0xff]
        %v661 = vld [vmem:[%s225 + $0xbe0] sm:$0xff]
        %v662 = vld [vmem:[%s225 + $0xbe8] sm:$0xff]
        %v663 = vld [vmem:[%s225 + $0xbf0] sm:$0xff]
        %v664 = vld [vmem:[%s225 + $0xbf8] sm:$0xff]
        %v665 = vld [vmem:[%s225 + $0xc00] sm:$0xff]
        %v666 = vld [vmem:[%s225 + $0xc08] sm:$0xff]
        %v667 = vld [vmem:[%s225 + $0xc10] sm:$0xff]
        %v668 = vld [vmem:[%s225 + $0xc18] sm:$0xff]
        %v669 = vld [vmem:[%s225 + $0xc20] sm:$0xff]
        %v670 = vld [vmem:[%s225 + $0xc28] sm:$0xff]
        %v671 = vld [vmem:[%s225 + $0xc30] sm:$0xff]
        %v672 = vld [vmem:[%s225 + $0xc38] sm:$0xff]
        %v673 = vld [vmem:[%s225 + $0xc40] sm:$0xff]
        %v674 = vld [vmem:[%s225 + $0xc48] sm:$0xff]
        %v675 = vld [vmem:[%s225 + $0xc50] sm:$0xff]
        %v676 = vld [vmem:[%s225 + $0xc58] sm:$0xff]
        %v677 = vld [vmem:[%s225 + $0xc60] sm:$0xff]
        %v678 = vld [vmem:[%s225 + $0xc68] sm:$0xff]
        %v679 = vld [vmem:[%s225 + $0xc70] sm:$0xff]
        %v680 = vld [vmem:[%s225 + $0xc78] sm:$0xff]
        %v681 = vld [vmem:[%s225 + $0xc80] sm:$0xff]
        %v682 = vld [vmem:[%s225 + $0xc88] sm:$0xff]
        %v683 = vld [vmem:[%s225 + $0xc90] sm:$0xff]
        %v684 = vld [vmem:[%s225 + $0xc98] sm:$0xff]
        %v685 = vld [vmem:[%s225 + $0xca0] sm:$0xff]
        %v686 = vld [vmem:[%s225 + $0xca8] sm:$0xff]
        %v687 = vld [vmem:[%s225 + $0xcb0] sm:$0xff]
        %v688 = vld [vmem:[%s225 + $0xcb8] sm:$0xff]
        %v689 = vld [vmem:[%s225 + $0xcc0] sm:$0xff]
        %v690 = vld [vmem:[%s225 + $0xcc8] sm:$0xff]
        %v691 = vld [vmem:[%s225 + $0xcd0] sm:$0xff]
        %v692 = vld [vmem:[%s225 + $0xcd8] sm:$0xff]
        %v693 = vld [vmem:[%s225 + $0xce0] sm:$0xff]
        %v694 = vld [vmem:[%s225 + $0xce8] sm:$0xff]
        %v695 = vld [vmem:[%s225 + $0xcf0] sm:$0xff]
        %v696 = vld [vmem:[%s225 + $0xcf8] sm:$0xff]
        %v697 = vld [vmem:[%s225 + $0xd00] sm:$0xff]
        %v698 = vld [vmem:[%s225 + $0xd08] sm:$0xff]
        %v699 = vld [vmem:[%s225 + $0xd10] sm:$0xff]
        %v700 = vld [vmem:[%s225 + $0xd18] sm:$0xff]
        %v701 = vld [vmem:[%s225 + $0xd20] sm:$0xff]
        %v702 = vld [vmem:[%s225 + $0xd28] sm:$0xff]
        %v703 = vld [vmem:[%s225 + $0xd30] sm:$0xff]
        %v704 = vld [vmem:[%s225 + $0xd38] sm:$0xff]
        %v705 = vld [vmem:[%s225 + $0xd40] sm:$0xff]
        %v706 = vld [vmem:[%s225 + $0xd48] sm:$0xff]
        %v707 = vld [vmem:[%s225 + $0xd50] sm:$0xff]
        %v708 = vld [vmem:[%s225 + $0xd58] sm:$0xff]
        %v709 = vld [vmem:[%s225 + $0xd60] sm:$0xff]
        %v710 = vld [vmem:[%s225 + $0xd68] sm:$0xff]
        %v711 = vld [vmem:[%s225 + $0xd70] sm:$0xff]
        %v712 = vld [vmem:[%s225 + $0xd78] sm:$0xff]
        %v713 = vld [vmem:[%s225 + $0xd80] sm:$0xff]
        %v714 = vld [vmem:[%s225 + $0xd88] sm:$0xff]
        %v715 = vld [vmem:[%s225 + $0xd90] sm:$0xff]
        %v716 = vld [vmem:[%s225 + $0xd98] sm:$0xff]
        %v717 = vld [vmem:[%s225 + $0xda0] sm:$0xff]
        %v718 = vld [vmem:[%s225 + $0xda8] sm:$0xff]
        %v719 = vld [vmem:[%s225 + $0xdb0] sm:$0xff]
        %v720 = vld [vmem:[%s225 + $0xdb8] sm:$0xff]
        %v721 = vld [vmem:[%s225 + $0xdc0] sm:$0xff]
        %v722 = vld [vmem:[%s225 + $0xdc8] sm:$0xff]
        %v723 = vld [vmem:[%s225 + $0xdd0] sm:$0xff]
        %v724 = vld [vmem:[%s225 + $0xdd8] sm:$0xff]
        %v725 = vld [vmem:[%s225 + $0xde0] sm:$0xff]
        %v726 = vld [vmem:[%s225 + $0xde8] sm:$0xff]
        %v727 = vld [vmem:[%s225 + $0xdf0] sm:$0xff]
        %v728 = vld [vmem:[%s225 + $0xdf8] sm:$0xff]
        %v729 = vld [vmem:[%s225 + $0xe00] sm:$0xff]
        %v730 = vld [vmem:[%s225 + $0xe08] sm:$0xff]
        %v731 = vld [vmem:[%s225 + $0xe10] sm:$0xff]
        %v732 = vld [vmem:[%s225 + $0xe18] sm:$0xff]
        %v733 = vld [vmem:[%s225 + $0xe20] sm:$0xff]
        %v734 = vld [vmem:[%s225 + $0xe28] sm:$0xff]
        %v735 = vld [vmem:[%s225 + $0xe30] sm:$0xff]
        %v736 = vld [vmem:[%s225 + $0xe38] sm:$0xff]
        %v737 = vld [vmem:[%s225 + $0xe40] sm:$0xff]
        %v738 = vld [vmem:[%s225 + $0xe48] sm:$0xff]
        %v739 = vld [vmem:[%s225 + $0xe50] sm:$0xff]
        %v740 = vld [vmem:[%s225 + $0xe58] sm:$0xff]
        %v741 = vld [vmem:[%s225 + $0xe60] sm:$0xff]
        %v742 = vld [vmem:[%s225 + $0xe68] sm:$0xff]
        %v743 = vld [vmem:[%s225 + $0xe70] sm:$0xff]
        %v744 = vld [vmem:[%s225 + $0xe78] sm:$0xff]
        %v745 = vld [vmem:[%s225 + $0xe80] sm:$0xff]
        %v746 = vld [vmem:[%s225 + $0xe88] sm:$0xff]
        %v747 = vld [vmem:[%s225 + $0xe90] sm:$0xff]
        %v748 = vld [vmem:[%s225 + $0xe98] sm:$0xff]
        %v749 = vld [vmem:[%s225 + $0xea0] sm:$0xff]
        %v750 = vld [vmem:[%s225 + $0xea8] sm:$0xff]
        %v751 = vld [vmem:[%s225 + $0xeb0] sm:$0xff]
        %v752 = vld [vmem:[%s225 + $0xeb8] sm:$0xff]
        %v753 = vld [vmem:[%s225 + $0xec0] sm:$0xff]
        %v754 = vld [vmem:[%s225 + $0xec8] sm:$0xff]
        %v755 = vld [vmem:[%s225 + $0xed0] sm:$0xff]
        %v756 = vld [vmem:[%s225 + $0xed8] sm:$0xff]
        %v757 = vld [vmem:[%s225 + $0xee0] sm:$0xff]
        %v758 = vld [vmem:[%s225 + $0xee8] sm:$0xff]
        %v759 = vld [vmem:[%s225 + $0xef0] sm:$0xff]
        %v760 = vld [vmem:[%s225 + $0xef8] sm:$0xff]
        %v761 = vld [vmem:[%s225 + $0xf00] sm:$0xff]
        %v762 = vld [vmem:[%s225 + $0xf08] sm:$0xff]
        %v763 = vld [vmem:[%s225 + $0xf10] sm:$0xff]
        %v764 = vld [vmem:[%s225 + $0xf18] sm:$0xff]
        %v765 = vld [vmem:[%s225 + $0xf20] sm:$0xff]
        %v766 = vld [vmem:[%s225 + $0xf28] sm:$0xff]
        %v767 = vld [vmem:[%s225 + $0xf30] sm:$0xff]
        %v768 = vld [vmem:[%s225 + $0xf38] sm:$0xff]
        %v769 = vld [vmem:[%s225 + $0xf40] sm:$0xff]
        %v770 = vld [vmem:[%s225 + $0xf48] sm:$0xff]
        %v771 = vld [vmem:[%s225 + $0xf50] sm:$0xff]
        %v772 = vld [vmem:[%s225 + $0xf58] sm:$0xff]
        %v773 = vld [vmem:[%s225 + $0xf60] sm:$0xff]
        %v774 = vld [vmem:[%s225 + $0xf68] sm:$0xff]
        %v775 = vld [vmem:[%s225 + $0xf70] sm:$0xff]
        %v776 = vld [vmem:[%s225 + $0xf78] sm:$0xff]
        %v777 = vld [vmem:[%s225 + $0xf80] sm:$0xff]
        %v778 = vld [vmem:[%s225 + $0xf88] sm:$0xff]
        %v779 = vld [vmem:[%s225 + $0xf90] sm:$0xff]
        %v780 = vld [vmem:[%s225 + $0xf98] sm:$0xff]
        %v781 = vld [vmem:[%s225 + $0xfa0] sm:$0xff]
        %v782 = vld [vmem:[%s225 + $0xfa8] sm:$0xff]
        %v783 = vld [vmem:[%s225 + $0xfb0] sm:$0xff]
        %v784 = vld [vmem:[%s225 + $0xfb8] sm:$0xff]
        %v785 = vld [vmem:[%s225 + $0xfc0] sm:$0xff]
        %v786 = vld [vmem:[%s225 + $0xfc8] sm:$0xff]
        %v787 = vld [vmem:[%s225 + $0xfd0] sm:$0xff]
        %v788 = vld [vmem:[%s225 + $0xfd8] sm:$0xff]
        %v789 = vld [vmem:[%s225 + $0xfe0] sm:$0xff]
        %v790 = vld [vmem:[%s225 + $0xfe8] sm:$0xff]
        %v791 = vld [vmem:[%s225 + $0xff0] sm:$0xff]
        %v792 = vld [vmem:[%s225 + $0xff8] sm:$0xff]
        %v793 = vld [vmem:[%s225 + $0x1000] sm:$0xff]
        %v794 = vld [vmem:[%s225 + $0x1008] sm:$0xff]
        %v795 = vld [vmem:[%s225 + $0x1010] sm:$0xff]
        %v796 = vld [vmem:[%s225 + $0x1018] sm:$0xff]
        %v797 = vld [vmem:[%s225 + $0x1020] sm:$0xff]
        %v798 = vld [vmem:[%s225 + $0x1028] sm:$0xff]
        %v799 = vld [vmem:[%s225 + $0x1030] sm:$0xff]
        %v800 = vld [vmem:[%s225 + $0x1038] sm:$0xff]
        %v801 = vld [vmem:[%s225 + $0x1040] sm:$0xff]
        %v802 = vld [vmem:[%s225 + $0x1048] sm:$0xff]
        %v803 = vld [vmem:[%s225 + $0x1050] sm:$0xff]
        %v804 = vld [vmem:[%s225 + $0x1058] sm:$0xff]
        %v805 = vld [vmem:[%s225 + $0x1060] sm:$0xff]
        %v806 = vld [vmem:[%s225 + $0x1068] sm:$0xff]
        %v807 = vld [vmem:[%s225 + $0x1070] sm:$0xff]
        %v808 = vld [vmem:[%s225 + $0x1078] sm:$0xff]
        %v809 = vld [vmem:[%s225 + $0x1080] sm:$0xff]
        %v810 = vld [vmem:[%s225 + $0x1088] sm:$0xff]
        %v811 = vld [vmem:[%s225 + $0x1090] sm:$0xff]
        %v812 = vld [vmem:[%s225 + $0x1098] sm:$0xff]
        %v813 = vld [vmem:[%s225 + $0x10a0] sm:$0xff]
        %v814 = vld [vmem:[%s225 + $0x10a8] sm:$0xff]
        %v815 = vld [vmem:[%s225 + $0x10b0] sm:$0xff]
        %v816 = vld [vmem:[%s225 + $0x10b8] sm:$0xff]
        %v817 = vld [vmem:[%s225 + $0x10c0] sm:$0xff]
        %v818 = vld [vmem:[%s225 + $0x10c8] sm:$0xff]
        %v819 = vld [vmem:[%s225 + $0x10d0] sm:$0xff]
        %v820 = vld [vmem:[%s225 + $0x10d8] sm:$0xff]
        %v821 = vld [vmem:[%s225 + $0x10e0] sm:$0xff]
        %v822 = vld [vmem:[%s225 + $0x10e8] sm:$0xff]
        %v823 = vld [vmem:[%s225 + $0x10f0] sm:$0xff]
        %v824 = vld [vmem:[%s225 + $0x10f8] sm:$0xff]
        %v825 = vld [vmem:[%s225 + $0x1100] sm:$0xff]
        %v826 = vld [vmem:[%s225 + $0x1108] sm:$0xff]
        %v827 = vld [vmem:[%s225 + $0x1110] sm:$0xff]
        %v828 = vld [vmem:[%s225 + $0x1118] sm:$0xff]
        %v829 = vld [vmem:[%s225 + $0x1120] sm:$0xff]
        %v830 = vld [vmem:[%s225 + $0x1128] sm:$0xff]
        %v831 = vld [vmem:[%s225 + $0x1130] sm:$0xff]
        %v832 = vld [vmem:[%s225 + $0x1138] sm:$0xff]
        %v833 = vld [vmem:[%s225 + $0x1140] sm:$0xff]
        %v834 = vld [vmem:[%s225 + $0x1148] sm:$0xff]
        %v835 = vld [vmem:[%s225 + $0x1150] sm:$0xff]
        %v836 = vld [vmem:[%s225 + $0x1158] sm:$0xff]
        %v837 = vld [vmem:[%s225 + $0x1160] sm:$0xff]
        %v838 = vld [vmem:[%s225 + $0x1168] sm:$0xff]
        %v839 = vld [vmem:[%s225 + $0x1170] sm:$0xff]
        %v840 = vld [vmem:[%s225 + $0x1178] sm:$0xff]
        %v841 = vld [vmem:[%s225 + $0x1180] sm:$0xff]
        %v842 = vld [vmem:[%s225 + $0x1188] sm:$0xff]
        %v843 = vld [vmem:[%s225 + $0x1190] sm:$0xff]
        %v844 = vld [vmem:[%s225 + $0x1198] sm:$0xff]
        %v845 = vld [vmem:[%s225 + $0x11a0] sm:$0xff]
        %v846 = vld [vmem:[%s225 + $0x11a8] sm:$0xff]
        %v847 = vld [vmem:[%s225 + $0x11b0] sm:$0xff]
        %v848 = vld [vmem:[%s225 + $0x11b8] sm:$0xff]
        %v849 = vld [vmem:[%s225 + $0x11c0] sm:$0xff]
        %v850 = vld [vmem:[%s225 + $0x11c8] sm:$0xff]
        %v851 = vld [vmem:[%s225 + $0x11d0] sm:$0xff]
        %v852 = vld [vmem:[%s225 + $0x11d8] sm:$0xff]
        %v853 = vld [vmem:[%s225 + $0x11e0] sm:$0xff]
        %v854 = vld [vmem:[%s225 + $0x11e8] sm:$0xff]
        %v855 = vld [vmem:[%s225 + $0x11f0] sm:$0xff]
        %v856 = vld [vmem:[%s225 + $0x11f8] sm:$0xff]
        %v857 = vld [vmem:[%s225 + $0x1200] sm:$0xff]
        %v858 = vld [vmem:[%s225 + $0x1208] sm:$0xff]
        %v859 = vld [vmem:[%s225 + $0x1210] sm:$0xff]
        %v860 = vld [vmem:[%s225 + $0x1218] sm:$0xff]
        %v861 = vld [vmem:[%s225 + $0x1220] sm:$0xff]
        %v862 = vld [vmem:[%s225 + $0x1228] sm:$0xff]
        %v863 = vld [vmem:[%s225 + $0x1230] sm:$0xff]
        %v864 = vld [vmem:[%s225 + $0x1238] sm:$0xff]
        %v865 = vld [vmem:[%s225 + $0x1240] sm:$0xff]
        %v866 = vld [vmem:[%s225 + $0x1248] sm:$0xff]
        %v867 = vld [vmem:[%s225 + $0x1250] sm:$0xff]
        %v868 = vld [vmem:[%s225 + $0x1258] sm:$0xff]
        %v869 = vld [vmem:[%s225 + $0x1260] sm:$0xff]
        %v870 = vld [vmem:[%s225 + $0x1268] sm:$0xff]
        %v871 = vld [vmem:[%s225 + $0x1270] sm:$0xff]
        %v872 = vld [vmem:[%s225 + $0x1278] sm:$0xff]
        %v873 = vld [vmem:[%s225 + $0x1280] sm:$0xff]
        %v874 = vld [vmem:[%s225 + $0x1288] sm:$0xff]
        %v875 = vld [vmem:[%s225 + $0x1290] sm:$0xff]
        %v876 = vld [vmem:[%s225 + $0x1298] sm:$0xff]
        %v877 = vld [vmem:[%s225 + $0x12a0] sm:$0xff]
        %v878 = vld [vmem:[%s225 + $0x12a8] sm:$0xff]
        %v879 = vld [vmem:[%s225 + $0x12b0] sm:$0xff]
        %v880 = vld [vmem:[%s225 + $0x12b8] sm:$0xff]
        %v881 = vld [vmem:[%s225 + $0x12c0] sm:$0xff]
        %v882 = vld [vmem:[%s225 + $0x12c8] sm:$0xff]
        %v883 = vld [vmem:[%s225 + $0x12d0] sm:$0xff]
        %v884 = vld [vmem:[%s225 + $0x12d8] sm:$0xff]
        %v885 = vld [vmem:[%s225 + $0x12e0] sm:$0xff]
        %v886 = vld [vmem:[%s225 + $0x12e8] sm:$0xff]
        %v887 = vld [vmem:[%s225 + $0x12f0] sm:$0xff]
        %v888 = vld [vmem:[%s225 + $0x12f8] sm:$0xff]
        %v889 = vld [vmem:[%s225 + $0x1300] sm:$0xff]
        %v890 = vld [vmem:[%s225 + $0x1308] sm:$0xff]
        %v891 = vld [vmem:[%s225 + $0x1310] sm:$0xff]
        %v892 = vld [vmem:[%s225 + $0x1318] sm:$0xff]
        %v893 = vld [vmem:[%s225 + $0x1320] sm:$0xff]
        %v894 = vld [vmem:[%s225 + $0x1328] sm:$0xff]
        %v895 = vld [vmem:[%s225 + $0x1330] sm:$0xff]
        %v896 = vld [vmem:[%s225 + $0x1338] sm:$0xff]
        %v897 = vld [vmem:[%s225 + $0x1340] sm:$0xff]
        %v898 = vld [vmem:[%s225 + $0x1348] sm:$0xff]
        %v899 = vld [vmem:[%s225 + $0x1350] sm:$0xff]
        %v900 = vld [vmem:[%s225 + $0x1358] sm:$0xff]
        %v901 = vld [vmem:[%s225 + $0x1360] sm:$0xff]
        %v902 = vld [vmem:[%s225 + $0x1368] sm:$0xff]
        %v903 = vld [vmem:[%s225 + $0x1370] sm:$0xff]
        %v904 = vld [vmem:[%s225 + $0x1378] sm:$0xff]
        %v905 = vld [vmem:[%s225 + $0x1380] sm:$0xff]
        %v906 = vld [vmem:[%s225 + $0x1388] sm:$0xff]
        %v907 = vld [vmem:[%s225 + $0x1390] sm:$0xff]
        %v908 = vld [vmem:[%s225 + $0x1398] sm:$0xff]
        %v909 = vld [vmem:[%s225 + $0x13a0] sm:$0xff]
        %v910 = vld [vmem:[%s225 + $0x13a8] sm:$0xff]
        %v911 = vld [vmem:[%s225 + $0x13b0] sm:$0xff]
        %v912 = vld [vmem:[%s225 + $0x13b8] sm:$0xff]
        %v913 = vld [vmem:[%s225 + $0x13c0] sm:$0xff]
        %v914 = vld [vmem:[%s225 + $0x13c8] sm:$0xff]
        %v915 = vld [vmem:[%s225 + $0x13d0] sm:$0xff]
        %v916 = vld [vmem:[%s225 + $0x13d8] sm:$0xff]
        %v917 = vld [vmem:[%s225 + $0x13e0] sm:$0xff]
        %v918 = vld [vmem:[%s225 + $0x13e8] sm:$0xff]
        %v919 = vld [vmem:[%s225 + $0x13f0] sm:$0xff]
        %v920 = vld [vmem:[%s225 + $0x13f8] sm:$0xff]
        %v921 = vld [vmem:[%s225 + $0x1400] sm:$0xff]
        %v922 = vld [vmem:[%s225 + $0x1408] sm:$0xff]
        %v923 = vld [vmem:[%s225 + $0x1410] sm:$0xff]
        %v924 = vld [vmem:[%s225 + $0x1418] sm:$0xff]
        %v925 = vld [vmem:[%s225 + $0x1420] sm:$0xff]
        %v926 = vld [vmem:[%s225 + $0x1428] sm:$0xff]
        %v927 = vld [vmem:[%s225 + $0x1430] sm:$0xff]
        %v928 = vld [vmem:[%s225 + $0x1438] sm:$0xff]
        %v929 = vld [vmem:[%s225 + $0x1440] sm:$0xff]
        %v930 = vld [vmem:[%s225 + $0x1448] sm:$0xff]
        %v931 = vld [vmem:[%s225 + $0x1450] sm:$0xff]
        %v932 = vld [vmem:[%s225 + $0x1458] sm:$0xff]
        %v933 = vld [vmem:[%s225 + $0x1460] sm:$0xff]
        %v934 = vld [vmem:[%s225 + $0x1468] sm:$0xff]
        %v935 = vld [vmem:[%s225 + $0x1470] sm:$0xff]
        %v936 = vld [vmem:[%s225 + $0x1478] sm:$0xff]
        %v937 = vld [vmem:[%s225 + $0x1480] sm:$0xff]
        %v938 = vld [vmem:[%s225 + $0x1488] sm:$0xff]
        %v939 = vld [vmem:[%s225 + $0x1490] sm:$0xff]
        %v940 = vld [vmem:[%s225 + $0x1498] sm:$0xff]
        %v941 = vld [vmem:[%s225 + $0x14a0] sm:$0xff]
        %v942 = vld [vmem:[%s225 + $0x14a8] sm:$0xff]
        %v943 = vld [vmem:[%s225 + $0x14b0] sm:$0xff]
        %v944 = vld [vmem:[%s225 + $0x14b8] sm:$0xff]
        %v945 = vld [vmem:[%s225 + $0x14c0] sm:$0xff]
        %v946 = vld [vmem:[%s225 + $0x14c8] sm:$0xff]
        %v947 = vld [vmem:[%s225 + $0x14d0] sm:$0xff]
        %v948 = vld [vmem:[%s225 + $0x14d8] sm:$0xff]
        %v949 = vld [vmem:[%s225 + $0x14e0] sm:$0xff]
        %v950 = vld [vmem:[%s225 + $0x14e8] sm:$0xff]
        %v951 = vld [vmem:[%s225 + $0x14f0] sm:$0xff]
        %v952 = vld [vmem:[%s225 + $0x14f8] sm:$0xff]
        %v953 = vld [vmem:[%s225 + $0x1500] sm:$0xff]
        %v954 = vld [vmem:[%s225 + $0x1508] sm:$0xff]
        %v955 = vld [vmem:[%s225 + $0x1510] sm:$0xff]
        %v956 = vld [vmem:[%s225 + $0x1518] sm:$0xff]
        %v957 = vld [vmem:[%s225 + $0x1520] sm:$0xff]
        %v958 = vld [vmem:[%s225 + $0x1528] sm:$0xff]
        %v959 = vld [vmem:[%s225 + $0x1530] sm:$0xff]
        %v960 = vld [vmem:[%s225 + $0x1538] sm:$0xff]
        %v961 = vld [vmem:[%s225 + $0x1540] sm:$0xff]
        %v962 = vld [vmem:[%s225 + $0x1548] sm:$0xff]
        %v963 = vld [vmem:[%s225 + $0x1550] sm:$0xff]
        %v964 = vld [vmem:[%s225 + $0x1558] sm:$0xff]
        %v965 = vld [vmem:[%s225 + $0x1560] sm:$0xff]
        %v966 = vld [vmem:[%s225 + $0x1568] sm:$0xff]
        %v967 = vld [vmem:[%s225 + $0x1570] sm:$0xff]
        %v968 = vld [vmem:[%s225 + $0x1578] sm:$0xff]
        %v969 = vld [vmem:[%s225 + $0x1580] sm:$0xff]
        %v970 = vld [vmem:[%s225 + $0x1588] sm:$0xff]
        %v971 = vld [vmem:[%s225 + $0x1590] sm:$0xff]
        %v972 = vld [vmem:[%s225 + $0x1598] sm:$0xff]
        %v973 = vld [vmem:[%s225 + $0x15a0] sm:$0xff]
        %v974 = vld [vmem:[%s225 + $0x15a8] sm:$0xff]
        %v975 = vld [vmem:[%s225 + $0x15b0] sm:$0xff]
        %v976 = vld [vmem:[%s225 + $0x15b8] sm:$0xff]
        %v977 = vld [vmem:[%s225 + $0x15c0] sm:$0xff]
        %v978 = vld [vmem:[%s225 + $0x15c8] sm:$0xff]
        %v979 = vld [vmem:[%s225 + $0x15d0] sm:$0xff]
        %v980 = vld [vmem:[%s225 + $0x15d8] sm:$0xff]
        %v981 = vld [vmem:[%s225 + $0x15e0] sm:$0xff]
        %v982 = vld [vmem:[%s225 + $0x15e8] sm:$0xff]
        %v983 = vld [vmem:[%s225 + $0x15f0] sm:$0xff]
        %v984 = vld [vmem:[%s225 + $0x15f8] sm:$0xff]
        %v985 = vld [vmem:[%s225 + $0x1600] sm:$0xff]
        %v986 = vld [vmem:[%s225 + $0x1608] sm:$0xff]
        %v987 = vld [vmem:[%s225 + $0x1610] sm:$0xff]
        %v988 = vld [vmem:[%s225 + $0x1618] sm:$0xff]
        %v989 = vld [vmem:[%s225 + $0x1620] sm:$0xff]
        %v990 = vld [vmem:[%s225 + $0x1628] sm:$0xff]
        %v991 = vld [vmem:[%s225 + $0x1630] sm:$0xff]
        %v992 = vld [vmem:[%s225 + $0x1638] sm:$0xff]
        %v993 = vld [vmem:[%s225 + $0x1640] sm:$0xff]
        %v994 = vld [vmem:[%s225 + $0x1648] sm:$0xff]
        %v995 = vld [vmem:[%s225 + $0x1650] sm:$0xff]
        %v996 = vld [vmem:[%s225 + $0x1658] sm:$0xff]
        %v997 = vld [vmem:[%s225 + $0x1660] sm:$0xff]
        %v998 = vld [vmem:[%s225 + $0x1668] sm:$0xff]
        %v999 = vld [vmem:[%s225 + $0x1670] sm:$0xff]
        %v1000 = vld [vmem:[%s225 + $0x1678] sm:$0xff]
        %v1001 = vld [vmem:[%s225 + $0x1680] sm:$0xff]
        %v1002 = vld [vmem:[%s225 + $0x1688] sm:$0xff]
        %v1003 = vld [vmem:[%s225 + $0x1690] sm:$0xff]
        %v1004 = vld [vmem:[%s225 + $0x1698] sm:$0xff]
        %v1005 = vld [vmem:[%s225 + $0x16a0] sm:$0xff]
        %v1006 = vld [vmem:[%s225 + $0x16a8] sm:$0xff]
        %v1007 = vld [vmem:[%s225 + $0x16b0] sm:$0xff]
        %v1008 = vld [vmem:[%s225 + $0x16b8] sm:$0xff]
        %v1009 = vld [vmem:[%s225 + $0x16c0] sm:$0xff]
        %v1010 = vld [vmem:[%s225 + $0x16c8] sm:$0xff]
        %v1011 = vld [vmem:[%s225 + $0x16d0] sm:$0xff]
        %v1012 = vld [vmem:[%s225 + $0x16d8] sm:$0xff]
        %v1013 = vld [vmem:[%s225 + $0x16e0] sm:$0xff]
        %v1014 = vld [vmem:[%s225 + $0x16e8] sm:$0xff]
        %v1015 = vld [vmem:[%s225 + $0x16f0] sm:$0xff]
        %v1016 = vld [vmem:[%s225 + $0x16f8] sm:$0xff]
        %v1017 = vld [vmem:[%s225 + $0x1700] sm:$0xff]
        %v1018 = vld [vmem:[%s225 + $0x1708] sm:$0xff]
        %v1019 = vld [vmem:[%s225 + $0x1710] sm:$0xff]
        %v1020 = vld [vmem:[%s225 + $0x1718] sm:$0xff]
        %v1021 = vld [vmem:[%s225 + $0x1720] sm:$0xff]
        %v1022 = vld [vmem:[%s225 + $0x1728] sm:$0xff]
        %v1023 = vld [vmem:[%s225 + $0x1730] sm:$0xff]
        %v1024 = vld [vmem:[%s225 + $0x1738] sm:$0xff]
        %v1025 = vld [vmem:[%s225 + $0x1740] sm:$0xff]
        %v1026 = vld [vmem:[%s225 + $0x1748] sm:$0xff]
        %v1027 = vld [vmem:[%s225 + $0x1750] sm:$0xff]
        %v1028 = vld [vmem:[%s225 + $0x1758] sm:$0xff]
        %v1029 = vld [vmem:[%s225 + $0x1760] sm:$0xff]
        %v1030 = vld [vmem:[%s225 + $0x1768] sm:$0xff]
        %v1031 = vld [vmem:[%s225 + $0x1770] sm:$0xff]
        %v1032 = vld [vmem:[%s225 + $0x1778] sm:$0xff]
        %v1033 = vld [vmem:[%s225 + $0x1780] sm:$0xff]
        %v1034 = vld [vmem:[%s225 + $0x1788] sm:$0xff]
        %v1035 = vld [vmem:[%s225 + $0x1790] sm:$0xff]
        %v1036 = vld [vmem:[%s225 + $0x1798] sm:$0xff]
        %v1037 = vld [vmem:[%s225 + $0x17a0] sm:$0xff]
        %v1038 = vld [vmem:[%s225 + $0x17a8] sm:$0xff]
        %v1039 = vld [vmem:[%s225 + $0x17b0] sm:$0xff]
        %v1040 = vld [vmem:[%s225 + $0x17b8] sm:$0xff]
        %v1041 = vld [vmem:[%s225 + $0x17c0] sm:$0xff]
        %v1042 = vld [vmem:[%s225 + $0x17c8] sm:$0xff]
        %v1043 = vld [vmem:[%s225 + $0x17d0] sm:$0xff]
        %v1044 = vld [vmem:[%s225 + $0x17d8] sm:$0xff]
        %v1045 = vld [vmem:[%s225 + $0x17e0] sm:$0xff]
        %v1046 = vld [vmem:[%s225 + $0x17e8] sm:$0xff]
        %v1047 = vld [vmem:[%s225 + $0x17f0] sm:$0xff]
        %v1048 = vld [vmem:[%s225 + $0x17f8] sm:$0xff]
        %v1049 = vld [vmem:[%s225 + $0x1800] sm:$0xff]
        %v1050 = vld [vmem:[%s225 + $0x1808] sm:$0xff]
        %v1051 = vld [vmem:[%s225 + $0x1810] sm:$0xff]
        %v1052 = vld [vmem:[%s225 + $0x1818] sm:$0xff]
        %v1053 = vld [vmem:[%s225 + $0x1820] sm:$0xff]
        %v1054 = vld [vmem:[%s225 + $0x1828] sm:$0xff]
        %v1055 = vld [vmem:[%s225 + $0x1830] sm:$0xff]
        %v1056 = vld [vmem:[%s225 + $0x1838] sm:$0xff]
        %v1057 = vld [vmem:[%s225 + $0x1840] sm:$0xff]
        %v1058 = vld [vmem:[%s225 + $0x1848] sm:$0xff]
        %v1059 = vld [vmem:[%s225 + $0x1850] sm:$0xff]
        %v1060 = vld [vmem:[%s225 + $0x1858] sm:$0xff]
        %v1061 = vld [vmem:[%s225 + $0x1860] sm:$0xff]
        %v1062 = vld [vmem:[%s225 + $0x1868] sm:$0xff]
        %v1063 = vld [vmem:[%s225 + $0x1870] sm:$0xff]
        %v1064 = vld [vmem:[%s225 + $0x1878] sm:$0xff]
        %v1072 = vcombine.high %v274, %v274
        %v1074 = vunpack.c.l.s4 1966171168
        %v1075 = vunpack.c.0.s8 %v1074
        %v1076 = vlaneseq
        %v1077 = vshrl.u32 %v1076, 7
        %v1078 = vsub.s32 %v1075, %v1077
        %v1079 = vrot.slane %v274, %v1078
        %v1081 = vunpack.c.l.s4 1966171168
        %v1082 = vunpack.c.0.s8 %v1081
        %v1083 = vlaneseq
        %v1084 = vshrl.u32 %v1083, 7
        %v1085 = vsub.s32 %v1082, %v1084
        %v1086 = vrot.slane %v1072, %v1085
        %v1087 = vcombine.high %v1079, %v1079
        %v1088 = vcombine.high %v1086, %v1086
        %v1090 = vunpack.c.l.s4 1966171168
        %v1091 = vunpack.c.0.s8 %v1090
        %v1092 = vlaneseq
        %v1093 = vshrl.u32 %v1092, 7
        %v1094 = vsub.s32 %v1091, %v1093
        %v1095 = vrot.slane %v1079, %v1094
        %v1097 = vunpack.c.l.s4 1966171168
        %v1098 = vunpack.c.0.s8 %v1097
        %v1099 = vlaneseq
        %v1100 = vshrl.u32 %v1099, 7
        %v1101 = vsub.s32 %v1098, %v1100
        %v1102 = vrot.slane %v1086, %v1101
        %v1104 = vunpack.c.l.s4 1966171168
        %v1105 = vunpack.c.0.s8 %v1104
        %v1106 = vlaneseq
        %v1107 = vshrl.u32 %v1106, 7
        %v1108 = vsub.s32 %v1105, %v1107
        %v1109 = vrot.slane %v1087, %v1108
        %v1111 = vunpack.c.l.s4 1966171168
        %v1112 = vunpack.c.0.s8 %v1111
        %v1113 = vlaneseq
        %v1114 = vshrl.u32 %v1113, 7
        %v1115 = vsub.s32 %v1112, %v1114
        %v1116 = vrot.slane %v1088, %v1115
        %v1117 = vcombine.high %v1095, %v1095
        %v1118 = vcombine.high %v1102, %v1102
        %v1119 = vcombine.high %v1109, %v1109
        %v1120 = vcombine.high %v1116, %v1116
        %v1121 = vcombine.high %v275, %v275
        %v1123 = vunpack.c.l.s4 1966171168
        %v1124 = vunpack.c.0.s8 %v1123
        %v1125 = vlaneseq
        %v1126 = vshrl.u32 %v1125, 7
        %v1127 = vsub.s32 %v1124, %v1126
        %v1128 = vrot.slane %v275, %v1127
        %v1130 = vunpack.c.l.s4 1966171168
        %v1131 = vunpack.c.0.s8 %v1130
        %v1132 = vlaneseq
        %v1133 = vshrl.u32 %v1132, 7
        %v1134 = vsub.s32 %v1131, %v1133
        %v1135 = vrot.slane %v1121, %v1134
        %v1136 = vcombine.high %v1128, %v1128
        %v1137 = vcombine.high %v1135, %v1135
        %v1139 = vunpack.c.l.s4 1966171168
        %v1140 = vunpack.c.0.s8 %v1139
        %v1141 = vlaneseq
        %v1142 = vshrl.u32 %v1141, 7
        %v1143 = vsub.s32 %v1140, %v1142
        %v1144 = vrot.slane %v1128, %v1143
        %v1146 = vunpack.c.l.s4 1966171168
        %v1147 = vunpack.c.0.s8 %v1146
        %v1148 = vlaneseq
        %v1149 = vshrl.u32 %v1148, 7
        %v1150 = vsub.s32 %v1147, %v1149
        %v1151 = vrot.slane %v1135, %v1150
        %v1153 = vunpack.c.l.s4 1966171168
        %v1154 = vunpack.c.0.s8 %v1153
        %v1155 = vlaneseq
        %v1156 = vshrl.u32 %v1155, 7
        %v1157 = vsub.s32 %v1154, %v1156
        %v1158 = vrot.slane %v1136, %v1157
        %v1160 = vunpack.c.l.s4 1966171168
        %v1161 = vunpack.c.0.s8 %v1160
        %v1162 = vlaneseq
        %v1163 = vshrl.u32 %v1162, 7
        %v1164 = vsub.s32 %v1161, %v1163
        %v1165 = vrot.slane %v1137, %v1164
        %v1166 = vcombine.high %v1144, %v1144
        %v1167 = vcombine.high %v1151, %v1151
        %v1168 = vcombine.high %v1158, %v1158
        %v1169 = vcombine.high %v1165, %v1165
        %v1170 = vcombine.high %v276, %v276
        %v1172 = vunpack.c.l.s4 1966171168
        %v1173 = vunpack.c.0.s8 %v1172
        %v1174 = vlaneseq
        %v1175 = vshrl.u32 %v1174, 7
        %v1176 = vsub.s32 %v1173, %v1175
        %v1177 = vrot.slane %v276, %v1176
        %v1179 = vunpack.c.l.s4 1966171168
        %v1180 = vunpack.c.0.s8 %v1179
        %v1181 = vlaneseq
        %v1182 = vshrl.u32 %v1181, 7
        %v1183 = vsub.s32 %v1180, %v1182
        %v1184 = vrot.slane %v1170, %v1183
        %v1185 = vcombine.high %v1177, %v1177
        %v1186 = vcombine.high %v1184, %v1184
        %v1188 = vunpack.c.l.s4 1966171168
        %v1189 = vunpack.c.0.s8 %v1188
        %v1190 = vlaneseq
        %v1191 = vshrl.u32 %v1190, 7
        %v1192 = vsub.s32 %v1189, %v1191
        %v1193 = vrot.slane %v1177, %v1192
        %v1195 = vunpack.c.l.s4 1966171168
        %v1196 = vunpack.c.0.s8 %v1195
        %v1197 = vlaneseq
        %v1198 = vshrl.u32 %v1197, 7
        %v1199 = vsub.s32 %v1196, %v1198
        %v1200 = vrot.slane %v1184, %v1199
        %v1202 = vunpack.c.l.s4 1966171168
        %v1203 = vunpack.c.0.s8 %v1202
        %v1204 = vlaneseq
        %v1205 = vshrl.u32 %v1204, 7
        %v1206 = vsub.s32 %v1203, %v1205
        %v1207 = vrot.slane %v1185, %v1206
        %v1209 = vunpack.c.l.s4 1966171168
        %v1210 = vunpack.c.0.s8 %v1209
        %v1211 = vlaneseq
        %v1212 = vshrl.u32 %v1211, 7
        %v1213 = vsub.s32 %v1210, %v1212
        %v1214 = vrot.slane %v1186, %v1213
        %v1215 = vcombine.high %v1193, %v1193
        %v1216 = vcombine.high %v1200, %v1200
        %v1217 = vcombine.high %v1207, %v1207
        %v1218 = vcombine.high %v1214, %v1214
        %v1219 = vcombine.high %v277, %v277
        %v1221 = vunpack.c.l.s4 1966171168
        %v1222 = vunpack.c.0.s8 %v1221
        %v1223 = vlaneseq
        %v1224 = vshrl.u32 %v1223, 7
        %v1225 = vsub.s32 %v1222, %v1224
        %v1226 = vrot.slane %v277, %v1225
        %v1228 = vunpack.c.l.s4 1966171168
        %v1229 = vunpack.c.0.s8 %v1228
        %v1230 = vlaneseq
        %v1231 = vshrl.u32 %v1230, 7
        %v1232 = vsub.s32 %v1229, %v1231
        %v1233 = vrot.slane %v1219, %v1232
        %v1234 = vcombine.high %v1226, %v1226
        %v1235 = vcombine.high %v1233, %v1233
        %v1237 = vunpack.c.l.s4 1966171168
        %v1238 = vunpack.c.0.s8 %v1237
        %v1239 = vlaneseq
        %v1240 = vshrl.u32 %v1239, 7
        %v1241 = vsub.s32 %v1238, %v1240
        %v1242 = vrot.slane %v1226, %v1241
        %v1244 = vunpack.c.l.s4 1966171168
        %v1245 = vunpack.c.0.s8 %v1244
        %v1246 = vlaneseq
        %v1247 = vshrl.u32 %v1246, 7
        %v1248 = vsub.s32 %v1245, %v1247
        %v1249 = vrot.slane %v1233, %v1248
        %v1251 = vunpack.c.l.s4 1966171168
        %v1252 = vunpack.c.0.s8 %v1251
        %v1253 = vlaneseq
        %v1254 = vshrl.u32 %v1253, 7
        %v1255 = vsub.s32 %v1252, %v1254
        %v1256 = vrot.slane %v1234, %v1255
        %v1258 = vunpack.c.l.s4 1966171168
        %v1259 = vunpack.c.0.s8 %v1258
        %v1260 = vlaneseq
        %v1261 = vshrl.u32 %v1260, 7
        %v1262 = vsub.s32 %v1259, %v1261
        %v1263 = vrot.slane %v1235, %v1262
        %v1264 = vcombine.high %v1242, %v1242
        %v1265 = vcombine.high %v1249, %v1249
        %v1266 = vcombine.high %v1256, %v1256
        %v1267 = vcombine.high %v1263, %v1263
        %v1268 = vcombine.high %v278, %v278
        %v1270 = vunpack.c.l.s4 1966171168
        %v1271 = vunpack.c.0.s8 %v1270
        %v1272 = vlaneseq
        %v1273 = vshrl.u32 %v1272, 7
        %v1274 = vsub.s32 %v1271, %v1273
        %v1275 = vrot.slane %v278, %v1274
        %v1277 = vunpack.c.l.s4 1966171168
        %v1278 = vunpack.c.0.s8 %v1277
        %v1279 = vlaneseq
        %v1280 = vshrl.u32 %v1279, 7
        %v1281 = vsub.s32 %v1278, %v1280
        %v1282 = vrot.slane %v1268, %v1281
        %v1283 = vcombine.high %v1275, %v1275
        %v1284 = vcombine.high %v1282, %v1282
        %v1286 = vunpack.c.l.s4 1966171168
        %v1287 = vunpack.c.0.s8 %v1286
        %v1288 = vlaneseq
        %v1289 = vshrl.u32 %v1288, 7
        %v1290 = vsub.s32 %v1287, %v1289
        %v1291 = vrot.slane %v1275, %v1290
        %v1293 = vunpack.c.l.s4 1966171168
        %v1294 = vunpack.c.0.s8 %v1293
        %v1295 = vlaneseq
        %v1296 = vshrl.u32 %v1295, 7
        %v1297 = vsub.s32 %v1294, %v1296
        %v1298 = vrot.slane %v1282, %v1297
        %v1300 = vunpack.c.l.s4 1966171168
        %v1301 = vunpack.c.0.s8 %v1300
        %v1302 = vlaneseq
        %v1303 = vshrl.u32 %v1302, 7
        %v1304 = vsub.s32 %v1301, %v1303
        %v1305 = vrot.slane %v1283, %v1304
        %v1307 = vunpack.c.l.s4 1966171168
        %v1308 = vunpack.c.0.s8 %v1307
        %v1309 = vlaneseq
        %v1310 = vshrl.u32 %v1309, 7
        %v1311 = vsub.s32 %v1308, %v1310
        %v1312 = vrot.slane %v1284, %v1311
        %v1313 = vcombine.high %v1291, %v1291
        %v1314 = vcombine.high %v1298, %v1298
        %v1315 = vcombine.high %v1305, %v1305
        %v1316 = vcombine.high %v1312, %v1312
        %v1317 = vcombine.high %v279, %v279
        %v1319 = vunpack.c.l.s4 1966171168
        %v1320 = vunpack.c.0.s8 %v1319
        %v1321 = vlaneseq
        %v1322 = vshrl.u32 %v1321, 7
        %v1323 = vsub.s32 %v1320, %v1322
        %v1324 = vrot.slane %v279, %v1323
        %v1326 = vunpack.c.l.s4 1966171168
        %v1327 = vunpack.c.0.s8 %v1326
        %v1328 = vlaneseq
        %v1329 = vshrl.u32 %v1328, 7
        %v1330 = vsub.s32 %v1327, %v1329
        %v1331 = vrot.slane %v1317, %v1330
        %v1332 = vcombine.high %v1324, %v1324
        %v1333 = vcombine.high %v1331, %v1331
        %v1335 = vunpack.c.l.s4 1966171168
        %v1336 = vunpack.c.0.s8 %v1335
        %v1337 = vlaneseq
        %v1338 = vshrl.u32 %v1337, 7
        %v1339 = vsub.s32 %v1336, %v1338
        %v1340 = vrot.slane %v1324, %v1339
        %v1342 = vunpack.c.l.s4 1966171168
        %v1343 = vunpack.c.0.s8 %v1342
        %v1344 = vlaneseq
        %v1345 = vshrl.u32 %v1344, 7
        %v1346 = vsub.s32 %v1343, %v1345
        %v1347 = vrot.slane %v1331, %v1346
        %v1349 = vunpack.c.l.s4 1966171168
        %v1350 = vunpack.c.0.s8 %v1349
        %v1351 = vlaneseq
        %v1352 = vshrl.u32 %v1351, 7
        %v1353 = vsub.s32 %v1350, %v1352
        %v1354 = vrot.slane %v1332, %v1353
        %v1356 = vunpack.c.l.s4 1966171168
        %v1357 = vunpack.c.0.s8 %v1356
        %v1358 = vlaneseq
        %v1359 = vshrl.u32 %v1358, 7
        %v1360 = vsub.s32 %v1357, %v1359
        %v1361 = vrot.slane %v1333, %v1360
        %v1362 = vcombine.high %v1340, %v1340
        %v1363 = vcombine.high %v1347, %v1347
        %v1364 = vcombine.high %v1354, %v1354
        %v1365 = vcombine.high %v1361, %v1361
        %v1367 = vunpack.c.l.s4 1966171168
        %v1368 = vunpack.c.0.s8 %v1367
        %v1369 = vlaneseq
        %v1370 = vshrl.u32 %v1369, 7
        %v1371 = vsub.s32 %v1368, %v1370
        %v1372 = vrot.slane %v280, %v1371
        %v1374 = vunpack.c.l.s4 1966171168
        %v1375 = vunpack.c.0.s8 %v1374
        %v1376 = vlaneseq
        %v1377 = vshrl.u32 %v1376, 7
        %v1378 = vsub.s32 %v1375, %v1377
        %v1379 = vrot.slane %v1372, %v1378
        %v2213 = vunpack.c.l.b16 %v281
        %v2214 = vunpack.c.h.b16 %v281
        %v2215 = vunpack.c.l.b16 %v282
        %v2216 = vunpack.c.h.b16 %v282
        %v2217 = vunpack.c.l.b16 %v283
        %v2218 = vunpack.c.h.b16 %v283
        %v2219 = vunpack.c.l.b16 %v284
        %v2220 = vunpack.c.h.b16 %v284
        %v2221 = vunpack.c.l.b16 %v285
        %v2222 = vunpack.c.h.b16 %v285
        %v2223 = vunpack.c.l.b16 %v286
        %v2224 = vunpack.c.h.b16 %v286
        %v2225 = vunpack.c.l.b16 %v287
        %v2226 = vunpack.c.h.b16 %v287
        %v2227 = vunpack.c.l.b16 %v288
        %v2228 = vunpack.c.h.b16 %v288
        %v2229 = vunpack.c.l.b16 %v289
        %v2230 = vunpack.c.h.b16 %v289
        %v2231 = vunpack.c.l.b16 %v290
        %v2232 = vunpack.c.h.b16 %v290
        %v2233 = vunpack.c.l.b16 %v291
        %v2234 = vunpack.c.h.b16 %v291
        %v2235 = vunpack.c.l.b16 %v292
        %v2236 = vunpack.c.h.b16 %v292
        %v2237 = vunpack.c.l.b16 %v293
        %v2238 = vunpack.c.h.b16 %v293
        %v2239 = vunpack.c.l.b16 %v294
        %v2240 = vunpack.c.h.b16 %v294
        %v2241 = vunpack.c.l.b16 %v295
        %v2242 = vunpack.c.h.b16 %v295
        %v2243 = vunpack.c.l.b16 %v296
        %v2244 = vunpack.c.h.b16 %v296
        %v2245 = vunpack.c.l.b16 %v297
        %v2246 = vunpack.c.h.b16 %v297
        %v2247 = vunpack.c.l.b16 %v298
        %v2248 = vunpack.c.h.b16 %v298
        %v2249 = vunpack.c.l.b16 %v299
        %v2250 = vunpack.c.h.b16 %v299
        %v2251 = vunpack.c.l.b16 %v300
        %v2252 = vunpack.c.h.b16 %v300
        %v2253 = vunpack.c.l.b16 %v301
        %v2254 = vunpack.c.h.b16 %v301
        %v2255 = vunpack.c.l.b16 %v302
        %v2256 = vunpack.c.h.b16 %v302
        %v2257 = vunpack.c.l.b16 %v303
        %v2258 = vunpack.c.h.b16 %v303
        %v2259 = vunpack.c.l.b16 %v304
        %v2260 = vunpack.c.h.b16 %v304
        %v2261 = vunpack.c.l.b16 %v305
        %v2262 = vunpack.c.h.b16 %v305
        %v2263 = vunpack.c.l.b16 %v306
        %v2264 = vunpack.c.h.b16 %v306
        %v2265 = vunpack.c.l.b16 %v307
        %v2266 = vunpack.c.h.b16 %v307
        %v2267 = vunpack.c.l.b16 %v308
        %v2268 = vunpack.c.h.b16 %v308
        %v2269 = vunpack.c.l.b16 %v309
        %v2270 = vunpack.c.h.b16 %v309
        %v2271 = vunpack.c.l.b16 %v310
        %v2272 = vunpack.c.h.b16 %v310
        %v2273 = vunpack.c.l.b16 %v311
        %v2274 = vunpack.c.h.b16 %v311
        %v2275 = vunpack.c.l.b16 %v312
        %v2276 = vunpack.c.h.b16 %v312
        %v2277 = vunpack.c.l.b16 %v313
        %v2278 = vunpack.c.h.b16 %v313
        %v2279 = vunpack.c.l.b16 %v314
        %v2280 = vunpack.c.h.b16 %v314
        %v2281 = vunpack.c.l.b16 %v315
        %v2282 = vunpack.c.h.b16 %v315
        %v2283 = vunpack.c.l.b16 %v316
        %v2284 = vunpack.c.h.b16 %v316
        %v2285 = vunpack.c.l.b16 %v317
        %v2286 = vunpack.c.h.b16 %v317
        %v2287 = vunpack.c.l.b16 %v318
        %v2288 = vunpack.c.h.b16 %v318
        %v2289 = vunpack.c.l.b16 %v319
        %v2290 = vunpack.c.h.b16 %v319
        %v2291 = vunpack.c.l.b16 %v320
        %v2292 = vunpack.c.h.b16 %v320
        %v2293 = vunpack.c.l.b16 %v321
        %v2294 = vunpack.c.h.b16 %v321
        %v2295 = vunpack.c.l.b16 %v322
        %v2296 = vunpack.c.h.b16 %v322
        %v2297 = vunpack.c.l.b16 %v323
        %v2298 = vunpack.c.h.b16 %v323
        %v2299 = vunpack.c.l.b16 %v324
        %v2300 = vunpack.c.h.b16 %v324
        %v2301 = vunpack.c.l.b16 %v325
        %v2302 = vunpack.c.h.b16 %v325
        %v2303 = vunpack.c.l.b16 %v326
        %v2304 = vunpack.c.h.b16 %v326
        %v2305 = vunpack.c.l.b16 %v327
        %v2306 = vunpack.c.h.b16 %v327
        %v2307 = vunpack.c.l.b16 %v328
        %v2308 = vunpack.c.h.b16 %v328
        %v2309 = vunpack.c.l.b16 %v329
        %v2310 = vunpack.c.h.b16 %v329
        %v2311 = vunpack.c.l.b16 %v330
        %v2312 = vunpack.c.h.b16 %v330
        %v2313 = vunpack.c.l.b16 %v331
        %v2314 = vunpack.c.h.b16 %v331
        %v2315 = vunpack.c.l.b16 %v332
        %v2316 = vunpack.c.h.b16 %v332
        %v2317 = vunpack.c.l.b16 %v333
        %v2318 = vunpack.c.h.b16 %v333
        %v2319 = vunpack.c.l.b16 %v334
        %v2320 = vunpack.c.h.b16 %v334
        %v2321 = vunpack.c.l.b16 %v335
        %v2322 = vunpack.c.h.b16 %v335
        %v2323 = vunpack.c.l.b16 %v336
        %v2324 = vunpack.c.h.b16 %v336
        %v2325 = vunpack.c.l.b16 %v337
        %v2326 = vunpack.c.h.b16 %v337
        %v2327 = vunpack.c.l.b16 %v338
        %v2328 = vunpack.c.h.b16 %v338
        %v2329 = vunpack.c.l.b16 %v339
        %v2330 = vunpack.c.h.b16 %v339
        %v2331 = vunpack.c.l.b16 %v340
        %v2332 = vunpack.c.h.b16 %v340
        %v2333 = vunpack.c.l.b16 %v341
        %v2334 = vunpack.c.h.b16 %v341
        %v2335 = vunpack.c.l.b16 %v342
        %v2336 = vunpack.c.h.b16 %v342
        %v2337 = vunpack.c.l.b16 %v343
        %v2338 = vunpack.c.h.b16 %v343
        %v2339 = vunpack.c.l.b16 %v344
        %v2340 = vunpack.c.h.b16 %v344
        %v2341 = vunpack.c.l.b16 %v345
        %v2342 = vunpack.c.h.b16 %v345
        %v2343 = vunpack.c.l.b16 %v346
        %v2344 = vunpack.c.h.b16 %v346
        %v2345 = vunpack.c.l.b16 %v347
        %v2346 = vunpack.c.h.b16 %v347
        %v2347 = vunpack.c.l.b16 %v348
        %v2348 = vunpack.c.h.b16 %v348
        %v2349 = vunpack.c.l.b16 %v349
        %v2350 = vunpack.c.h.b16 %v349
        %v2351 = vunpack.c.l.b16 %v350
        %v2352 = vunpack.c.h.b16 %v350
        %v2353 = vunpack.c.l.b16 %v351
        %v2354 = vunpack.c.h.b16 %v351
        %v2355 = vunpack.c.l.b16 %v352
        %v2356 = vunpack.c.h.b16 %v352
        %v2357 = vunpack.c.l.b16 %v353
        %v2358 = vunpack.c.h.b16 %v353
        %v2359 = vunpack.c.l.b16 %v354
        %v2360 = vunpack.c.h.b16 %v354
        %v2361 = vunpack.c.l.b16 %v355
        %v2362 = vunpack.c.h.b16 %v355
        %v2363 = vunpack.c.l.b16 %v356
        %v2364 = vunpack.c.h.b16 %v356
        %v2365 = vunpack.c.l.b16 %v357
        %v2366 = vunpack.c.h.b16 %v357
        %v2367 = vunpack.c.l.b16 %v358
        %v2368 = vunpack.c.h.b16 %v358
        %v2369 = vunpack.c.l.b16 %v359
        %v2370 = vunpack.c.h.b16 %v359
        %v2371 = vunpack.c.l.b16 %v360
        %v2372 = vunpack.c.h.b16 %v360
        %v2373 = vunpack.c.l.b16 %v361
        %v2374 = vunpack.c.h.b16 %v361
        %v2375 = vunpack.c.l.b16 %v362
        %v2376 = vunpack.c.h.b16 %v362
        %v2377 = vunpack.c.l.b16 %v363
        %v2378 = vunpack.c.h.b16 %v363
        %v2379 = vunpack.c.l.b16 %v364
        %v2380 = vunpack.c.h.b16 %v364
        %v2381 = vunpack.c.l.b16 %v365
        %v2382 = vunpack.c.h.b16 %v365
        %v2383 = vunpack.c.l.b16 %v366
        %v2384 = vunpack.c.h.b16 %v366
        %v2385 = vunpack.c.l.b16 %v367
        %v2386 = vunpack.c.h.b16 %v367
        %v2387 = vunpack.c.l.b16 %v368
        %v2388 = vunpack.c.h.b16 %v368
        %v2389 = vunpack.c.l.b16 %v369
        %v2390 = vunpack.c.h.b16 %v369
        %v2391 = vunpack.c.l.b16 %v370
        %v2392 = vunpack.c.h.b16 %v370
        %v2393 = vunpack.c.l.b16 %v371
        %v2394 = vunpack.c.h.b16 %v371
        %v2395 = vunpack.c.l.b16 %v372
        %v2396 = vunpack.c.h.b16 %v372
        %v2397 = vunpack.c.l.b16 %v373
        %v2398 = vunpack.c.h.b16 %v373
        %v2399 = vunpack.c.l.b16 %v374
        %v2400 = vunpack.c.h.b16 %v374
        %v2401 = vunpack.c.l.b16 %v375
        %v2402 = vunpack.c.h.b16 %v375
        %v2403 = vunpack.c.l.b16 %v376
        %v2404 = vunpack.c.h.b16 %v376
        %v2405 = vunpack.c.l.b16 %v377
        %v2406 = vunpack.c.h.b16 %v377
        %v2407 = vunpack.c.l.b16 %v378
        %v2408 = vunpack.c.h.b16 %v378
        %v2409 = vunpack.c.l.b16 %v379
        %v2410 = vunpack.c.h.b16 %v379
        %v2411 = vunpack.c.l.b16 %v380
        %v2412 = vunpack.c.h.b16 %v380
        %v2413 = vunpack.c.l.b16 %v381
        %v2414 = vunpack.c.h.b16 %v381
        %v2415 = vunpack.c.l.b16 %v382
        %v2416 = vunpack.c.h.b16 %v382
        %v2417 = vunpack.c.l.b16 %v383
        %v2418 = vunpack.c.h.b16 %v383
        %v2419 = vunpack.c.l.b16 %v384
        %v2420 = vunpack.c.h.b16 %v384
        %v2421 = vunpack.c.l.b16 %v385
        %v2422 = vunpack.c.h.b16 %v385
        %v2423 = vunpack.c.l.b16 %v386
        %v2424 = vunpack.c.h.b16 %v386
        %v2425 = vunpack.c.l.b16 %v387
        %v2426 = vunpack.c.h.b16 %v387
        %v2427 = vunpack.c.l.b16 %v388
        %v2428 = vunpack.c.h.b16 %v388
        %v2429 = vunpack.c.l.b16 %v389
        %v2430 = vunpack.c.h.b16 %v389
        %v2431 = vunpack.c.l.b16 %v390
        %v2432 = vunpack.c.h.b16 %v390
        %v2433 = vunpack.c.l.b16 %v391
        %v2434 = vunpack.c.h.b16 %v391
        %v2435 = vunpack.c.l.b16 %v392
        %v2436 = vunpack.c.h.b16 %v392
        %v2437 = vunpack.c.l.b16 %v393
        %v2438 = vunpack.c.h.b16 %v393
        %v2439 = vunpack.c.l.b16 %v394
        %v2440 = vunpack.c.h.b16 %v394
        %v2441 = vunpack.c.l.b16 %v395
        %v2442 = vunpack.c.h.b16 %v395
        %v2443 = vunpack.c.l.b16 %v396
        %v2444 = vunpack.c.h.b16 %v396
        %v2445 = vunpack.c.l.b16 %v397
        %v2446 = vunpack.c.h.b16 %v397
        %v2447 = vunpack.c.l.b16 %v398
        %v2448 = vunpack.c.h.b16 %v398
        %v2449 = vunpack.c.l.b16 %v399
        %v2450 = vunpack.c.h.b16 %v399
        %v2451 = vunpack.c.l.b16 %v400
        %v2452 = vunpack.c.h.b16 %v400
        %v2453 = vunpack.c.l.b16 %v401
        %v2454 = vunpack.c.h.b16 %v401
        %v2455 = vunpack.c.l.b16 %v402
        %v2456 = vunpack.c.h.b16 %v402
        %v2457 = vunpack.c.l.b16 %v403
        %v2458 = vunpack.c.h.b16 %v403
        %v2459 = vunpack.c.l.b16 %v404
        %v2460 = vunpack.c.h.b16 %v404
        %v2461 = vunpack.c.l.b16 %v405
        %v2462 = vunpack.c.h.b16 %v405
        %v2463 = vunpack.c.l.b16 %v406
        %v2464 = vunpack.c.h.b16 %v406
        %v2465 = vunpack.c.l.b16 %v407
        %v2466 = vunpack.c.h.b16 %v407
        %v2467 = vunpack.c.l.b16 %v408
        %v2468 = vunpack.c.h.b16 %v408
        %v2469 = vunpack.c.l.b16 %v409
        %v2470 = vunpack.c.h.b16 %v409
        %v2471 = vunpack.c.l.b16 %v410
        %v2472 = vunpack.c.h.b16 %v410
        %v2473 = vunpack.c.l.b16 %v411
        %v2474 = vunpack.c.h.b16 %v411
        %v2475 = vunpack.c.l.b16 %v412
        %v2476 = vunpack.c.h.b16 %v412
        %v2477 = vunpack.c.l.b16 %v413
        %v2478 = vunpack.c.h.b16 %v413
        %v2479 = vunpack.c.l.b16 %v414
        %v2480 = vunpack.c.h.b16 %v414
        %v2481 = vunpack.c.l.b16 %v415
        %v2482 = vunpack.c.h.b16 %v415
        %v2483 = vunpack.c.l.b16 %v416
        %v2484 = vunpack.c.h.b16 %v416
        %v2485 = vunpack.c.l.b16 %v417
        %v2486 = vunpack.c.h.b16 %v417
        %v2487 = vunpack.c.l.b16 %v418
        %v2488 = vunpack.c.h.b16 %v418
        %v2489 = vunpack.c.l.b16 %v419
        %v2490 = vunpack.c.h.b16 %v419
        %v2491 = vunpack.c.l.b16 %v420
        %v2492 = vunpack.c.h.b16 %v420
        %v2493 = vunpack.c.l.b16 %v421
        %v2494 = vunpack.c.h.b16 %v421
        %v2495 = vunpack.c.l.b16 %v422
        %v2496 = vunpack.c.h.b16 %v422
        %v2497 = vunpack.c.l.b16 %v423
        %v2498 = vunpack.c.h.b16 %v423
        %v2499 = vunpack.c.l.b16 %v424
        %v2500 = vunpack.c.h.b16 %v424
        %v2501 = vunpack.c.l.b16 %v425
        %v2502 = vunpack.c.h.b16 %v425
        %v2503 = vunpack.c.l.b16 %v426
        %v2504 = vunpack.c.h.b16 %v426
        %v2505 = vunpack.c.l.b16 %v427
        %v2506 = vunpack.c.h.b16 %v427
        %v2507 = vunpack.c.l.b16 %v428
        %v2508 = vunpack.c.h.b16 %v428
        %v2509 = vunpack.c.l.b16 %v429
        %v2510 = vunpack.c.h.b16 %v429
        %v2511 = vunpack.c.l.b16 %v430
        %v2512 = vunpack.c.h.b16 %v430
        %v2513 = vunpack.c.l.b16 %v431
        %v2514 = vunpack.c.h.b16 %v431
        %v2515 = vunpack.c.l.b16 %v432
        %v2516 = vunpack.c.h.b16 %v432
        %v2517 = vunpack.c.l.b16 %v433
        %v2518 = vunpack.c.h.b16 %v433
        %v2519 = vunpack.c.l.b16 %v434
        %v2520 = vunpack.c.h.b16 %v434
        %v2521 = vunpack.c.l.b16 %v435
        %v2522 = vunpack.c.h.b16 %v435
        %v2523 = vunpack.c.l.b16 %v436
        %v2524 = vunpack.c.h.b16 %v436
        %v2525 = vunpack.c.l.b16 %v437
        %v2526 = vunpack.c.h.b16 %v437
        %v2527 = vunpack.c.l.b16 %v438
        %v2528 = vunpack.c.h.b16 %v438
        %v2529 = vunpack.c.l.b16 %v439
        %v2530 = vunpack.c.h.b16 %v439
        %v2531 = vunpack.c.l.b16 %v440
        %v2532 = vunpack.c.h.b16 %v440
        %v2533 = vunpack.c.l.b16 %v441
        %v2534 = vunpack.c.h.b16 %v441
        %v2535 = vunpack.c.l.b16 %v442
        %v2536 = vunpack.c.h.b16 %v442
        %v2537 = vunpack.c.l.b16 %v443
        %v2538 = vunpack.c.h.b16 %v443
        %v2539 = vunpack.c.l.b16 %v444
        %v2540 = vunpack.c.h.b16 %v444
        %v2541 = vunpack.c.l.b16 %v445
        %v2542 = vunpack.c.h.b16 %v445
        %v2543 = vunpack.c.l.b16 %v446
        %v2544 = vunpack.c.h.b16 %v446
        %v2545 = vunpack.c.l.b16 %v447
        %v2546 = vunpack.c.h.b16 %v447
        %v2547 = vunpack.c.l.b16 %v448
        %v2548 = vunpack.c.h.b16 %v448
        %v2549 = vunpack.c.l.b16 %v449
        %v2550 = vunpack.c.h.b16 %v449
        %v2551 = vunpack.c.l.b16 %v450
        %v2552 = vunpack.c.h.b16 %v450
        %v2553 = vunpack.c.l.b16 %v451
        %v2554 = vunpack.c.h.b16 %v451
        %v2555 = vunpack.c.l.b16 %v452
        %v2556 = vunpack.c.h.b16 %v452
        %v2557 = vunpack.c.l.b16 %v453
        %v2558 = vunpack.c.h.b16 %v453
        %v2559 = vunpack.c.l.b16 %v454
        %v2560 = vunpack.c.h.b16 %v454
        %v2561 = vunpack.c.l.b16 %v455
        %v2562 = vunpack.c.h.b16 %v455
        %v2563 = vunpack.c.l.b16 %v456
        %v2564 = vunpack.c.h.b16 %v456
        %v2565 = vunpack.c.l.b16 %v457
        %v2566 = vunpack.c.h.b16 %v457
        %v2567 = vunpack.c.l.b16 %v458
        %v2568 = vunpack.c.h.b16 %v458
        %v2569 = vunpack.c.l.b16 %v459
        %v2570 = vunpack.c.h.b16 %v459
        %v2571 = vunpack.c.l.b16 %v460
        %v2572 = vunpack.c.h.b16 %v460
        %v2573 = vunpack.c.l.b16 %v461
        %v2574 = vunpack.c.h.b16 %v461
        %v2575 = vunpack.c.l.b16 %v462
        %v2576 = vunpack.c.h.b16 %v462
        %v2577 = vunpack.c.l.b16 %v463
        %v2578 = vunpack.c.h.b16 %v463
        %v2579 = vunpack.c.l.b16 %v464
        %v2580 = vunpack.c.h.b16 %v464
        %v2581 = vunpack.c.l.b16 %v465
        %v2582 = vunpack.c.h.b16 %v465
        %v2583 = vunpack.c.l.b16 %v466
        %v2584 = vunpack.c.h.b16 %v466
        %v2585 = vunpack.c.l.b16 %v467
        %v2586 = vunpack.c.h.b16 %v467
        %v2587 = vunpack.c.l.b16 %v468
        %v2588 = vunpack.c.h.b16 %v468
        %v2589 = vunpack.c.l.b16 %v469
        %v2590 = vunpack.c.h.b16 %v469
        %v2591 = vunpack.c.l.b16 %v470
        %v2592 = vunpack.c.h.b16 %v470
        %v2593 = vunpack.c.l.b16 %v471
        %v2594 = vunpack.c.h.b16 %v471
        %v2595 = vunpack.c.l.b16 %v472
        %v2596 = vunpack.c.h.b16 %v472
        %v2597 = vunpack.c.l.b16 %v473
        %v2598 = vunpack.c.h.b16 %v473
        %v2599 = vunpack.c.l.b16 %v474
        %v2600 = vunpack.c.h.b16 %v474
        %v2601 = vunpack.c.l.b16 %v475
        %v2602 = vunpack.c.h.b16 %v475
        %v2603 = vunpack.c.l.b16 %v476
        %v2604 = vunpack.c.h.b16 %v476
        %v2605 = vunpack.c.l.b16 %v477
        %v2606 = vunpack.c.h.b16 %v477
        %v2607 = vunpack.c.l.b16 %v478
        %v2608 = vunpack.c.h.b16 %v478
        %v2609 = vunpack.c.l.b16 %v479
        %v2610 = vunpack.c.h.b16 %v479
        %v2611 = vunpack.c.l.b16 %v480
        %v2612 = vunpack.c.h.b16 %v480
        %v2613 = vunpack.c.l.b16 %v481
        %v2614 = vunpack.c.h.b16 %v481
        %v2615 = vunpack.c.l.b16 %v482
        %v2616 = vunpack.c.h.b16 %v482
        %v2617 = vunpack.c.l.b16 %v483
        %v2618 = vunpack.c.h.b16 %v483
        %v2619 = vunpack.c.l.b16 %v484
        %v2620 = vunpack.c.h.b16 %v484
        %v2621 = vunpack.c.l.b16 %v485
        %v2622 = vunpack.c.h.b16 %v485
        %v2623 = vunpack.c.l.b16 %v486
        %v2624 = vunpack.c.h.b16 %v486
        %v2625 = vunpack.c.l.b16 %v487
        %v2626 = vunpack.c.h.b16 %v487
        %v2627 = vunpack.c.l.b16 %v488
        %v2628 = vunpack.c.h.b16 %v488
        %v2629 = vunpack.c.l.b16 %v489
        %v2630 = vunpack.c.h.b16 %v489
        %v2631 = vunpack.c.l.b16 %v490
        %v2632 = vunpack.c.h.b16 %v490
        %v2633 = vunpack.c.l.b16 %v491
        %v2634 = vunpack.c.h.b16 %v491
        %v2635 = vunpack.c.l.b16 %v492
        %v2636 = vunpack.c.h.b16 %v492
        %v2637 = vunpack.c.l.b16 %v493
        %v2638 = vunpack.c.h.b16 %v493
        %v2639 = vunpack.c.l.b16 %v494
        %v2640 = vunpack.c.h.b16 %v494
        %v2641 = vunpack.c.l.b16 %v495
        %v2642 = vunpack.c.h.b16 %v495
        %v2643 = vunpack.c.l.b16 %v496
        %v2644 = vunpack.c.h.b16 %v496
        %v2645 = vunpack.c.l.b16 %v497
        %v2646 = vunpack.c.h.b16 %v497
        %v2647 = vunpack.c.l.b16 %v498
        %v2648 = vunpack.c.h.b16 %v498
        %v2649 = vunpack.c.l.b16 %v499
        %v2650 = vunpack.c.h.b16 %v499
        %v2651 = vunpack.c.l.b16 %v500
        %v2652 = vunpack.c.h.b16 %v500
        %v2653 = vunpack.c.l.b16 %v501
        %v2654 = vunpack.c.h.b16 %v501
        %v2655 = vunpack.c.l.b16 %v502
        %v2656 = vunpack.c.h.b16 %v502
        %v2657 = vunpack.c.l.b16 %v503
        %v2658 = vunpack.c.h.b16 %v503
        %v2659 = vunpack.c.l.b16 %v504
        %v2660 = vunpack.c.h.b16 %v504
        %v2661 = vunpack.c.l.b16 %v505
        %v2662 = vunpack.c.h.b16 %v505
        %v2663 = vunpack.c.l.b16 %v506
        %v2664 = vunpack.c.h.b16 %v506
        %v2665 = vunpack.c.l.b16 %v507
        %v2666 = vunpack.c.h.b16 %v507
        %v2667 = vunpack.c.l.b16 %v508
        %v2668 = vunpack.c.h.b16 %v508
        %v2669 = vunpack.c.l.b16 %v509
        %v2670 = vunpack.c.h.b16 %v509
        %v2671 = vunpack.c.l.b16 %v510
        %v2672 = vunpack.c.h.b16 %v510
        %v2673 = vunpack.c.l.b16 %v511
        %v2674 = vunpack.c.h.b16 %v511
        %v2675 = vunpack.c.l.b16 %v512
        %v2676 = vunpack.c.h.b16 %v512
        %v2677 = vunpack.c.l.b16 %v513
        %v2678 = vunpack.c.h.b16 %v513
        %v2679 = vunpack.c.l.b16 %v514
        %v2680 = vunpack.c.h.b16 %v514
        %v2681 = vunpack.c.l.b16 %v515
        %v2682 = vunpack.c.h.b16 %v515
        %v2683 = vunpack.c.l.b16 %v516
        %v2684 = vunpack.c.h.b16 %v516
        %v2685 = vunpack.c.l.b16 %v517
        %v2686 = vunpack.c.h.b16 %v517
        %v2687 = vunpack.c.l.b16 %v518
        %v2688 = vunpack.c.h.b16 %v518
        %v2689 = vunpack.c.l.b16 %v519
        %v2690 = vunpack.c.h.b16 %v519
        %v2691 = vunpack.c.l.b16 %v520
        %v2692 = vunpack.c.h.b16 %v520
        %v2693 = vunpack.c.l.b16 %v521
        %v2694 = vunpack.c.h.b16 %v521
        %v2695 = vunpack.c.l.b16 %v522
        %v2696 = vunpack.c.h.b16 %v522
        %v2697 = vunpack.c.l.b16 %v523
        %v2698 = vunpack.c.h.b16 %v523
        %v2699 = vunpack.c.l.b16 %v524
        %v2700 = vunpack.c.h.b16 %v524
        %v2701 = vunpack.c.l.b16 %v525
        %v2702 = vunpack.c.h.b16 %v525
        %v2703 = vunpack.c.l.b16 %v526
        %v2704 = vunpack.c.h.b16 %v526
        %v2705 = vunpack.c.l.b16 %v527
        %v2706 = vunpack.c.h.b16 %v527
        %v2707 = vunpack.c.l.b16 %v528
        %v2708 = vunpack.c.h.b16 %v528
        %v2709 = vunpack.c.l.b16 %v529
        %v2710 = vunpack.c.h.b16 %v529
        %v2711 = vunpack.c.l.b16 %v530
        %v2712 = vunpack.c.h.b16 %v530
        %v2713 = vunpack.c.l.b16 %v531
        %v2714 = vunpack.c.h.b16 %v531
        %v2715 = vunpack.c.l.b16 %v532
        %v2716 = vunpack.c.h.b16 %v532
        %v2717 = vunpack.c.l.b16 %v533
        %v2718 = vunpack.c.h.b16 %v533
        %v2719 = vunpack.c.l.b16 %v534
        %v2720 = vunpack.c.h.b16 %v534
        %v2721 = vunpack.c.l.b16 %v535
        %v2722 = vunpack.c.h.b16 %v535
        %v2723 = vunpack.c.l.b16 %v536
        %v2724 = vunpack.c.h.b16 %v536
        %v2725 = vunpack.c.l.b16 %v537
        %v2726 = vunpack.c.h.b16 %v537
        %v2727 = vunpack.c.l.b16 %v538
        %v2728 = vunpack.c.h.b16 %v538
        %v2729 = vunpack.c.l.b16 %v539
        %v2730 = vunpack.c.h.b16 %v539
        %v2731 = vunpack.c.l.b16 %v540
        %v2732 = vunpack.c.h.b16 %v540
        %v2733 = vunpack.c.l.b16 %v541
        %v2734 = vunpack.c.h.b16 %v541
        %v2735 = vunpack.c.l.b16 %v542
        %v2736 = vunpack.c.h.b16 %v542
        %v2737 = vunpack.c.l.b16 %v543
        %v2738 = vunpack.c.h.b16 %v543
        %v2739 = vunpack.c.l.b16 %v544
        %v2740 = vunpack.c.h.b16 %v544
        %v2741 = vunpack.c.l.b16 %v545
        %v2742 = vunpack.c.h.b16 %v545
        %v2743 = vunpack.c.l.b16 %v546
        %v2744 = vunpack.c.h.b16 %v546
        %v2745 = vunpack.c.l.b16 %v547
        %v2746 = vunpack.c.h.b16 %v547
        %v2747 = vunpack.c.l.b16 %v548
        %v2748 = vunpack.c.h.b16 %v548
        %v2749 = vunpack.c.l.b16 %v549
        %v2750 = vunpack.c.h.b16 %v549
        %v2751 = vunpack.c.l.b16 %v550
        %v2752 = vunpack.c.h.b16 %v550
        %v2753 = vunpack.c.l.b16 %v551
        %v2754 = vunpack.c.h.b16 %v551
        %v2755 = vunpack.c.l.b16 %v552
        %v2756 = vunpack.c.h.b16 %v552
        %v2757 = vunpack.c.l.b16 %v553
        %v2758 = vunpack.c.h.b16 %v553
        %v2759 = vunpack.c.l.b16 %v554
        %v2760 = vunpack.c.h.b16 %v554
        %v2761 = vunpack.c.l.b16 %v555
        %v2762 = vunpack.c.h.b16 %v555
        %v2763 = vunpack.c.l.b16 %v556
        %v2764 = vunpack.c.h.b16 %v556
        %v2765 = vunpack.c.l.b16 %v557
        %v2766 = vunpack.c.h.b16 %v557
        %v2767 = vunpack.c.l.b16 %v558
        %v2768 = vunpack.c.h.b16 %v558
        %v2769 = vunpack.c.l.b16 %v559
        %v2770 = vunpack.c.h.b16 %v559
        %v2771 = vunpack.c.l.b16 %v560
        %v2772 = vunpack.c.h.b16 %v560
        %v2773 = vunpack.c.l.b16 %v561
        %v2774 = vunpack.c.h.b16 %v561
        %v2775 = vunpack.c.l.b16 %v562
        %v2776 = vunpack.c.h.b16 %v562
        %v2777 = vunpack.c.l.b16 %v563
        %v2778 = vunpack.c.h.b16 %v563
        %v2779 = vunpack.c.l.b16 %v564
        %v2780 = vunpack.c.h.b16 %v564
        %v2781 = vunpack.c.l.b16 %v565
        %v2782 = vunpack.c.h.b16 %v565
        %v2783 = vunpack.c.l.b16 %v566
        %v2784 = vunpack.c.h.b16 %v566
        %v2785 = vunpack.c.l.b16 %v567
        %v2786 = vunpack.c.h.b16 %v567
        %v2787 = vunpack.c.l.b16 %v568
        %v2788 = vunpack.c.h.b16 %v568
        %v2789 = vunpack.c.l.b16 %v569
        %v2790 = vunpack.c.h.b16 %v569
        %v2791 = vunpack.c.l.b16 %v570
        %v2792 = vunpack.c.h.b16 %v570
        %v2793 = vunpack.c.l.b16 %v571
        %v2794 = vunpack.c.h.b16 %v571
        %v2795 = vunpack.c.l.b16 %v572
        %v2796 = vunpack.c.h.b16 %v572
        %v2797 = vunpack.c.l.b16 %v573
        %v2798 = vunpack.c.h.b16 %v573
        %v2799 = vunpack.c.l.b16 %v574
        %v2800 = vunpack.c.h.b16 %v574
        %v2801 = vunpack.c.l.b16 %v575
        %v2802 = vunpack.c.h.b16 %v575
        %v2803 = vunpack.c.l.b16 %v576
        %v2804 = vunpack.c.h.b16 %v576
        %v2805 = vunpack.c.l.b16 %v577
        %v2806 = vunpack.c.h.b16 %v577
        %v2807 = vunpack.c.l.b16 %v578
        %v2808 = vunpack.c.h.b16 %v578
        %v2809 = vunpack.c.l.b16 %v579
        %v2810 = vunpack.c.h.b16 %v579
        %v2811 = vunpack.c.l.b16 %v580
        %v2812 = vunpack.c.h.b16 %v580
        %v2813 = vunpack.c.l.b16 %v581
        %v2814 = vunpack.c.h.b16 %v581
        %v2815 = vunpack.c.l.b16 %v582
        %v2816 = vunpack.c.h.b16 %v582
        %v2817 = vunpack.c.l.b16 %v583
        %v2818 = vunpack.c.h.b16 %v583
        %v2819 = vunpack.c.l.b16 %v584
        %v2820 = vunpack.c.h.b16 %v584
        %v2821 = vunpack.c.l.b16 %v585
        %v2822 = vunpack.c.h.b16 %v585
        %v2823 = vunpack.c.l.b16 %v586
        %v2824 = vunpack.c.h.b16 %v586
        %v2825 = vunpack.c.l.b16 %v587
        %v2826 = vunpack.c.h.b16 %v587
        %v2827 = vunpack.c.l.b16 %v588
        %v2828 = vunpack.c.h.b16 %v588
        %v2829 = vunpack.c.l.b16 %v589
        %v2830 = vunpack.c.h.b16 %v589
        %v2831 = vunpack.c.l.b16 %v590
        %v2832 = vunpack.c.h.b16 %v590
        %v2833 = vunpack.c.l.b16 %v591
        %v2834 = vunpack.c.h.b16 %v591
        %v2835 = vunpack.c.l.b16 %v592
        %v2836 = vunpack.c.h.b16 %v592
        %v2837 = vunpack.c.l.b16 %v593
        %v2838 = vunpack.c.h.b16 %v593
        %v2839 = vunpack.c.l.b16 %v594
        %v2840 = vunpack.c.h.b16 %v594
        %v2841 = vunpack.c.l.b16 %v595
        %v2842 = vunpack.c.h.b16 %v595
        %v2843 = vunpack.c.l.b16 %v596
        %v2844 = vunpack.c.h.b16 %v596
        %v2845 = vunpack.c.l.b16 %v597
        %v2846 = vunpack.c.h.b16 %v597
        %v2847 = vunpack.c.l.b16 %v598
        %v2848 = vunpack.c.h.b16 %v598
        %v2849 = vunpack.c.l.b16 %v599
        %v2850 = vunpack.c.h.b16 %v599
        %v2851 = vunpack.c.l.b16 %v600
        %v2852 = vunpack.c.h.b16 %v600
        %v2853 = vunpack.c.l.b16 %v601
        %v2854 = vunpack.c.h.b16 %v601
        %v2855 = vunpack.c.l.b16 %v602
        %v2856 = vunpack.c.h.b16 %v602
        %v2857 = vunpack.c.l.b16 %v603
        %v2858 = vunpack.c.h.b16 %v603
        %v2859 = vunpack.c.l.b16 %v604
        %v2860 = vunpack.c.h.b16 %v604
        %v2861 = vunpack.c.l.b16 %v605
        %v2862 = vunpack.c.h.b16 %v605
        %v2863 = vunpack.c.l.b16 %v606
        %v2864 = vunpack.c.h.b16 %v606
        %v2865 = vunpack.c.l.b16 %v607
        %v2866 = vunpack.c.h.b16 %v607
        %v2867 = vunpack.c.l.b16 %v608
        %v2868 = vunpack.c.h.b16 %v608
        %v2869 = vunpack.c.l.b16 %v609
        %v2870 = vunpack.c.h.b16 %v609
        %v2871 = vunpack.c.l.b16 %v610
        %v2872 = vunpack.c.h.b16 %v610
        %v2873 = vunpack.c.l.b16 %v611
        %v2874 = vunpack.c.h.b16 %v611
        %v2875 = vunpack.c.l.b16 %v612
        %v2876 = vunpack.c.h.b16 %v612
        %v2877 = vunpack.c.l.b16 %v613
        %v2878 = vunpack.c.h.b16 %v613
        %v2879 = vunpack.c.l.b16 %v614
        %v2880 = vunpack.c.h.b16 %v614
        %v2881 = vunpack.c.l.b16 %v615
        %v2882 = vunpack.c.h.b16 %v615
        %v2883 = vunpack.c.l.b16 %v616
        %v2884 = vunpack.c.h.b16 %v616
        %v2885 = vunpack.c.l.b16 %v617
        %v2886 = vunpack.c.h.b16 %v617
        %v2887 = vunpack.c.l.b16 %v618
        %v2888 = vunpack.c.h.b16 %v618
        %v2889 = vunpack.c.l.b16 %v619
        %v2890 = vunpack.c.h.b16 %v619
        %v2891 = vunpack.c.l.b16 %v620
        %v2892 = vunpack.c.h.b16 %v620
        %v2893 = vunpack.c.l.b16 %v621
        %v2894 = vunpack.c.h.b16 %v621
        %v2895 = vunpack.c.l.b16 %v622
        %v2896 = vunpack.c.h.b16 %v622
        %v2897 = vunpack.c.l.b16 %v623
        %v2898 = vunpack.c.h.b16 %v623
        %v2899 = vunpack.c.l.b16 %v624
        %v2900 = vunpack.c.h.b16 %v624
        %v2901 = vunpack.c.l.b16 %v625
        %v2902 = vunpack.c.h.b16 %v625
        %v2903 = vunpack.c.l.b16 %v626
        %v2904 = vunpack.c.h.b16 %v626
        %v2905 = vunpack.c.l.b16 %v627
        %v2906 = vunpack.c.h.b16 %v627
        %v2907 = vunpack.c.l.b16 %v628
        %v2908 = vunpack.c.h.b16 %v628
        %v2909 = vunpack.c.l.b16 %v629
        %v2910 = vunpack.c.h.b16 %v629
        %v2911 = vunpack.c.l.b16 %v630
        %v2912 = vunpack.c.h.b16 %v630
        %v2913 = vunpack.c.l.b16 %v631
        %v2914 = vunpack.c.h.b16 %v631
        %v2915 = vunpack.c.l.b16 %v632
        %v2916 = vunpack.c.h.b16 %v632
        %v2917 = vunpack.c.l.b16 %v633
        %v2918 = vunpack.c.h.b16 %v633
        %v2919 = vunpack.c.l.b16 %v634
        %v2920 = vunpack.c.h.b16 %v634
        %v2921 = vunpack.c.l.b16 %v635
        %v2922 = vunpack.c.h.b16 %v635
        %v2923 = vunpack.c.l.b16 %v636
        %v2924 = vunpack.c.h.b16 %v636
        %v2925 = vunpack.c.l.b16 %v637
        %v2926 = vunpack.c.h.b16 %v637
        %v2927 = vunpack.c.l.b16 %v638
        %v2928 = vunpack.c.h.b16 %v638
        %v2929 = vunpack.c.l.b16 %v639
        %v2930 = vunpack.c.h.b16 %v639
        %v2931 = vunpack.c.l.b16 %v640
        %v2932 = vunpack.c.h.b16 %v640
        %v2933 = vunpack.c.l.b16 %v641
        %v2934 = vunpack.c.h.b16 %v641
        %v2935 = vunpack.c.l.b16 %v642
        %v2936 = vunpack.c.h.b16 %v642
        %v2937 = vunpack.c.l.b16 %v643
        %v2938 = vunpack.c.h.b16 %v643
        %v2939 = vunpack.c.l.b16 %v644
        %v2940 = vunpack.c.h.b16 %v644
        %v2941 = vunpack.c.l.b16 %v645
        %v2942 = vunpack.c.h.b16 %v645
        %v2943 = vunpack.c.l.b16 %v646
        %v2944 = vunpack.c.h.b16 %v646
        %v2945 = vunpack.c.l.b16 %v647
        %v2946 = vunpack.c.h.b16 %v647
        %v2947 = vunpack.c.l.b16 %v648
        %v2948 = vunpack.c.h.b16 %v648
        %v2949 = vunpack.c.l.b16 %v649
        %v2950 = vunpack.c.h.b16 %v649
        %v2951 = vunpack.c.l.b16 %v650
        %v2952 = vunpack.c.h.b16 %v650
        %v2953 = vunpack.c.l.b16 %v651
        %v2954 = vunpack.c.h.b16 %v651
        %v2955 = vunpack.c.l.b16 %v652
        %v2956 = vunpack.c.h.b16 %v652
        %v2957 = vunpack.c.l.b16 %v653
        %v2958 = vunpack.c.h.b16 %v653
        %v2959 = vunpack.c.l.b16 %v654
        %v2960 = vunpack.c.h.b16 %v654
        %v2961 = vunpack.c.l.b16 %v655
        %v2962 = vunpack.c.h.b16 %v655
        %v2963 = vunpack.c.l.b16 %v656
        %v2964 = vunpack.c.h.b16 %v656
        %v2965 = vunpack.c.l.b16 %v657
        %v2966 = vunpack.c.h.b16 %v657
        %v2967 = vunpack.c.l.b16 %v658
        %v2968 = vunpack.c.h.b16 %v658
        %v2969 = vunpack.c.l.b16 %v659
        %v2970 = vunpack.c.h.b16 %v659
        %v2971 = vunpack.c.l.b16 %v660
        %v2972 = vunpack.c.h.b16 %v660
        %v2973 = vunpack.c.l.b16 %v661
        %v2974 = vunpack.c.h.b16 %v661
        %v2975 = vunpack.c.l.b16 %v662
        %v2976 = vunpack.c.h.b16 %v662
        %v2977 = vunpack.c.l.b16 %v663
        %v2978 = vunpack.c.h.b16 %v663
        %v2979 = vunpack.c.l.b16 %v664
        %v2980 = vunpack.c.h.b16 %v664
        %v2981 = vunpack.c.l.b16 %v665
        %v2982 = vunpack.c.h.b16 %v665
        %v2983 = vunpack.c.l.b16 %v666
        %v2984 = vunpack.c.h.b16 %v666
        %v2985 = vunpack.c.l.b16 %v667
        %v2986 = vunpack.c.h.b16 %v667
        %v2987 = vunpack.c.l.b16 %v668
        %v2988 = vunpack.c.h.b16 %v668
        %v2989 = vunpack.c.l.b16 %v669
        %v2990 = vunpack.c.h.b16 %v669
        %v2991 = vunpack.c.l.b16 %v670
        %v2992 = vunpack.c.h.b16 %v670
        %v2993 = vunpack.c.l.b16 %v671
        %v2994 = vunpack.c.h.b16 %v671
        %v2995 = vunpack.c.l.b16 %v672
        %v2996 = vunpack.c.h.b16 %v672
        %v2997 = vunpack.c.l.b16 %v673
        %v2998 = vunpack.c.h.b16 %v673
        %v2999 = vunpack.c.l.b16 %v674
        %v3000 = vunpack.c.h.b16 %v674
        %v3001 = vunpack.c.l.b16 %v675
        %v3002 = vunpack.c.h.b16 %v675
        %v3003 = vunpack.c.l.b16 %v676
        %v3004 = vunpack.c.h.b16 %v676
        %v3005 = vunpack.c.l.b16 %v677
        %v3006 = vunpack.c.h.b16 %v677
        %v3007 = vunpack.c.l.b16 %v678
        %v3008 = vunpack.c.h.b16 %v678
        %v3009 = vunpack.c.l.b16 %v679
        %v3010 = vunpack.c.h.b16 %v679
        %v3011 = vunpack.c.l.b16 %v680
        %v3012 = vunpack.c.h.b16 %v680
        %v3013 = vunpack.c.l.b16 %v681
        %v3014 = vunpack.c.h.b16 %v681
        %v3015 = vunpack.c.l.b16 %v682
        %v3016 = vunpack.c.h.b16 %v682
        %v3017 = vunpack.c.l.b16 %v683
        %v3018 = vunpack.c.h.b16 %v683
        %v3019 = vunpack.c.l.b16 %v684
        %v3020 = vunpack.c.h.b16 %v684
        %v3021 = vunpack.c.l.b16 %v685
        %v3022 = vunpack.c.h.b16 %v685
        %v3023 = vunpack.c.l.b16 %v686
        %v3024 = vunpack.c.h.b16 %v686
        %v3025 = vunpack.c.l.b16 %v687
        %v3026 = vunpack.c.h.b16 %v687
        %v3027 = vunpack.c.l.b16 %v688
        %v3028 = vunpack.c.h.b16 %v688
        %v3029 = vunpack.c.l.b16 %v689
        %v3030 = vunpack.c.h.b16 %v689
        %v3031 = vunpack.c.l.b16 %v690
        %v3032 = vunpack.c.h.b16 %v690
        %v3033 = vunpack.c.l.b16 %v691
        %v3034 = vunpack.c.h.b16 %v691
        %v3035 = vunpack.c.l.b16 %v692
        %v3036 = vunpack.c.h.b16 %v692
        %v3037 = vunpack.c.l.b16 %v693
        %v3038 = vunpack.c.h.b16 %v693
        %v3039 = vunpack.c.l.b16 %v694
        %v3040 = vunpack.c.h.b16 %v694
        %v3041 = vunpack.c.l.b16 %v695
        %v3042 = vunpack.c.h.b16 %v695
        %v3043 = vunpack.c.l.b16 %v696
        %v3044 = vunpack.c.h.b16 %v696
        %v3045 = vunpack.c.l.b16 %v697
        %v3046 = vunpack.c.h.b16 %v697
        %v3047 = vunpack.c.l.b16 %v698
        %v3048 = vunpack.c.h.b16 %v698
        %v3049 = vunpack.c.l.b16 %v699
        %v3050 = vunpack.c.h.b16 %v699
        %v3051 = vunpack.c.l.b16 %v700
        %v3052 = vunpack.c.h.b16 %v700
        %v3053 = vunpack.c.l.b16 %v701
        %v3054 = vunpack.c.h.b16 %v701
        %v3055 = vunpack.c.l.b16 %v702
        %v3056 = vunpack.c.h.b16 %v702
        %v3057 = vunpack.c.l.b16 %v703
        %v3058 = vunpack.c.h.b16 %v703
        %v3059 = vunpack.c.l.b16 %v704
        %v3060 = vunpack.c.h.b16 %v704
        %v3061 = vunpack.c.l.b16 %v705
        %v3062 = vunpack.c.h.b16 %v705
        %v3063 = vunpack.c.l.b16 %v706
        %v3064 = vunpack.c.h.b16 %v706
        %v3065 = vunpack.c.l.b16 %v707
        %v3066 = vunpack.c.h.b16 %v707
        %v3067 = vunpack.c.l.b16 %v708
        %v3068 = vunpack.c.h.b16 %v708
        %v3069 = vunpack.c.l.b16 %v709
        %v3070 = vunpack.c.h.b16 %v709
        %v3071 = vunpack.c.l.b16 %v710
        %v3072 = vunpack.c.h.b16 %v710
        %v3073 = vunpack.c.l.b16 %v711
        %v3074 = vunpack.c.h.b16 %v711
        %v3075 = vunpack.c.l.b16 %v712
        %v3076 = vunpack.c.h.b16 %v712
        %v3077 = vunpack.c.l.b16 %v713
        %v3078 = vunpack.c.h.b16 %v713
        %v3079 = vunpack.c.l.b16 %v714
        %v3080 = vunpack.c.h.b16 %v714
        %v3081 = vunpack.c.l.b16 %v715
        %v3082 = vunpack.c.h.b16 %v715
        %v3083 = vunpack.c.l.b16 %v716
        %v3084 = vunpack.c.h.b16 %v716
        %v3085 = vunpack.c.l.b16 %v717
        %v3086 = vunpack.c.h.b16 %v717
        %v3087 = vunpack.c.l.b16 %v718
        %v3088 = vunpack.c.h.b16 %v718
        %v3089 = vunpack.c.l.b16 %v719
        %v3090 = vunpack.c.h.b16 %v719
        %v3091 = vunpack.c.l.b16 %v720
        %v3092 = vunpack.c.h.b16 %v720
        %v3093 = vunpack.c.l.b16 %v721
        %v3094 = vunpack.c.h.b16 %v721
        %v3095 = vunpack.c.l.b16 %v722
        %v3096 = vunpack.c.h.b16 %v722
        %v3097 = vunpack.c.l.b16 %v723
        %v3098 = vunpack.c.h.b16 %v723
        %v3099 = vunpack.c.l.b16 %v724
        %v3100 = vunpack.c.h.b16 %v724
        %v3101 = vunpack.c.l.b16 %v725
        %v3102 = vunpack.c.h.b16 %v725
        %v3103 = vunpack.c.l.b16 %v726
        %v3104 = vunpack.c.h.b16 %v726
        %v3105 = vunpack.c.l.b16 %v727
        %v3106 = vunpack.c.h.b16 %v727
        %v3107 = vunpack.c.l.b16 %v728
        %v3108 = vunpack.c.h.b16 %v728
        %v3109 = vunpack.c.l.b16 %v729
        %v3110 = vunpack.c.h.b16 %v729
        %v3111 = vunpack.c.l.b16 %v730
        %v3112 = vunpack.c.h.b16 %v730
        %v3113 = vunpack.c.l.b16 %v731
        %v3114 = vunpack.c.h.b16 %v731
        %v3115 = vunpack.c.l.b16 %v732
        %v3116 = vunpack.c.h.b16 %v732
        %v3117 = vunpack.c.l.b16 %v733
        %v3118 = vunpack.c.h.b16 %v733
        %v3119 = vunpack.c.l.b16 %v734
        %v3120 = vunpack.c.h.b16 %v734
        %v3121 = vunpack.c.l.b16 %v735
        %v3122 = vunpack.c.h.b16 %v735
        %v3123 = vunpack.c.l.b16 %v736
        %v3124 = vunpack.c.h.b16 %v736
        %v3125 = vunpack.c.l.b16 %v737
        %v3126 = vunpack.c.h.b16 %v737
        %v3127 = vunpack.c.l.b16 %v738
        %v3128 = vunpack.c.h.b16 %v738
        %v3129 = vunpack.c.l.b16 %v739
        %v3130 = vunpack.c.h.b16 %v739
        %v3131 = vunpack.c.l.b16 %v740
        %v3132 = vunpack.c.h.b16 %v740
        %v3133 = vunpack.c.l.b16 %v741
        %v3134 = vunpack.c.h.b16 %v741
        %v3135 = vunpack.c.l.b16 %v742
        %v3136 = vunpack.c.h.b16 %v742
        %v3137 = vunpack.c.l.b16 %v743
        %v3138 = vunpack.c.h.b16 %v743
        %v3139 = vunpack.c.l.b16 %v744
        %v3140 = vunpack.c.h.b16 %v744
        %v3141 = vunpack.c.l.b16 %v745
        %v3142 = vunpack.c.h.b16 %v745
        %v3143 = vunpack.c.l.b16 %v746
        %v3144 = vunpack.c.h.b16 %v746
        %v3145 = vunpack.c.l.b16 %v747
        %v3146 = vunpack.c.h.b16 %v747
        %v3147 = vunpack.c.l.b16 %v748
        %v3148 = vunpack.c.h.b16 %v748
        %v3149 = vunpack.c.l.b16 %v749
        %v3150 = vunpack.c.h.b16 %v749
        %v3151 = vunpack.c.l.b16 %v750
        %v3152 = vunpack.c.h.b16 %v750
        %v3153 = vunpack.c.l.b16 %v751
        %v3154 = vunpack.c.h.b16 %v751
        %v3155 = vunpack.c.l.b16 %v752
        %v3156 = vunpack.c.h.b16 %v752
        %v3157 = vunpack.c.l.b16 %v753
        %v3158 = vunpack.c.h.b16 %v753
        %v3159 = vunpack.c.l.b16 %v754
        %v3160 = vunpack.c.h.b16 %v754
        %v3161 = vunpack.c.l.b16 %v755
        %v3162 = vunpack.c.h.b16 %v755
        %v3163 = vunpack.c.l.b16 %v756
        %v3164 = vunpack.c.h.b16 %v756
        %v3165 = vunpack.c.l.b16 %v757
        %v3166 = vunpack.c.h.b16 %v757
        %v3167 = vunpack.c.l.b16 %v758
        %v3168 = vunpack.c.h.b16 %v758
        %v3169 = vunpack.c.l.b16 %v759
        %v3170 = vunpack.c.h.b16 %v759
        %v3171 = vunpack.c.l.b16 %v760
        %v3172 = vunpack.c.h.b16 %v760
        %v3173 = vunpack.c.l.b16 %v761
        %v3174 = vunpack.c.h.b16 %v761
        %v3175 = vunpack.c.l.b16 %v762
        %v3176 = vunpack.c.h.b16 %v762
        %v3177 = vunpack.c.l.b16 %v763
        %v3178 = vunpack.c.h.b16 %v763
        %v3179 = vunpack.c.l.b16 %v764
        %v3180 = vunpack.c.h.b16 %v764
        %v3181 = vunpack.c.l.b16 %v765
        %v3182 = vunpack.c.h.b16 %v765
        %v3183 = vunpack.c.l.b16 %v766
        %v3184 = vunpack.c.h.b16 %v766
        %v3185 = vunpack.c.l.b16 %v767
        %v3186 = vunpack.c.h.b16 %v767
        %v3187 = vunpack.c.l.b16 %v768
        %v3188 = vunpack.c.h.b16 %v768
        %v3189 = vunpack.c.l.b16 %v769
        %v3190 = vunpack.c.h.b16 %v769
        %v3191 = vunpack.c.l.b16 %v770
        %v3192 = vunpack.c.h.b16 %v770
        %v3193 = vunpack.c.l.b16 %v771
        %v3194 = vunpack.c.h.b16 %v771
        %v3195 = vunpack.c.l.b16 %v772
        %v3196 = vunpack.c.h.b16 %v772
        %v3197 = vunpack.c.l.b16 %v773
        %v3198 = vunpack.c.h.b16 %v773
        %v3199 = vunpack.c.l.b16 %v774
        %v3200 = vunpack.c.h.b16 %v774
        %v3201 = vunpack.c.l.b16 %v775
        %v3202 = vunpack.c.h.b16 %v775
        %v3203 = vunpack.c.l.b16 %v776
        %v3204 = vunpack.c.h.b16 %v776
        %v3205 = vunpack.c.l.b16 %v777
        %v3206 = vunpack.c.h.b16 %v777
        %v3207 = vunpack.c.l.b16 %v778
        %v3208 = vunpack.c.h.b16 %v778
        %v3209 = vunpack.c.l.b16 %v779
        %v3210 = vunpack.c.h.b16 %v779
        %v3211 = vunpack.c.l.b16 %v780
        %v3212 = vunpack.c.h.b16 %v780
        %v3213 = vunpack.c.l.b16 %v781
        %v3214 = vunpack.c.h.b16 %v781
        %v3215 = vunpack.c.l.b16 %v782
        %v3216 = vunpack.c.h.b16 %v782
        %v3217 = vunpack.c.l.b16 %v783
        %v3218 = vunpack.c.h.b16 %v783
        %v3219 = vunpack.c.l.b16 %v784
        %v3220 = vunpack.c.h.b16 %v784
        %v3221 = vunpack.c.l.b16 %v785
        %v3222 = vunpack.c.h.b16 %v785
        %v3223 = vunpack.c.l.b16 %v786
        %v3224 = vunpack.c.h.b16 %v786
        %v3225 = vunpack.c.l.b16 %v787
        %v3226 = vunpack.c.h.b16 %v787
        %v3227 = vunpack.c.l.b16 %v788
        %v3228 = vunpack.c.h.b16 %v788
        %v3229 = vunpack.c.l.b16 %v789
        %v3230 = vunpack.c.h.b16 %v789
        %v3231 = vunpack.c.l.b16 %v790
        %v3232 = vunpack.c.h.b16 %v790
        %v3233 = vunpack.c.l.b16 %v791
        %v3234 = vunpack.c.h.b16 %v791
        %v3235 = vunpack.c.l.b16 %v792
        %v3236 = vunpack.c.h.b16 %v792
        %v3237 = vunpack.c.l.b16 %v793
        %v3238 = vunpack.c.h.b16 %v793
        %v3239 = vunpack.c.l.b16 %v794
        %v3240 = vunpack.c.h.b16 %v794
        %v3241 = vunpack.c.l.b16 %v795
        %v3242 = vunpack.c.h.b16 %v795
        %v3243 = vunpack.c.l.b16 %v796
        %v3244 = vunpack.c.h.b16 %v796
        %v3245 = vunpack.c.l.b16 %v797
        %v3246 = vunpack.c.h.b16 %v797
        %v3247 = vunpack.c.l.b16 %v798
        %v3248 = vunpack.c.h.b16 %v798
        %v3249 = vunpack.c.l.b16 %v799
        %v3250 = vunpack.c.h.b16 %v799
        %v3251 = vunpack.c.l.b16 %v800
        %v3252 = vunpack.c.h.b16 %v800
        %v3253 = vunpack.c.l.b16 %v801
        %v3254 = vunpack.c.h.b16 %v801
        %v3255 = vunpack.c.l.b16 %v802
        %v3256 = vunpack.c.h.b16 %v802
        %v3257 = vunpack.c.l.b16 %v803
        %v3258 = vunpack.c.h.b16 %v803
        %v3259 = vunpack.c.l.b16 %v804
        %v3260 = vunpack.c.h.b16 %v804
        %v3261 = vunpack.c.l.b16 %v805
        %v3262 = vunpack.c.h.b16 %v805
        %v3263 = vunpack.c.l.b16 %v806
        %v3264 = vunpack.c.h.b16 %v806
        %v3265 = vunpack.c.l.b16 %v807
        %v3266 = vunpack.c.h.b16 %v807
        %v3267 = vunpack.c.l.b16 %v808
        %v3268 = vunpack.c.h.b16 %v808
        %v3269 = vunpack.c.l.b16 %v809
        %v3270 = vunpack.c.h.b16 %v809
        %v3271 = vunpack.c.l.b16 %v810
        %v3272 = vunpack.c.h.b16 %v810
        %v3273 = vunpack.c.l.b16 %v811
        %v3274 = vunpack.c.h.b16 %v811
        %v3275 = vunpack.c.l.b16 %v812
        %v3276 = vunpack.c.h.b16 %v812
        %v3277 = vunpack.c.l.b16 %v813
        %v3278 = vunpack.c.h.b16 %v813
        %v3279 = vunpack.c.l.b16 %v814
        %v3280 = vunpack.c.h.b16 %v814
        %v3281 = vunpack.c.l.b16 %v815
        %v3282 = vunpack.c.h.b16 %v815
        %v3283 = vunpack.c.l.b16 %v816
        %v3284 = vunpack.c.h.b16 %v816
        %v3285 = vunpack.c.l.b16 %v817
        %v3286 = vunpack.c.h.b16 %v817
        %v3287 = vunpack.c.l.b16 %v818
        %v3288 = vunpack.c.h.b16 %v818
        %v3289 = vunpack.c.l.b16 %v819
        %v3290 = vunpack.c.h.b16 %v819
        %v3291 = vunpack.c.l.b16 %v820
        %v3292 = vunpack.c.h.b16 %v820
        %v3293 = vunpack.c.l.b16 %v821
        %v3294 = vunpack.c.h.b16 %v821
        %v3295 = vunpack.c.l.b16 %v822
        %v3296 = vunpack.c.h.b16 %v822
        %v3297 = vunpack.c.l.b16 %v823
        %v3298 = vunpack.c.h.b16 %v823
        %v3299 = vunpack.c.l.b16 %v824
        %v3300 = vunpack.c.h.b16 %v824
        %v3301 = vunpack.c.l.b16 %v825
        %v3302 = vunpack.c.h.b16 %v825
        %v3303 = vunpack.c.l.b16 %v826
        %v3304 = vunpack.c.h.b16 %v826
        %v3305 = vunpack.c.l.b16 %v827
        %v3306 = vunpack.c.h.b16 %v827
        %v3307 = vunpack.c.l.b16 %v828
        %v3308 = vunpack.c.h.b16 %v828
        %v3309 = vunpack.c.l.b16 %v829
        %v3310 = vunpack.c.h.b16 %v829
        %v3311 = vunpack.c.l.b16 %v830
        %v3312 = vunpack.c.h.b16 %v830
        %v3313 = vunpack.c.l.b16 %v831
        %v3314 = vunpack.c.h.b16 %v831
        %v3315 = vunpack.c.l.b16 %v832
        %v3316 = vunpack.c.h.b16 %v832
        %v3317 = vunpack.c.l.b16 %v833
        %v3318 = vunpack.c.h.b16 %v833
        %v3319 = vunpack.c.l.b16 %v834
        %v3320 = vunpack.c.h.b16 %v834
        %v3321 = vunpack.c.l.b16 %v835
        %v3322 = vunpack.c.h.b16 %v835
        %v3323 = vunpack.c.l.b16 %v836
        %v3324 = vunpack.c.h.b16 %v836
        %v3325 = vunpack.c.l.b16 %v837
        %v3326 = vunpack.c.h.b16 %v837
        %v3327 = vunpack.c.l.b16 %v838
        %v3328 = vunpack.c.h.b16 %v838
        %v3329 = vunpack.c.l.b16 %v839
        %v3330 = vunpack.c.h.b16 %v839
        %v3331 = vunpack.c.l.b16 %v840
        %v3332 = vunpack.c.h.b16 %v840
        %v3333 = vunpack.c.l.b16 %v841
        %v3334 = vunpack.c.h.b16 %v841
        %v3335 = vunpack.c.l.b16 %v842
        %v3336 = vunpack.c.h.b16 %v842
        %v3337 = vunpack.c.l.b16 %v843
        %v3338 = vunpack.c.h.b16 %v843
        %v3339 = vunpack.c.l.b16 %v844
        %v3340 = vunpack.c.h.b16 %v844
        %v3341 = vunpack.c.l.b16 %v845
        %v3342 = vunpack.c.h.b16 %v845
        %v3343 = vunpack.c.l.b16 %v846
        %v3344 = vunpack.c.h.b16 %v846
        %v3345 = vunpack.c.l.b16 %v847
        %v3346 = vunpack.c.h.b16 %v847
        %v3347 = vunpack.c.l.b16 %v848
        %v3348 = vunpack.c.h.b16 %v848
        %v3349 = vunpack.c.l.b16 %v849
        %v3350 = vunpack.c.h.b16 %v849
        %v3351 = vunpack.c.l.b16 %v850
        %v3352 = vunpack.c.h.b16 %v850
        %v3353 = vunpack.c.l.b16 %v851
        %v3354 = vunpack.c.h.b16 %v851
        %v3355 = vunpack.c.l.b16 %v852
        %v3356 = vunpack.c.h.b16 %v852
        %v3357 = vunpack.c.l.b16 %v853
        %v3358 = vunpack.c.h.b16 %v853
        %v3359 = vunpack.c.l.b16 %v854
        %v3360 = vunpack.c.h.b16 %v854
        %v3361 = vunpack.c.l.b16 %v855
        %v3362 = vunpack.c.h.b16 %v855
        %v3363 = vunpack.c.l.b16 %v856
        %v3364 = vunpack.c.h.b16 %v856
        %v3365 = vunpack.c.l.b16 %v857
        %v3366 = vunpack.c.h.b16 %v857
        %v3367 = vunpack.c.l.b16 %v858
        %v3368 = vunpack.c.h.b16 %v858
        %v3369 = vunpack.c.l.b16 %v859
        %v3370 = vunpack.c.h.b16 %v859
        %v3371 = vunpack.c.l.b16 %v860
        %v3372 = vunpack.c.h.b16 %v860
        %v3373 = vunpack.c.l.b16 %v861
        %v3374 = vunpack.c.h.b16 %v861
        %v3375 = vunpack.c.l.b16 %v862
        %v3376 = vunpack.c.h.b16 %v862
        %v3377 = vunpack.c.l.b16 %v863
        %v3378 = vunpack.c.h.b16 %v863
        %v3379 = vunpack.c.l.b16 %v864
        %v3380 = vunpack.c.h.b16 %v864
        %v3381 = vunpack.c.l.b16 %v865
        %v3382 = vunpack.c.h.b16 %v865
        %v3383 = vunpack.c.l.b16 %v866
        %v3384 = vunpack.c.h.b16 %v866
        %v3385 = vunpack.c.l.b16 %v867
        %v3386 = vunpack.c.h.b16 %v867
        %v3387 = vunpack.c.l.b16 %v868
        %v3388 = vunpack.c.h.b16 %v868
        %v3389 = vunpack.c.l.b16 %v869
        %v3390 = vunpack.c.h.b16 %v869
        %v3391 = vunpack.c.l.b16 %v870
        %v3392 = vunpack.c.h.b16 %v870
        %v3393 = vunpack.c.l.b16 %v871
        %v3394 = vunpack.c.h.b16 %v871
        %v3395 = vunpack.c.l.b16 %v872
        %v3396 = vunpack.c.h.b16 %v872
        %v3397 = vunpack.c.l.b16 %v873
        %v3398 = vunpack.c.h.b16 %v873
        %v3399 = vunpack.c.l.b16 %v874
        %v3400 = vunpack.c.h.b16 %v874
        %v3401 = vunpack.c.l.b16 %v875
        %v3402 = vunpack.c.h.b16 %v875
        %v3403 = vunpack.c.l.b16 %v876
        %v3404 = vunpack.c.h.b16 %v876
        %v3405 = vunpack.c.l.b16 %v877
        %v3406 = vunpack.c.h.b16 %v877
        %v3407 = vunpack.c.l.b16 %v878
        %v3408 = vunpack.c.h.b16 %v878
        %v3409 = vunpack.c.l.b16 %v879
        %v3410 = vunpack.c.h.b16 %v879
        %v3411 = vunpack.c.l.b16 %v880
        %v3412 = vunpack.c.h.b16 %v880
        %v3413 = vunpack.c.l.b16 %v881
        %v3414 = vunpack.c.h.b16 %v881
        %v3415 = vunpack.c.l.b16 %v882
        %v3416 = vunpack.c.h.b16 %v882
        %v3417 = vunpack.c.l.b16 %v883
        %v3418 = vunpack.c.h.b16 %v883
        %v3419 = vunpack.c.l.b16 %v884
        %v3420 = vunpack.c.h.b16 %v884
        %v3421 = vunpack.c.l.b16 %v885
        %v3422 = vunpack.c.h.b16 %v885
        %v3423 = vunpack.c.l.b16 %v886
        %v3424 = vunpack.c.h.b16 %v886
        %v3425 = vunpack.c.l.b16 %v887
        %v3426 = vunpack.c.h.b16 %v887
        %v3427 = vunpack.c.l.b16 %v888
        %v3428 = vunpack.c.h.b16 %v888
        %v3429 = vunpack.c.l.b16 %v889
        %v3430 = vunpack.c.h.b16 %v889
        %v3431 = vunpack.c.l.b16 %v890
        %v3432 = vunpack.c.h.b16 %v890
        %v3433 = vunpack.c.l.b16 %v891
        %v3434 = vunpack.c.h.b16 %v891
        %v3435 = vunpack.c.l.b16 %v892
        %v3436 = vunpack.c.h.b16 %v892
        %v3437 = vunpack.c.l.b16 %v893
        %v3438 = vunpack.c.h.b16 %v893
        %v3439 = vunpack.c.l.b16 %v894
        %v3440 = vunpack.c.h.b16 %v894
        %v3441 = vunpack.c.l.b16 %v895
        %v3442 = vunpack.c.h.b16 %v895
        %v3443 = vunpack.c.l.b16 %v896
        %v3444 = vunpack.c.h.b16 %v896
        %v3445 = vunpack.c.l.b16 %v897
        %v3446 = vunpack.c.h.b16 %v897
        %v3447 = vunpack.c.l.b16 %v898
        %v3448 = vunpack.c.h.b16 %v898
        %v3449 = vunpack.c.l.b16 %v899
        %v3450 = vunpack.c.h.b16 %v899
        %v3451 = vunpack.c.l.b16 %v900
        %v3452 = vunpack.c.h.b16 %v900
        %v3453 = vunpack.c.l.b16 %v901
        %v3454 = vunpack.c.h.b16 %v901
        %v3455 = vunpack.c.l.b16 %v902
        %v3456 = vunpack.c.h.b16 %v902
        %v3457 = vunpack.c.l.b16 %v903
        %v3458 = vunpack.c.h.b16 %v903
        %v3459 = vunpack.c.l.b16 %v904
        %v3460 = vunpack.c.h.b16 %v904
        %v3461 = vunpack.c.l.b16 %v905
        %v3462 = vunpack.c.h.b16 %v905
        %v3463 = vunpack.c.l.b16 %v906
        %v3464 = vunpack.c.h.b16 %v906
        %v3465 = vunpack.c.l.b16 %v907
        %v3466 = vunpack.c.h.b16 %v907
        %v3467 = vunpack.c.l.b16 %v908
        %v3468 = vunpack.c.h.b16 %v908
        %v3469 = vunpack.c.l.b16 %v909
        %v3470 = vunpack.c.h.b16 %v909
        %v3471 = vunpack.c.l.b16 %v910
        %v3472 = vunpack.c.h.b16 %v910
        %v3473 = vunpack.c.l.b16 %v911
        %v3474 = vunpack.c.h.b16 %v911
        %v3475 = vunpack.c.l.b16 %v912
        %v3476 = vunpack.c.h.b16 %v912
        %v3477 = vunpack.c.l.b16 %v913
        %v3478 = vunpack.c.h.b16 %v913
        %v3479 = vunpack.c.l.b16 %v914
        %v3480 = vunpack.c.h.b16 %v914
        %v3481 = vunpack.c.l.b16 %v915
        %v3482 = vunpack.c.h.b16 %v915
        %v3483 = vunpack.c.l.b16 %v916
        %v3484 = vunpack.c.h.b16 %v916
        %v3485 = vunpack.c.l.b16 %v917
        %v3486 = vunpack.c.h.b16 %v917
        %v3487 = vunpack.c.l.b16 %v918
        %v3488 = vunpack.c.h.b16 %v918
        %v3489 = vunpack.c.l.b16 %v919
        %v3490 = vunpack.c.h.b16 %v919
        %v3491 = vunpack.c.l.b16 %v920
        %v3492 = vunpack.c.h.b16 %v920
        %v3493 = vunpack.c.l.b16 %v921
        %v3494 = vunpack.c.h.b16 %v921
        %v3495 = vunpack.c.l.b16 %v922
        %v3496 = vunpack.c.h.b16 %v922
        %v3497 = vunpack.c.l.b16 %v923
        %v3498 = vunpack.c.h.b16 %v923
        %v3499 = vunpack.c.l.b16 %v924
        %v3500 = vunpack.c.h.b16 %v924
        %v3501 = vunpack.c.l.b16 %v925
        %v3502 = vunpack.c.h.b16 %v925
        %v3503 = vunpack.c.l.b16 %v926
        %v3504 = vunpack.c.h.b16 %v926
        %v3505 = vunpack.c.l.b16 %v927
        %v3506 = vunpack.c.h.b16 %v927
        %v3507 = vunpack.c.l.b16 %v928
        %v3508 = vunpack.c.h.b16 %v928
        %v3509 = vunpack.c.l.b16 %v929
        %v3510 = vunpack.c.h.b16 %v929
        %v3511 = vunpack.c.l.b16 %v930
        %v3512 = vunpack.c.h.b16 %v930
        %v3513 = vunpack.c.l.b16 %v931
        %v3514 = vunpack.c.h.b16 %v931
        %v3515 = vunpack.c.l.b16 %v932
        %v3516 = vunpack.c.h.b16 %v932
        %v3517 = vunpack.c.l.b16 %v933
        %v3518 = vunpack.c.h.b16 %v933
        %v3519 = vunpack.c.l.b16 %v934
        %v3520 = vunpack.c.h.b16 %v934
        %v3521 = vunpack.c.l.b16 %v935
        %v3522 = vunpack.c.h.b16 %v935
        %v3523 = vunpack.c.l.b16 %v936
        %v3524 = vunpack.c.h.b16 %v936
        %v3525 = vunpack.c.l.b16 %v937
        %v3526 = vunpack.c.h.b16 %v937
        %v3527 = vunpack.c.l.b16 %v938
        %v3528 = vunpack.c.h.b16 %v938
        %v3529 = vunpack.c.l.b16 %v939
        %v3530 = vunpack.c.h.b16 %v939
        %v3531 = vunpack.c.l.b16 %v940
        %v3532 = vunpack.c.h.b16 %v940
        %v3533 = vunpack.c.l.b16 %v941
        %v3534 = vunpack.c.h.b16 %v941
        %v3535 = vunpack.c.l.b16 %v942
        %v3536 = vunpack.c.h.b16 %v942
        %v3537 = vunpack.c.l.b16 %v943
        %v3538 = vunpack.c.h.b16 %v943
        %v3539 = vunpack.c.l.b16 %v944
        %v3540 = vunpack.c.h.b16 %v944
        %v3541 = vunpack.c.l.b16 %v945
        %v3542 = vunpack.c.h.b16 %v945
        %v3543 = vunpack.c.l.b16 %v946
        %v3544 = vunpack.c.h.b16 %v946
        %v3545 = vunpack.c.l.b16 %v947
        %v3546 = vunpack.c.h.b16 %v947
        %v3547 = vunpack.c.l.b16 %v948
        %v3548 = vunpack.c.h.b16 %v948
        %v3549 = vunpack.c.l.b16 %v949
        %v3550 = vunpack.c.h.b16 %v949
        %v3551 = vunpack.c.l.b16 %v950
        %v3552 = vunpack.c.h.b16 %v950
        %v3553 = vunpack.c.l.b16 %v951
        %v3554 = vunpack.c.h.b16 %v951
        %v3555 = vunpack.c.l.b16 %v952
        %v3556 = vunpack.c.h.b16 %v952
        %v3557 = vunpack.c.l.b16 %v953
        %v3558 = vunpack.c.h.b16 %v953
        %v3559 = vunpack.c.l.b16 %v954
        %v3560 = vunpack.c.h.b16 %v954
        %v3561 = vunpack.c.l.b16 %v955
        %v3562 = vunpack.c.h.b16 %v955
        %v3563 = vunpack.c.l.b16 %v956
        %v3564 = vunpack.c.h.b16 %v956
        %v3565 = vunpack.c.l.b16 %v957
        %v3566 = vunpack.c.h.b16 %v957
        %v3567 = vunpack.c.l.b16 %v958
        %v3568 = vunpack.c.h.b16 %v958
        %v3569 = vunpack.c.l.b16 %v959
        %v3570 = vunpack.c.h.b16 %v959
        %v3571 = vunpack.c.l.b16 %v960
        %v3572 = vunpack.c.h.b16 %v960
        %v3573 = vunpack.c.l.b16 %v961
        %v3574 = vunpack.c.h.b16 %v961
        %v3575 = vunpack.c.l.b16 %v962
        %v3576 = vunpack.c.h.b16 %v962
        %v3577 = vunpack.c.l.b16 %v963
        %v3578 = vunpack.c.h.b16 %v963
        %v3579 = vunpack.c.l.b16 %v964
        %v3580 = vunpack.c.h.b16 %v964
        %v3581 = vunpack.c.l.b16 %v965
        %v3582 = vunpack.c.h.b16 %v965
        %v3583 = vunpack.c.l.b16 %v966
        %v3584 = vunpack.c.h.b16 %v966
        %v3585 = vunpack.c.l.b16 %v967
        %v3586 = vunpack.c.h.b16 %v967
        %v3587 = vunpack.c.l.b16 %v968
        %v3588 = vunpack.c.h.b16 %v968
        %v3589 = vunpack.c.l.b16 %v969
        %v3590 = vunpack.c.h.b16 %v969
        %v3591 = vunpack.c.l.b16 %v970
        %v3592 = vunpack.c.h.b16 %v970
        %v3593 = vunpack.c.l.b16 %v971
        %v3594 = vunpack.c.h.b16 %v971
        %v3595 = vunpack.c.l.b16 %v972
        %v3596 = vunpack.c.h.b16 %v972
        %v3597 = vunpack.c.l.b16 %v973
        %v3598 = vunpack.c.h.b16 %v973
        %v3599 = vunpack.c.l.b16 %v974
        %v3600 = vunpack.c.h.b16 %v974
        %v3601 = vunpack.c.l.b16 %v975
        %v3602 = vunpack.c.h.b16 %v975
        %v3603 = vunpack.c.l.b16 %v976
        %v3604 = vunpack.c.h.b16 %v976
        %v3605 = vunpack.c.l.b16 %v977
        %v3606 = vunpack.c.h.b16 %v977
        %v3607 = vunpack.c.l.b16 %v978
        %v3608 = vunpack.c.h.b16 %v978
        %v3609 = vunpack.c.l.b16 %v979
        %v3610 = vunpack.c.h.b16 %v979
        %v3611 = vunpack.c.l.b16 %v980
        %v3612 = vunpack.c.h.b16 %v980
        %v3613 = vunpack.c.l.b16 %v981
        %v3614 = vunpack.c.h.b16 %v981
        %v3615 = vunpack.c.l.b16 %v982
        %v3616 = vunpack.c.h.b16 %v982
        %v3617 = vunpack.c.l.b16 %v983
        %v3618 = vunpack.c.h.b16 %v983
        %v3619 = vunpack.c.l.b16 %v984
        %v3620 = vunpack.c.h.b16 %v984
        %v3621 = vunpack.c.l.b16 %v985
        %v3622 = vunpack.c.h.b16 %v985
        %v3623 = vunpack.c.l.b16 %v986
        %v3624 = vunpack.c.h.b16 %v986
        %v3625 = vunpack.c.l.b16 %v987
        %v3626 = vunpack.c.h.b16 %v987
        %v3627 = vunpack.c.l.b16 %v988
        %v3628 = vunpack.c.h.b16 %v988
        %v3629 = vunpack.c.l.b16 %v989
        %v3630 = vunpack.c.h.b16 %v989
        %v3631 = vunpack.c.l.b16 %v990
        %v3632 = vunpack.c.h.b16 %v990
        %v3633 = vunpack.c.l.b16 %v991
        %v3634 = vunpack.c.h.b16 %v991
        %v3635 = vunpack.c.l.b16 %v992
        %v3636 = vunpack.c.h.b16 %v992
        %v3637 = vunpack.c.l.b16 %v993
        %v3638 = vunpack.c.h.b16 %v993
        %v3639 = vunpack.c.l.b16 %v994
        %v3640 = vunpack.c.h.b16 %v994
        %v3641 = vunpack.c.l.b16 %v995
        %v3642 = vunpack.c.h.b16 %v995
        %v3643 = vunpack.c.l.b16 %v996
        %v3644 = vunpack.c.h.b16 %v996
        %v3645 = vunpack.c.l.b16 %v997
        %v3646 = vunpack.c.h.b16 %v997
        %v3647 = vunpack.c.l.b16 %v998
        %v3648 = vunpack.c.h.b16 %v998
        %v3649 = vunpack.c.l.b16 %v999
        %v3650 = vunpack.c.h.b16 %v999
        %v3651 = vunpack.c.l.b16 %v1000
        %v3652 = vunpack.c.h.b16 %v1000
        %v3653 = vunpack.c.l.b16 %v1001
        %v3654 = vunpack.c.h.b16 %v1001
        %v3655 = vunpack.c.l.b16 %v1002
        %v3656 = vunpack.c.h.b16 %v1002
        %v3657 = vunpack.c.l.b16 %v1003
        %v3658 = vunpack.c.h.b16 %v1003
        %v3659 = vunpack.c.l.b16 %v1004
        %v3660 = vunpack.c.h.b16 %v1004
        %v3661 = vunpack.c.l.b16 %v1005
        %v3662 = vunpack.c.h.b16 %v1005
        %v3663 = vunpack.c.l.b16 %v1006
        %v3664 = vunpack.c.h.b16 %v1006
        %v3665 = vunpack.c.l.b16 %v1007
        %v3666 = vunpack.c.h.b16 %v1007
        %v3667 = vunpack.c.l.b16 %v1008
        %v3668 = vunpack.c.h.b16 %v1008
        %v3669 = vunpack.c.l.b16 %v1009
        %v3670 = vunpack.c.h.b16 %v1009
        %v3671 = vunpack.c.l.b16 %v1010
        %v3672 = vunpack.c.h.b16 %v1010
        %v3673 = vunpack.c.l.b16 %v1011
        %v3674 = vunpack.c.h.b16 %v1011
        %v3675 = vunpack.c.l.b16 %v1012
        %v3676 = vunpack.c.h.b16 %v1012
        %v3677 = vunpack.c.l.b16 %v1013
        %v3678 = vunpack.c.h.b16 %v1013
        %v3679 = vunpack.c.l.b16 %v1014
        %v3680 = vunpack.c.h.b16 %v1014
        %v3681 = vunpack.c.l.b16 %v1015
        %v3682 = vunpack.c.h.b16 %v1015
        %v3683 = vunpack.c.l.b16 %v1016
        %v3684 = vunpack.c.h.b16 %v1016
        %v3685 = vunpack.c.l.b16 %v1017
        %v3686 = vunpack.c.h.b16 %v1017
        %v3687 = vunpack.c.l.b16 %v1018
        %v3688 = vunpack.c.h.b16 %v1018
        %v3689 = vunpack.c.l.b16 %v1019
        %v3690 = vunpack.c.h.b16 %v1019
        %v3691 = vunpack.c.l.b16 %v1020
        %v3692 = vunpack.c.h.b16 %v1020
        %v3693 = vunpack.c.l.b16 %v1021
        %v3694 = vunpack.c.h.b16 %v1021
        %v3695 = vunpack.c.l.b16 %v1022
        %v3696 = vunpack.c.h.b16 %v1022
        %v3697 = vunpack.c.l.b16 %v1023
        %v3698 = vunpack.c.h.b16 %v1023
        %v3699 = vunpack.c.l.b16 %v1024
        %v3700 = vunpack.c.h.b16 %v1024
        %v3701 = vunpack.c.l.b16 %v1025
        %v3702 = vunpack.c.h.b16 %v1025
        %v3703 = vunpack.c.l.b16 %v1026
        %v3704 = vunpack.c.h.b16 %v1026
        %v3705 = vunpack.c.l.b16 %v1027
        %v3706 = vunpack.c.h.b16 %v1027
        %v3707 = vunpack.c.l.b16 %v1028
        %v3708 = vunpack.c.h.b16 %v1028
        %v3709 = vunpack.c.l.b16 %v1029
        %v3710 = vunpack.c.h.b16 %v1029
        %v3711 = vunpack.c.l.b16 %v1030
        %v3712 = vunpack.c.h.b16 %v1030
        %v3713 = vunpack.c.l.b16 %v1031
        %v3714 = vunpack.c.h.b16 %v1031
        %v3715 = vunpack.c.l.b16 %v1032
        %v3716 = vunpack.c.h.b16 %v1032
        %v3717 = vunpack.c.l.b16 %v1033
        %v3718 = vunpack.c.h.b16 %v1033
        %v3719 = vunpack.c.l.b16 %v1034
        %v3720 = vunpack.c.h.b16 %v1034
        %v3721 = vunpack.c.l.b16 %v1035
        %v3722 = vunpack.c.h.b16 %v1035
        %v3723 = vunpack.c.l.b16 %v1036
        %v3724 = vunpack.c.h.b16 %v1036
        %v3725 = vunpack.c.l.b16 %v1037
        %v3726 = vunpack.c.h.b16 %v1037
        %v3727 = vunpack.c.l.b16 %v1038
        %v3728 = vunpack.c.h.b16 %v1038
        %v3729 = vunpack.c.l.b16 %v1039
        %v3730 = vunpack.c.h.b16 %v1039
        %v3731 = vunpack.c.l.b16 %v1040
        %v3732 = vunpack.c.h.b16 %v1040
        %v3733 = vunpack.c.l.b16 %v1041
        %v3734 = vunpack.c.h.b16 %v1041
        %v3735 = vunpack.c.l.b16 %v1042
        %v3736 = vunpack.c.h.b16 %v1042
        %v3737 = vunpack.c.l.b16 %v1043
        %v3738 = vunpack.c.h.b16 %v1043
        %v3739 = vunpack.c.l.b16 %v1044
        %v3740 = vunpack.c.h.b16 %v1044
        %v3741 = vunpack.c.l.b16 %v1045
        %v3742 = vunpack.c.h.b16 %v1045
        %v3743 = vunpack.c.l.b16 %v1046
        %v3744 = vunpack.c.h.b16 %v1046
        %v3745 = vunpack.c.l.b16 %v1047
        %v3746 = vunpack.c.h.b16 %v1047
        %v3747 = vunpack.c.l.b16 %v1048
        %v3748 = vunpack.c.h.b16 %v1048
        %v3749 = vunpack.c.l.b16 %v1049
        %v3750 = vunpack.c.h.b16 %v1049
        %v3751 = vunpack.c.l.b16 %v1050
        %v3752 = vunpack.c.h.b16 %v1050
        %v3753 = vunpack.c.l.b16 %v1051
        %v3754 = vunpack.c.h.b16 %v1051
        %v3755 = vunpack.c.l.b16 %v1052
        %v3756 = vunpack.c.h.b16 %v1052
        %v3757 = vunpack.c.l.b16 %v1053
        %v3758 = vunpack.c.h.b16 %v1053
        %v3759 = vunpack.c.l.b16 %v1054
        %v3760 = vunpack.c.h.b16 %v1054
        %v3761 = vunpack.c.l.b16 %v1055
        %v3762 = vunpack.c.h.b16 %v1055
        %v3763 = vunpack.c.l.b16 %v1056
        %v3764 = vunpack.c.h.b16 %v1056
        %v3765 = vunpack.c.l.b16 %v1057
        %v3766 = vunpack.c.h.b16 %v1057
        %v3767 = vunpack.c.l.b16 %v1058
        %v3768 = vunpack.c.h.b16 %v1058
        %v3769 = vunpack.c.l.b16 %v1059
        %v3770 = vunpack.c.h.b16 %v1059
        %v3771 = vunpack.c.l.b16 %v1060
        %v3772 = vunpack.c.h.b16 %v1060
        %v3773 = vunpack.c.l.b16 %v1061
        %v3774 = vunpack.c.h.b16 %v1061
        %v3775 = vunpack.c.l.b16 %v1062
        %v3776 = vunpack.c.h.b16 %v1062
        %v3777 = vunpack.c.l.b16 %v1063
        %v3778 = vunpack.c.h.b16 %v1063
        %v3779 = vunpack.c.l.b16 %v1064
        %v3780 = vunpack.c.h.b16 %v1064
        %v3781 = vpack.c.b16 %v2215, %v2213
        %v3782 = vpack.c.b16 %v2216, %v2214
        %v3783 = vpack.c.b16 %v2219, %v2217
        %v3784 = vpack.c.b16 %v2220, %v2218
        %v3785 = vpack.c.b16 %v2223, %v2221
        %v3786 = vpack.c.b16 %v2224, %v2222
        %v3787 = vpack.c.b16 %v2227, %v2225
        %v3788 = vpack.c.b16 %v2228, %v2226
        %v3789 = vpack.c.b16 %v2231, %v2229
        %v3790 = vpack.c.b16 %v2232, %v2230
        %v3791 = vpack.c.b16 %v2235, %v2233
        %v3792 = vpack.c.b16 %v2236, %v2234
        %v3793 = vpack.c.b16 %v2239, %v2237
        %v3794 = vpack.c.b16 %v2240, %v2238
        %v3795 = vpack.c.b16 %v2243, %v2241
        %v3796 = vpack.c.b16 %v2244, %v2242
        %v3797 = vpack.c.b16 %v2247, %v2245
        %v3798 = vpack.c.b16 %v2248, %v2246
        %v3799 = vpack.c.b16 %v2251, %v2249
        %v3800 = vpack.c.b16 %v2252, %v2250
        %v3801 = vpack.c.b16 %v2255, %v2253
        %v3802 = vpack.c.b16 %v2256, %v2254
        %v3803 = vpack.c.b16 %v2259, %v2257
        %v3804 = vpack.c.b16 %v2260, %v2258
        %v3805 = vpack.c.b16 %v2263, %v2261
        %v3806 = vpack.c.b16 %v2264, %v2262
        %v3807 = vpack.c.b16 %v2267, %v2265
        %v3808 = vpack.c.b16 %v2268, %v2266
        %v3809 = vpack.c.b16 %v2271, %v2269
        %v3810 = vpack.c.b16 %v2272, %v2270
        %v3811 = vpack.c.b16 %v2275, %v2273
        %v3812 = vpack.c.b16 %v2276, %v2274
        %v3813 = vpack.c.b16 %v2279, %v2277
        %v3814 = vpack.c.b16 %v2280, %v2278
        %v3815 = vpack.c.b16 %v2283, %v2281
        %v3816 = vpack.c.b16 %v2284, %v2282
        %v3817 = vpack.c.b16 %v2287, %v2285
        %v3818 = vpack.c.b16 %v2288, %v2286
        %v3819 = vpack.c.b16 %v2291, %v2289
        %v3820 = vpack.c.b16 %v2292, %v2290
        %v3821 = vpack.c.b16 %v2295, %v2293
        %v3822 = vpack.c.b16 %v2296, %v2294
        %v3823 = vpack.c.b16 %v2299, %v2297
        %v3824 = vpack.c.b16 %v2300, %v2298
        %v3825 = vpack.c.b16 %v2303, %v2301
        %v3826 = vpack.c.b16 %v2304, %v2302
        %v3827 = vpack.c.b16 %v2307, %v2305
        %v3828 = vpack.c.b16 %v2308, %v2306
        %v3829 = vpack.c.b16 %v2311, %v2309
        %v3830 = vpack.c.b16 %v2312, %v2310
        %v3831 = vpack.c.b16 %v2315, %v2313
        %v3832 = vpack.c.b16 %v2316, %v2314
        %v3833 = vpack.c.b16 %v2319, %v2317
        %v3834 = vpack.c.b16 %v2320, %v2318
        %v3835 = vpack.c.b16 %v2323, %v2321
        %v3836 = vpack.c.b16 %v2324, %v2322
        %v3837 = vpack.c.b16 %v2327, %v2325
        %v3838 = vpack.c.b16 %v2328, %v2326
        %v3839 = vpack.c.b16 %v2331, %v2329
        %v3840 = vpack.c.b16 %v2332, %v2330
        %v3841 = vpack.c.b16 %v2335, %v2333
        %v3842 = vpack.c.b16 %v2336, %v2334
        %v3843 = vpack.c.b16 %v2339, %v2337
        %v3844 = vpack.c.b16 %v2340, %v2338
        %v3845 = vpack.c.b16 %v2343, %v2341
        %v3846 = vpack.c.b16 %v2344, %v2342
        %v3847 = vpack.c.b16 %v2347, %v2345
        %v3848 = vpack.c.b16 %v2348, %v2346
        %v3849 = vpack.c.b16 %v2351, %v2349
        %v3850 = vpack.c.b16 %v2352, %v2350
        %v3851 = vpack.c.b16 %v2355, %v2353
        %v3852 = vpack.c.b16 %v2356, %v2354
        %v3853 = vpack.c.b16 %v2359, %v2357
        %v3854 = vpack.c.b16 %v2360, %v2358
        %v3855 = vpack.c.b16 %v2363, %v2361
        %v3856 = vpack.c.b16 %v2364, %v2362
        %v3857 = vpack.c.b16 %v2367, %v2365
        %v3858 = vpack.c.b16 %v2368, %v2366
        %v3859 = vpack.c.b16 %v2371, %v2369
        %v3860 = vpack.c.b16 %v2372, %v2370
        %v3861 = vpack.c.b16 %v2375, %v2373
        %v3862 = vpack.c.b16 %v2376, %v2374
        %v3863 = vpack.c.b16 %v2379, %v2377
        %v3864 = vpack.c.b16 %v2380, %v2378
        %v3865 = vpack.c.b16 %v2383, %v2381
        %v3866 = vpack.c.b16 %v2384, %v2382
        %v3867 = vpack.c.b16 %v2387, %v2385
        %v3868 = vpack.c.b16 %v2388, %v2386
        %v3869 = vpack.c.b16 %v2391, %v2389
        %v3870 = vpack.c.b16 %v2392, %v2390
        %v3871 = vpack.c.b16 %v2395, %v2393
        %v3872 = vpack.c.b16 %v2396, %v2394
        %v3873 = vpack.c.b16 %v2399, %v2397
        %v3874 = vpack.c.b16 %v2400, %v2398
        %v3875 = vpack.c.b16 %v2403, %v2401
        %v3876 = vpack.c.b16 %v2404, %v2402
        %v3877 = vpack.c.b16 %v2407, %v2405
        %v3878 = vpack.c.b16 %v2408, %v2406
        %v3879 = vpack.c.b16 %v2411, %v2409
        %v3880 = vpack.c.b16 %v2412, %v2410
        %v3881 = vpack.c.b16 %v2415, %v2413
        %v3882 = vpack.c.b16 %v2416, %v2414
        %v3883 = vpack.c.b16 %v2419, %v2417
        %v3884 = vpack.c.b16 %v2420, %v2418
        %v3885 = vpack.c.b16 %v2423, %v2421
        %v3886 = vpack.c.b16 %v2424, %v2422
        %v3887 = vpack.c.b16 %v2427, %v2425
        %v3888 = vpack.c.b16 %v2428, %v2426
        %v3889 = vpack.c.b16 %v2431, %v2429
        %v3890 = vpack.c.b16 %v2432, %v2430
        %v3891 = vpack.c.b16 %v2435, %v2433
        %v3892 = vpack.c.b16 %v2436, %v2434
        %v3893 = vpack.c.b16 %v2439, %v2437
        %v3894 = vpack.c.b16 %v2440, %v2438
        %v3895 = vpack.c.b16 %v2443, %v2441
        %v3896 = vpack.c.b16 %v2444, %v2442
        %v3897 = vpack.c.b16 %v2447, %v2445
        %v3898 = vpack.c.b16 %v2448, %v2446
        %v3899 = vpack.c.b16 %v2451, %v2449
        %v3900 = vpack.c.b16 %v2452, %v2450
        %v3901 = vpack.c.b16 %v2455, %v2453
        %v3902 = vpack.c.b16 %v2456, %v2454
        %v3903 = vpack.c.b16 %v2459, %v2457
        %v3904 = vpack.c.b16 %v2460, %v2458
        %v3905 = vpack.c.b16 %v2463, %v2461
        %v3906 = vpack.c.b16 %v2464, %v2462
        %v3907 = vpack.c.b16 %v2467, %v2465
        %v3908 = vpack.c.b16 %v2468, %v2466
        %v3909 = vpack.c.b16 %v2471, %v2469
        %v3910 = vpack.c.b16 %v2472, %v2470
        %v3911 = vpack.c.b16 %v2475, %v2473
        %v3912 = vpack.c.b16 %v2476, %v2474
        %v3913 = vpack.c.b16 %v2479, %v2477
        %v3914 = vpack.c.b16 %v2480, %v2478
        %v3915 = vpack.c.b16 %v2483, %v2481
        %v3916 = vpack.c.b16 %v2484, %v2482
        %v3917 = vpack.c.b16 %v2487, %v2485
        %v3918 = vpack.c.b16 %v2488, %v2486
        %v3919 = vpack.c.b16 %v2491, %v2489
        %v3920 = vpack.c.b16 %v2492, %v2490
        %v3921 = vpack.c.b16 %v2495, %v2493
        %v3922 = vpack.c.b16 %v2496, %v2494
        %v3923 = vpack.c.b16 %v2499, %v2497
        %v3924 = vpack.c.b16 %v2500, %v2498
        %v3925 = vpack.c.b16 %v2503, %v2501
        %v3926 = vpack.c.b16 %v2504, %v2502
        %v3927 = vpack.c.b16 %v2507, %v2505
        %v3928 = vpack.c.b16 %v2508, %v2506
        %v3929 = vpack.c.b16 %v2511, %v2509
        %v3930 = vpack.c.b16 %v2512, %v2510
        %v3931 = vpack.c.b16 %v2515, %v2513
        %v3932 = vpack.c.b16 %v2516, %v2514
        %v3933 = vpack.c.b16 %v2519, %v2517
        %v3934 = vpack.c.b16 %v2520, %v2518
        %v3935 = vpack.c.b16 %v2523, %v2521
        %v3936 = vpack.c.b16 %v2524, %v2522
        %v3937 = vpack.c.b16 %v2527, %v2525
        %v3938 = vpack.c.b16 %v2528, %v2526
        %v3939 = vpack.c.b16 %v2531, %v2529
        %v3940 = vpack.c.b16 %v2532, %v2530
        %v3941 = vpack.c.b16 %v2535, %v2533
        %v3942 = vpack.c.b16 %v2536, %v2534
        %v3943 = vpack.c.b16 %v2539, %v2537
        %v3944 = vpack.c.b16 %v2540, %v2538
        %v3945 = vpack.c.b16 %v2543, %v2541
        %v3946 = vpack.c.b16 %v2544, %v2542
        %v3947 = vpack.c.b16 %v2547, %v2545
        %v3948 = vpack.c.b16 %v2548, %v2546
        %v3949 = vpack.c.b16 %v2551, %v2549
        %v3950 = vpack.c.b16 %v2552, %v2550
        %v3951 = vpack.c.b16 %v2555, %v2553
        %v3952 = vpack.c.b16 %v2556, %v2554
        %v3953 = vpack.c.b16 %v2559, %v2557
        %v3954 = vpack.c.b16 %v2560, %v2558
        %v3955 = vpack.c.b16 %v2563, %v2561
        %v3956 = vpack.c.b16 %v2564, %v2562
        %v3957 = vpack.c.b16 %v2567, %v2565
        %v3958 = vpack.c.b16 %v2568, %v2566
        %v3959 = vpack.c.b16 %v2571, %v2569
        %v3960 = vpack.c.b16 %v2572, %v2570
        %v3961 = vpack.c.b16 %v2575, %v2573
        %v3962 = vpack.c.b16 %v2576, %v2574
        %v3963 = vpack.c.b16 %v2579, %v2577
        %v3964 = vpack.c.b16 %v2580, %v2578
        %v3965 = vpack.c.b16 %v2583, %v2581
        %v3966 = vpack.c.b16 %v2584, %v2582
        %v3967 = vpack.c.b16 %v2587, %v2585
        %v3968 = vpack.c.b16 %v2588, %v2586
        %v3969 = vpack.c.b16 %v2591, %v2589
        %v3970 = vpack.c.b16 %v2592, %v2590
        %v3971 = vpack.c.b16 %v2595, %v2593
        %v3972 = vpack.c.b16 %v2596, %v2594
        %v3973 = vpack.c.b16 %v2599, %v2597
        %v3974 = vpack.c.b16 %v2600, %v2598
        %v3975 = vpack.c.b16 %v2603, %v2601
        %v3976 = vpack.c.b16 %v2604, %v2602
        %v3977 = vpack.c.b16 %v2607, %v2605
        %v3978 = vpack.c.b16 %v2608, %v2606
        %v3979 = vpack.c.b16 %v2611, %v2609
        %v3980 = vpack.c.b16 %v2612, %v2610
        %v3981 = vpack.c.b16 %v2615, %v2613
        %v3982 = vpack.c.b16 %v2616, %v2614
        %v3983 = vpack.c.b16 %v2619, %v2617
        %v3984 = vpack.c.b16 %v2620, %v2618
        %v3985 = vpack.c.b16 %v2623, %v2621
        %v3986 = vpack.c.b16 %v2624, %v2622
        %v3987 = vpack.c.b16 %v2627, %v2625
        %v3988 = vpack.c.b16 %v2628, %v2626
        %v3989 = vpack.c.b16 %v2631, %v2629
        %v3990 = vpack.c.b16 %v2632, %v2630
        %v3991 = vpack.c.b16 %v2635, %v2633
        %v3992 = vpack.c.b16 %v2636, %v2634
        %v3993 = vpack.c.b16 %v2639, %v2637
        %v3994 = vpack.c.b16 %v2640, %v2638
        %v3995 = vpack.c.b16 %v2643, %v2641
        %v3996 = vpack.c.b16 %v2644, %v2642
        %v3997 = vpack.c.b16 %v2647, %v2645
        %v3998 = vpack.c.b16 %v2648, %v2646
        %v3999 = vpack.c.b16 %v2651, %v2649
        %v4000 = vpack.c.b16 %v2652, %v2650
        %v4001 = vpack.c.b16 %v2655, %v2653
        %v4002 = vpack.c.b16 %v2656, %v2654
        %v4003 = vpack.c.b16 %v2659, %v2657
        %v4004 = vpack.c.b16 %v2660, %v2658
        %v4005 = vpack.c.b16 %v2663, %v2661
        %v4006 = vpack.c.b16 %v2664, %v2662
        %v4007 = vpack.c.b16 %v2667, %v2665
        %v4008 = vpack.c.b16 %v2668, %v2666
        %v4009 = vpack.c.b16 %v2671, %v2669
        %v4010 = vpack.c.b16 %v2672, %v2670
        %v4011 = vpack.c.b16 %v2675, %v2673
        %v4012 = vpack.c.b16 %v2676, %v2674
        %v4013 = vpack.c.b16 %v2679, %v2677
        %v4014 = vpack.c.b16 %v2680, %v2678
        %v4015 = vpack.c.b16 %v2683, %v2681
        %v4016 = vpack.c.b16 %v2684, %v2682
        %v4017 = vpack.c.b16 %v2687, %v2685
        %v4018 = vpack.c.b16 %v2688, %v2686
        %v4019 = vpack.c.b16 %v2691, %v2689
        %v4020 = vpack.c.b16 %v2692, %v2690
        %v4021 = vpack.c.b16 %v2695, %v2693
        %v4022 = vpack.c.b16 %v2696, %v2694
        %v4023 = vpack.c.b16 %v2699, %v2697
        %v4024 = vpack.c.b16 %v2700, %v2698
        %v4025 = vpack.c.b16 %v2703, %v2701
        %v4026 = vpack.c.b16 %v2704, %v2702
        %v4027 = vpack.c.b16 %v2707, %v2705
        %v4028 = vpack.c.b16 %v2708, %v2706
        %v4029 = vpack.c.b16 %v2711, %v2709
        %v4030 = vpack.c.b16 %v2712, %v2710
        %v4031 = vpack.c.b16 %v2715, %v2713
        %v4032 = vpack.c.b16 %v2716, %v2714
        %v4033 = vpack.c.b16 %v2719, %v2717
        %v4034 = vpack.c.b16 %v2720, %v2718
        %v4035 = vpack.c.b16 %v2723, %v2721
        %v4036 = vpack.c.b16 %v2724, %v2722
        %v4037 = vpack.c.b16 %v2727, %v2725
        %v4038 = vpack.c.b16 %v2728, %v2726
        %v4039 = vpack.c.b16 %v2731, %v2729
        %v4040 = vpack.c.b16 %v2732, %v2730
        %v4041 = vpack.c.b16 %v2735, %v2733
        %v4042 = vpack.c.b16 %v2736, %v2734
        %v4043 = vpack.c.b16 %v2739, %v2737
        %v4044 = vpack.c.b16 %v2740, %v2738
        %v4045 = vpack.c.b16 %v2743, %v2741
        %v4046 = vpack.c.b16 %v2744, %v2742
        %v4047 = vpack.c.b16 %v2747, %v2745
        %v4048 = vpack.c.b16 %v2748, %v2746
        %v4049 = vpack.c.b16 %v2751, %v2749
        %v4050 = vpack.c.b16 %v2752, %v2750
        %v4051 = vpack.c.b16 %v2755, %v2753
        %v4052 = vpack.c.b16 %v2756, %v2754
        %v4053 = vpack.c.b16 %v2759, %v2757
        %v4054 = vpack.c.b16 %v2760, %v2758
        %v4055 = vpack.c.b16 %v2763, %v2761
        %v4056 = vpack.c.b16 %v2764, %v2762
        %v4057 = vpack.c.b16 %v2767, %v2765
        %v4058 = vpack.c.b16 %v2768, %v2766
        %v4059 = vpack.c.b16 %v2771, %v2769
        %v4060 = vpack.c.b16 %v2772, %v2770
        %v4061 = vpack.c.b16 %v2775, %v2773
        %v4062 = vpack.c.b16 %v2776, %v2774
        %v4063 = vpack.c.b16 %v2779, %v2777
        %v4064 = vpack.c.b16 %v2780, %v2778
        %v4065 = vpack.c.b16 %v2783, %v2781
        %v4066 = vpack.c.b16 %v2784, %v2782
        %v4067 = vpack.c.b16 %v2787, %v2785
        %v4068 = vpack.c.b16 %v2788, %v2786
        %v4069 = vpack.c.b16 %v2791, %v2789
        %v4070 = vpack.c.b16 %v2792, %v2790
        %v4071 = vpack.c.b16 %v2795, %v2793
        %v4072 = vpack.c.b16 %v2796, %v2794
        %v4073 = vpack.c.b16 %v2799, %v2797
        %v4074 = vpack.c.b16 %v2800, %v2798
        %v4075 = vpack.c.b16 %v2803, %v2801
        %v4076 = vpack.c.b16 %v2804, %v2802
        %v4077 = vpack.c.b16 %v2807, %v2805
        %v4078 = vpack.c.b16 %v2808, %v2806
        %v4079 = vpack.c.b16 %v2811, %v2809
        %v4080 = vpack.c.b16 %v2812, %v2810
        %v4081 = vpack.c.b16 %v2815, %v2813
        %v4082 = vpack.c.b16 %v2816, %v2814
        %v4083 = vpack.c.b16 %v2819, %v2817
        %v4084 = vpack.c.b16 %v2820, %v2818
        %v4085 = vpack.c.b16 %v2823, %v2821
        %v4086 = vpack.c.b16 %v2824, %v2822
        %v4087 = vpack.c.b16 %v2827, %v2825
        %v4088 = vpack.c.b16 %v2828, %v2826
        %v4089 = vpack.c.b16 %v2831, %v2829
        %v4090 = vpack.c.b16 %v2832, %v2830
        %v4091 = vpack.c.b16 %v2835, %v2833
        %v4092 = vpack.c.b16 %v2836, %v2834
        %v4093 = vpack.c.b16 %v2839, %v2837
        %v4094 = vpack.c.b16 %v2840, %v2838
        %v4095 = vpack.c.b16 %v2843, %v2841
        %v4096 = vpack.c.b16 %v2844, %v2842
        %v4097 = vpack.c.b16 %v2847, %v2845
        %v4098 = vpack.c.b16 %v2848, %v2846
        %v4099 = vpack.c.b16 %v2851, %v2849
        %v4100 = vpack.c.b16 %v2852, %v2850
        %v4101 = vpack.c.b16 %v2855, %v2853
        %v4102 = vpack.c.b16 %v2856, %v2854
        %v4103 = vpack.c.b16 %v2859, %v2857
        %v4104 = vpack.c.b16 %v2860, %v2858
        %v4105 = vpack.c.b16 %v2863, %v2861
        %v4106 = vpack.c.b16 %v2864, %v2862
        %v4107 = vpack.c.b16 %v2867, %v2865
        %v4108 = vpack.c.b16 %v2868, %v2866
        %v4109 = vpack.c.b16 %v2871, %v2869
        %v4110 = vpack.c.b16 %v2872, %v2870
        %v4111 = vpack.c.b16 %v2875, %v2873
        %v4112 = vpack.c.b16 %v2876, %v2874
        %v4113 = vpack.c.b16 %v2879, %v2877
        %v4114 = vpack.c.b16 %v2880, %v2878
        %v4115 = vpack.c.b16 %v2883, %v2881
        %v4116 = vpack.c.b16 %v2884, %v2882
        %v4117 = vpack.c.b16 %v2887, %v2885
        %v4118 = vpack.c.b16 %v2888, %v2886
        %v4119 = vpack.c.b16 %v2891, %v2889
        %v4120 = vpack.c.b16 %v2892, %v2890
        %v4121 = vpack.c.b16 %v2895, %v2893
        %v4122 = vpack.c.b16 %v2896, %v2894
        %v4123 = vpack.c.b16 %v2899, %v2897
        %v4124 = vpack.c.b16 %v2900, %v2898
        %v4125 = vpack.c.b16 %v2903, %v2901
        %v4126 = vpack.c.b16 %v2904, %v2902
        %v4127 = vpack.c.b16 %v2907, %v2905
        %v4128 = vpack.c.b16 %v2908, %v2906
        %v4129 = vpack.c.b16 %v2911, %v2909
        %v4130 = vpack.c.b16 %v2912, %v2910
        %v4131 = vpack.c.b16 %v2915, %v2913
        %v4132 = vpack.c.b16 %v2916, %v2914
        %v4133 = vpack.c.b16 %v2919, %v2917
        %v4134 = vpack.c.b16 %v2920, %v2918
        %v4135 = vpack.c.b16 %v2923, %v2921
        %v4136 = vpack.c.b16 %v2924, %v2922
        %v4137 = vpack.c.b16 %v2927, %v2925
        %v4138 = vpack.c.b16 %v2928, %v2926
        %v4139 = vpack.c.b16 %v2931, %v2929
        %v4140 = vpack.c.b16 %v2932, %v2930
        %v4141 = vpack.c.b16 %v2935, %v2933
        %v4142 = vpack.c.b16 %v2936, %v2934
        %v4143 = vpack.c.b16 %v2939, %v2937
        %v4144 = vpack.c.b16 %v2940, %v2938
        %v4145 = vpack.c.b16 %v2943, %v2941
        %v4146 = vpack.c.b16 %v2944, %v2942
        %v4147 = vpack.c.b16 %v2947, %v2945
        %v4148 = vpack.c.b16 %v2948, %v2946
        %v4149 = vpack.c.b16 %v2951, %v2949
        %v4150 = vpack.c.b16 %v2952, %v2950
        %v4151 = vpack.c.b16 %v2955, %v2953
        %v4152 = vpack.c.b16 %v2956, %v2954
        %v4153 = vpack.c.b16 %v2959, %v2957
        %v4154 = vpack.c.b16 %v2960, %v2958
        %v4155 = vpack.c.b16 %v2963, %v2961
        %v4156 = vpack.c.b16 %v2964, %v2962
        %v4157 = vpack.c.b16 %v2967, %v2965
        %v4158 = vpack.c.b16 %v2968, %v2966
        %v4159 = vpack.c.b16 %v2971, %v2969
        %v4160 = vpack.c.b16 %v2972, %v2970
        %v4161 = vpack.c.b16 %v2975, %v2973
        %v4162 = vpack.c.b16 %v2976, %v2974
        %v4163 = vpack.c.b16 %v2979, %v2977
        %v4164 = vpack.c.b16 %v2980, %v2978
        %v4165 = vpack.c.b16 %v2983, %v2981
        %v4166 = vpack.c.b16 %v2984, %v2982
        %v4167 = vpack.c.b16 %v2987, %v2985
        %v4168 = vpack.c.b16 %v2988, %v2986
        %v4169 = vpack.c.b16 %v2991, %v2989
        %v4170 = vpack.c.b16 %v2992, %v2990
        %v4171 = vpack.c.b16 %v2995, %v2993
        %v4172 = vpack.c.b16 %v2996, %v2994
        %v4173 = vpack.c.b16 %v2999, %v2997
        %v4174 = vpack.c.b16 %v3000, %v2998
        %v4175 = vpack.c.b16 %v3003, %v3001
        %v4176 = vpack.c.b16 %v3004, %v3002
        %v4177 = vpack.c.b16 %v3007, %v3005
        %v4178 = vpack.c.b16 %v3008, %v3006
        %v4179 = vpack.c.b16 %v3011, %v3009
        %v4180 = vpack.c.b16 %v3012, %v3010
        %v4181 = vpack.c.b16 %v3015, %v3013
        %v4182 = vpack.c.b16 %v3016, %v3014
        %v4183 = vpack.c.b16 %v3019, %v3017
        %v4184 = vpack.c.b16 %v3020, %v3018
        %v4185 = vpack.c.b16 %v3023, %v3021
        %v4186 = vpack.c.b16 %v3024, %v3022
        %v4187 = vpack.c.b16 %v3027, %v3025
        %v4188 = vpack.c.b16 %v3028, %v3026
        %v4189 = vpack.c.b16 %v3031, %v3029
        %v4190 = vpack.c.b16 %v3032, %v3030
        %v4191 = vpack.c.b16 %v3035, %v3033
        %v4192 = vpack.c.b16 %v3036, %v3034
        %v4193 = vpack.c.b16 %v3039, %v3037
        %v4194 = vpack.c.b16 %v3040, %v3038
        %v4195 = vpack.c.b16 %v3043, %v3041
        %v4196 = vpack.c.b16 %v3044, %v3042
        %v4197 = vpack.c.b16 %v3047, %v3045
        %v4198 = vpack.c.b16 %v3048, %v3046
        %v4199 = vpack.c.b16 %v3051, %v3049
        %v4200 = vpack.c.b16 %v3052, %v3050
        %v4201 = vpack.c.b16 %v3055, %v3053
        %v4202 = vpack.c.b16 %v3056, %v3054
        %v4203 = vpack.c.b16 %v3059, %v3057
        %v4204 = vpack.c.b16 %v3060, %v3058
        %v4205 = vpack.c.b16 %v3063, %v3061
        %v4206 = vpack.c.b16 %v3064, %v3062
        %v4207 = vpack.c.b16 %v3067, %v3065
        %v4208 = vpack.c.b16 %v3068, %v3066
        %v4209 = vpack.c.b16 %v3071, %v3069
        %v4210 = vpack.c.b16 %v3072, %v3070
        %v4211 = vpack.c.b16 %v3075, %v3073
        %v4212 = vpack.c.b16 %v3076, %v3074
        %v4213 = vpack.c.b16 %v3079, %v3077
        %v4214 = vpack.c.b16 %v3080, %v3078
        %v4215 = vpack.c.b16 %v3083, %v3081
        %v4216 = vpack.c.b16 %v3084, %v3082
        %v4217 = vpack.c.b16 %v3087, %v3085
        %v4218 = vpack.c.b16 %v3088, %v3086
        %v4219 = vpack.c.b16 %v3091, %v3089
        %v4220 = vpack.c.b16 %v3092, %v3090
        %v4221 = vpack.c.b16 %v3095, %v3093
        %v4222 = vpack.c.b16 %v3096, %v3094
        %v4223 = vpack.c.b16 %v3099, %v3097
        %v4224 = vpack.c.b16 %v3100, %v3098
        %v4225 = vpack.c.b16 %v3103, %v3101
        %v4226 = vpack.c.b16 %v3104, %v3102
        %v4227 = vpack.c.b16 %v3107, %v3105
        %v4228 = vpack.c.b16 %v3108, %v3106
        %v4229 = vpack.c.b16 %v3111, %v3109
        %v4230 = vpack.c.b16 %v3112, %v3110
        %v4231 = vpack.c.b16 %v3115, %v3113
        %v4232 = vpack.c.b16 %v3116, %v3114
        %v4233 = vpack.c.b16 %v3119, %v3117
        %v4234 = vpack.c.b16 %v3120, %v3118
        %v4235 = vpack.c.b16 %v3123, %v3121
        %v4236 = vpack.c.b16 %v3124, %v3122
        %v4237 = vpack.c.b16 %v3127, %v3125
        %v4238 = vpack.c.b16 %v3128, %v3126
        %v4239 = vpack.c.b16 %v3131, %v3129
        %v4240 = vpack.c.b16 %v3132, %v3130
        %v4241 = vpack.c.b16 %v3135, %v3133
        %v4242 = vpack.c.b16 %v3136, %v3134
        %v4243 = vpack.c.b16 %v3139, %v3137
        %v4244 = vpack.c.b16 %v3140, %v3138
        %v4245 = vpack.c.b16 %v3143, %v3141
        %v4246 = vpack.c.b16 %v3144, %v3142
        %v4247 = vpack.c.b16 %v3147, %v3145
        %v4248 = vpack.c.b16 %v3148, %v3146
        %v4249 = vpack.c.b16 %v3151, %v3149
        %v4250 = vpack.c.b16 %v3152, %v3150
        %v4251 = vpack.c.b16 %v3155, %v3153
        %v4252 = vpack.c.b16 %v3156, %v3154
        %v4253 = vpack.c.b16 %v3159, %v3157
        %v4254 = vpack.c.b16 %v3160, %v3158
        %v4255 = vpack.c.b16 %v3163, %v3161
        %v4256 = vpack.c.b16 %v3164, %v3162
        %v4257 = vpack.c.b16 %v3167, %v3165
        %v4258 = vpack.c.b16 %v3168, %v3166
        %v4259 = vpack.c.b16 %v3171, %v3169
        %v4260 = vpack.c.b16 %v3172, %v3170
        %v4261 = vpack.c.b16 %v3175, %v3173
        %v4262 = vpack.c.b16 %v3176, %v3174
        %v4263 = vpack.c.b16 %v3179, %v3177
        %v4264 = vpack.c.b16 %v3180, %v3178
        %v4265 = vpack.c.b16 %v3183, %v3181
        %v4266 = vpack.c.b16 %v3184, %v3182
        %v4267 = vpack.c.b16 %v3187, %v3185
        %v4268 = vpack.c.b16 %v3188, %v3186
        %v4269 = vpack.c.b16 %v3191, %v3189
        %v4270 = vpack.c.b16 %v3192, %v3190
        %v4271 = vpack.c.b16 %v3195, %v3193
        %v4272 = vpack.c.b16 %v3196, %v3194
        %v4273 = vpack.c.b16 %v3199, %v3197
        %v4274 = vpack.c.b16 %v3200, %v3198
        %v4275 = vpack.c.b16 %v3203, %v3201
        %v4276 = vpack.c.b16 %v3204, %v3202
        %v4277 = vpack.c.b16 %v3207, %v3205
        %v4278 = vpack.c.b16 %v3208, %v3206
        %v4279 = vpack.c.b16 %v3211, %v3209
        %v4280 = vpack.c.b16 %v3212, %v3210
        %v4281 = vpack.c.b16 %v3215, %v3213
        %v4282 = vpack.c.b16 %v3216, %v3214
        %v4283 = vpack.c.b16 %v3219, %v3217
        %v4284 = vpack.c.b16 %v3220, %v3218
        %v4285 = vpack.c.b16 %v3223, %v3221
        %v4286 = vpack.c.b16 %v3224, %v3222
        %v4287 = vpack.c.b16 %v3227, %v3225
        %v4288 = vpack.c.b16 %v3228, %v3226
        %v4289 = vpack.c.b16 %v3231, %v3229
        %v4290 = vpack.c.b16 %v3232, %v3230
        %v4291 = vpack.c.b16 %v3235, %v3233
        %v4292 = vpack.c.b16 %v3236, %v3234
        %v4293 = vpack.c.b16 %v3239, %v3237
        %v4294 = vpack.c.b16 %v3240, %v3238
        %v4295 = vpack.c.b16 %v3243, %v3241
        %v4296 = vpack.c.b16 %v3244, %v3242
        %v4297 = vpack.c.b16 %v3247, %v3245
        %v4298 = vpack.c.b16 %v3248, %v3246
        %v4299 = vpack.c.b16 %v3251, %v3249
        %v4300 = vpack.c.b16 %v3252, %v3250
        %v4301 = vpack.c.b16 %v3255, %v3253
        %v4302 = vpack.c.b16 %v3256, %v3254
        %v4303 = vpack.c.b16 %v3259, %v3257
        %v4304 = vpack.c.b16 %v3260, %v3258
        %v4305 = vpack.c.b16 %v3263, %v3261
        %v4306 = vpack.c.b16 %v3264, %v3262
        %v4307 = vpack.c.b16 %v3267, %v3265
        %v4308 = vpack.c.b16 %v3268, %v3266
        %v4309 = vpack.c.b16 %v3271, %v3269
        %v4310 = vpack.c.b16 %v3272, %v3270
        %v4311 = vpack.c.b16 %v3275, %v3273
        %v4312 = vpack.c.b16 %v3276, %v3274
        %v4313 = vpack.c.b16 %v3279, %v3277
        %v4314 = vpack.c.b16 %v3280, %v3278
        %v4315 = vpack.c.b16 %v3283, %v3281
        %v4316 = vpack.c.b16 %v3284, %v3282
        %v4317 = vpack.c.b16 %v3287, %v3285
        %v4318 = vpack.c.b16 %v3288, %v3286
        %v4319 = vpack.c.b16 %v3291, %v3289
        %v4320 = vpack.c.b16 %v3292, %v3290
        %v4321 = vpack.c.b16 %v3295, %v3293
        %v4322 = vpack.c.b16 %v3296, %v3294
        %v4323 = vpack.c.b16 %v3299, %v3297
        %v4324 = vpack.c.b16 %v3300, %v3298
        %v4325 = vpack.c.b16 %v3303, %v3301
        %v4326 = vpack.c.b16 %v3304, %v3302
        %v4327 = vpack.c.b16 %v3307, %v3305
        %v4328 = vpack.c.b16 %v3308, %v3306
        %v4329 = vpack.c.b16 %v3311, %v3309
        %v4330 = vpack.c.b16 %v3312, %v3310
        %v4331 = vpack.c.b16 %v3315, %v3313
        %v4332 = vpack.c.b16 %v3316, %v3314
        %v4333 = vpack.c.b16 %v3319, %v3317
        %v4334 = vpack.c.b16 %v3320, %v3318
        %v4335 = vpack.c.b16 %v3323, %v3321
        %v4336 = vpack.c.b16 %v3324, %v3322
        %v4337 = vpack.c.b16 %v3327, %v3325
        %v4338 = vpack.c.b16 %v3328, %v3326
        %v4339 = vpack.c.b16 %v3331, %v3329
        %v4340 = vpack.c.b16 %v3332, %v3330
        %v4341 = vpack.c.b16 %v3335, %v3333
        %v4342 = vpack.c.b16 %v3336, %v3334
        %v4343 = vpack.c.b16 %v3339, %v3337
        %v4344 = vpack.c.b16 %v3340, %v3338
        %v4345 = vpack.c.b16 %v3343, %v3341
        %v4346 = vpack.c.b16 %v3344, %v3342
        %v4347 = vpack.c.b16 %v3347, %v3345
        %v4348 = vpack.c.b16 %v3348, %v3346
        %v4349 = vpack.c.b16 %v3351, %v3349
        %v4350 = vpack.c.b16 %v3352, %v3350
        %v4351 = vpack.c.b16 %v3355, %v3353
        %v4352 = vpack.c.b16 %v3356, %v3354
        %v4353 = vpack.c.b16 %v3359, %v3357
        %v4354 = vpack.c.b16 %v3360, %v3358
        %v4355 = vpack.c.b16 %v3363, %v3361
        %v4356 = vpack.c.b16 %v3364, %v3362
        %v4357 = vpack.c.b16 %v3367, %v3365
        %v4358 = vpack.c.b16 %v3368, %v3366
        %v4359 = vpack.c.b16 %v3371, %v3369
        %v4360 = vpack.c.b16 %v3372, %v3370
        %v4361 = vpack.c.b16 %v3375, %v3373
        %v4362 = vpack.c.b16 %v3376, %v3374
        %v4363 = vpack.c.b16 %v3379, %v3377
        %v4364 = vpack.c.b16 %v3380, %v3378
        %v4365 = vpack.c.b16 %v3383, %v3381
        %v4366 = vpack.c.b16 %v3384, %v3382
        %v4367 = vpack.c.b16 %v3387, %v3385
        %v4368 = vpack.c.b16 %v3388, %v3386
        %v4369 = vpack.c.b16 %v3391, %v3389
        %v4370 = vpack.c.b16 %v3392, %v3390
        %v4371 = vpack.c.b16 %v3395, %v3393
        %v4372 = vpack.c.b16 %v3396, %v3394
        %v4373 = vpack.c.b16 %v3399, %v3397
        %v4374 = vpack.c.b16 %v3400, %v3398
        %v4375 = vpack.c.b16 %v3403, %v3401
        %v4376 = vpack.c.b16 %v3404, %v3402
        %v4377 = vpack.c.b16 %v3407, %v3405
        %v4378 = vpack.c.b16 %v3408, %v3406
        %v4379 = vpack.c.b16 %v3411, %v3409
        %v4380 = vpack.c.b16 %v3412, %v3410
        %v4381 = vpack.c.b16 %v3415, %v3413
        %v4382 = vpack.c.b16 %v3416, %v3414
        %v4383 = vpack.c.b16 %v3419, %v3417
        %v4384 = vpack.c.b16 %v3420, %v3418
        %v4385 = vpack.c.b16 %v3423, %v3421
        %v4386 = vpack.c.b16 %v3424, %v3422
        %v4387 = vpack.c.b16 %v3427, %v3425
        %v4388 = vpack.c.b16 %v3428, %v3426
        %v4389 = vpack.c.b16 %v3431, %v3429
        %v4390 = vpack.c.b16 %v3432, %v3430
        %v4391 = vpack.c.b16 %v3435, %v3433
        %v4392 = vpack.c.b16 %v3436, %v3434
        %v4393 = vpack.c.b16 %v3439, %v3437
        %v4394 = vpack.c.b16 %v3440, %v3438
        %v4395 = vpack.c.b16 %v3443, %v3441
        %v4396 = vpack.c.b16 %v3444, %v3442
        %v4397 = vpack.c.b16 %v3447, %v3445
        %v4398 = vpack.c.b16 %v3448, %v3446
        %v4399 = vpack.c.b16 %v3451, %v3449
        %v4400 = vpack.c.b16 %v3452, %v3450
        %v4401 = vpack.c.b16 %v3455, %v3453
        %v4402 = vpack.c.b16 %v3456, %v3454
        %v4403 = vpack.c.b16 %v3459, %v3457
        %v4404 = vpack.c.b16 %v3460, %v3458
        %v4405 = vpack.c.b16 %v3463, %v3461
        %v4406 = vpack.c.b16 %v3464, %v3462
        %v4407 = vpack.c.b16 %v3467, %v3465
        %v4408 = vpack.c.b16 %v3468, %v3466
        %v4409 = vpack.c.b16 %v3471, %v3469
        %v4410 = vpack.c.b16 %v3472, %v3470
        %v4411 = vpack.c.b16 %v3475, %v3473
        %v4412 = vpack.c.b16 %v3476, %v3474
        %v4413 = vpack.c.b16 %v3479, %v3477
        %v4414 = vpack.c.b16 %v3480, %v3478
        %v4415 = vpack.c.b16 %v3483, %v3481
        %v4416 = vpack.c.b16 %v3484, %v3482
        %v4417 = vpack.c.b16 %v3487, %v3485
        %v4418 = vpack.c.b16 %v3488, %v3486
        %v4419 = vpack.c.b16 %v3491, %v3489
        %v4420 = vpack.c.b16 %v3492, %v3490
        %v4421 = vpack.c.b16 %v3495, %v3493
        %v4422 = vpack.c.b16 %v3496, %v3494
        %v4423 = vpack.c.b16 %v3499, %v3497
        %v4424 = vpack.c.b16 %v3500, %v3498
        %v4425 = vpack.c.b16 %v3503, %v3501
        %v4426 = vpack.c.b16 %v3504, %v3502
        %v4427 = vpack.c.b16 %v3507, %v3505
        %v4428 = vpack.c.b16 %v3508, %v3506
        %v4429 = vpack.c.b16 %v3511, %v3509
        %v4430 = vpack.c.b16 %v3512, %v3510
        %v4431 = vpack.c.b16 %v3515, %v3513
        %v4432 = vpack.c.b16 %v3516, %v3514
        %v4433 = vpack.c.b16 %v3519, %v3517
        %v4434 = vpack.c.b16 %v3520, %v3518
        %v4435 = vpack.c.b16 %v3523, %v3521
        %v4436 = vpack.c.b16 %v3524, %v3522
        %v4437 = vpack.c.b16 %v3527, %v3525
        %v4438 = vpack.c.b16 %v3528, %v3526
        %v4439 = vpack.c.b16 %v3531, %v3529
        %v4440 = vpack.c.b16 %v3532, %v3530
        %v4441 = vpack.c.b16 %v3535, %v3533
        %v4442 = vpack.c.b16 %v3536, %v3534
        %v4443 = vpack.c.b16 %v3539, %v3537
        %v4444 = vpack.c.b16 %v3540, %v3538
        %v4445 = vpack.c.b16 %v3543, %v3541
        %v4446 = vpack.c.b16 %v3544, %v3542
        %v4447 = vpack.c.b16 %v3547, %v3545
        %v4448 = vpack.c.b16 %v3548, %v3546
        %v4449 = vpack.c.b16 %v3551, %v3549
        %v4450 = vpack.c.b16 %v3552, %v3550
        %v4451 = vpack.c.b16 %v3555, %v3553
        %v4452 = vpack.c.b16 %v3556, %v3554
        %v4453 = vpack.c.b16 %v3559, %v3557
        %v4454 = vpack.c.b16 %v3560, %v3558
        %v4455 = vpack.c.b16 %v3563, %v3561
        %v4456 = vpack.c.b16 %v3564, %v3562
        %v4457 = vpack.c.b16 %v3567, %v3565
        %v4458 = vpack.c.b16 %v3568, %v3566
        %v4459 = vpack.c.b16 %v3571, %v3569
        %v4460 = vpack.c.b16 %v3572, %v3570
        %v4461 = vpack.c.b16 %v3575, %v3573
        %v4462 = vpack.c.b16 %v3576, %v3574
        %v4463 = vpack.c.b16 %v3579, %v3577
        %v4464 = vpack.c.b16 %v3580, %v3578
        %v4465 = vpack.c.b16 %v3583, %v3581
        %v4466 = vpack.c.b16 %v3584, %v3582
        %v4467 = vpack.c.b16 %v3587, %v3585
        %v4468 = vpack.c.b16 %v3588, %v3586
        %v4469 = vpack.c.b16 %v3591, %v3589
        %v4470 = vpack.c.b16 %v3592, %v3590
        %v4471 = vpack.c.b16 %v3595, %v3593
        %v4472 = vpack.c.b16 %v3596, %v3594
        %v4473 = vpack.c.b16 %v3599, %v3597
        %v4474 = vpack.c.b16 %v3600, %v3598
        %v4475 = vpack.c.b16 %v3603, %v3601
        %v4476 = vpack.c.b16 %v3604, %v3602
        %v4477 = vpack.c.b16 %v3607, %v3605
        %v4478 = vpack.c.b16 %v3608, %v3606
        %v4479 = vpack.c.b16 %v3611, %v3609
        %v4480 = vpack.c.b16 %v3612, %v3610
        %v4481 = vpack.c.b16 %v3615, %v3613
        %v4482 = vpack.c.b16 %v3616, %v3614
        %v4483 = vpack.c.b16 %v3619, %v3617
        %v4484 = vpack.c.b16 %v3620, %v3618
        %v4485 = vpack.c.b16 %v3623, %v3621
        %v4486 = vpack.c.b16 %v3624, %v3622
        %v4487 = vpack.c.b16 %v3627, %v3625
        %v4488 = vpack.c.b16 %v3628, %v3626
        %v4489 = vpack.c.b16 %v3631, %v3629
        %v4490 = vpack.c.b16 %v3632, %v3630
        %v4491 = vpack.c.b16 %v3635, %v3633
        %v4492 = vpack.c.b16 %v3636, %v3634
        %v4493 = vpack.c.b16 %v3639, %v3637
        %v4494 = vpack.c.b16 %v3640, %v3638
        %v4495 = vpack.c.b16 %v3643, %v3641
        %v4496 = vpack.c.b16 %v3644, %v3642
        %v4497 = vpack.c.b16 %v3647, %v3645
        %v4498 = vpack.c.b16 %v3648, %v3646
        %v4499 = vpack.c.b16 %v3651, %v3649
        %v4500 = vpack.c.b16 %v3652, %v3650
        %v4501 = vpack.c.b16 %v3655, %v3653
        %v4502 = vpack.c.b16 %v3656, %v3654
        %v4503 = vpack.c.b16 %v3659, %v3657
        %v4504 = vpack.c.b16 %v3660, %v3658
        %v4505 = vpack.c.b16 %v3663, %v3661
        %v4506 = vpack.c.b16 %v3664, %v3662
        %v4507 = vpack.c.b16 %v3667, %v3665
        %v4508 = vpack.c.b16 %v3668, %v3666
        %v4509 = vpack.c.b16 %v3671, %v3669
        %v4510 = vpack.c.b16 %v3672, %v3670
        %v4511 = vpack.c.b16 %v3675, %v3673
        %v4512 = vpack.c.b16 %v3676, %v3674
        %v4513 = vpack.c.b16 %v3679, %v3677
        %v4514 = vpack.c.b16 %v3680, %v3678
        %v4515 = vpack.c.b16 %v3683, %v3681
        %v4516 = vpack.c.b16 %v3684, %v3682
        %v4517 = vpack.c.b16 %v3687, %v3685
        %v4518 = vpack.c.b16 %v3688, %v3686
        %v4519 = vpack.c.b16 %v3691, %v3689
        %v4520 = vpack.c.b16 %v3692, %v3690
        %v4521 = vpack.c.b16 %v3695, %v3693
        %v4522 = vpack.c.b16 %v3696, %v3694
        %v4523 = vpack.c.b16 %v3699, %v3697
        %v4524 = vpack.c.b16 %v3700, %v3698
        %v4525 = vpack.c.b16 %v3703, %v3701
        %v4526 = vpack.c.b16 %v3704, %v3702
        %v4527 = vpack.c.b16 %v3707, %v3705
        %v4528 = vpack.c.b16 %v3708, %v3706
        %v4529 = vpack.c.b16 %v3711, %v3709
        %v4530 = vpack.c.b16 %v3712, %v3710
        %v4531 = vpack.c.b16 %v3715, %v3713
        %v4532 = vpack.c.b16 %v3716, %v3714
        %v4533 = vpack.c.b16 %v3719, %v3717
        %v4534 = vpack.c.b16 %v3720, %v3718
        %v4535 = vpack.c.b16 %v3723, %v3721
        %v4536 = vpack.c.b16 %v3724, %v3722
        %v4537 = vpack.c.b16 %v3727, %v3725
        %v4538 = vpack.c.b16 %v3728, %v3726
        %v4539 = vpack.c.b16 %v3731, %v3729
        %v4540 = vpack.c.b16 %v3732, %v3730
        %v4541 = vpack.c.b16 %v3735, %v3733
        %v4542 = vpack.c.b16 %v3736, %v3734
        %v4543 = vpack.c.b16 %v3739, %v3737
        %v4544 = vpack.c.b16 %v3740, %v3738
        %v4545 = vpack.c.b16 %v3743, %v3741
        %v4546 = vpack.c.b16 %v3744, %v3742
        %v4547 = vpack.c.b16 %v3747, %v3745
        %v4548 = vpack.c.b16 %v3748, %v3746
        %v4549 = vpack.c.b16 %v3751, %v3749
        %v4550 = vpack.c.b16 %v3752, %v3750
        %v4551 = vpack.c.b16 %v3755, %v3753
        %v4552 = vpack.c.b16 %v3756, %v3754
        %v4553 = vpack.c.b16 %v3759, %v3757
        %v4554 = vpack.c.b16 %v3760, %v3758
        %v4555 = vpack.c.b16 %v3763, %v3761
        %v4556 = vpack.c.b16 %v3764, %v3762
        %v4557 = vpack.c.b16 %v3767, %v3765
        %v4558 = vpack.c.b16 %v3768, %v3766
        %v4559 = vpack.c.b16 %v3771, %v3769
        %v4560 = vpack.c.b16 %v3772, %v3770
        %v4561 = vpack.c.b16 %v3775, %v3773
        %v4562 = vpack.c.b16 %v3776, %v3774
        %v4563 = vpack.c.b16 %v3779, %v3777
        %v4564 = vpack.c.b16 %v3780, %v3778
        %5349 = vmatprep.subr.bf16.mxu0 %v3796
        %5350 = vmatpush1.bf16.msra.mxu0 %v3795
        %5351 = vmatprep.subr.bf16.mxu0 %v3794
        %5352 = vmatpush1.bf16.msra.mxu0 %v3793
        %5353 = vmatprep.subr.bf16.mxu0 %v3792
        %5354 = vmatpush1.bf16.msra.mxu0 %v3791
        %5355 = vmatprep.subr.bf16.mxu0 %v3790
        %5356 = vmatpush1.bf16.msra.mxu0 %v3789
        %5357 = vmatprep.subr.bf16.mxu0 %v3788
        %5358 = vmatpush1.bf16.msra.mxu0 %v3787
        %5359 = vmatprep.subr.bf16.mxu0 %v3786
        %5360 = vmatpush1.bf16.msra.mxu0 %v3785
        %5361 = vmatprep.subr.bf16.mxu0 %v3784
        %5362 = vmatpush1.bf16.msra.mxu0 %v3783
        %5363 = vmatprep.subr.bf16.mxu0 %v3782
        %5364 = vmatpush1.bf16.msra.mxu0 %v3781
        %5365 = vmatprep.subr.bf16.mxu0 %v3812
        %5366 = vmatpush2.bf16.msra.mxu0 %v3811
        %5367 = vmatprep.subr.bf16.mxu0 %v3810
        %5368 = vmatpush2.bf16.msra.mxu0 %v3809
        %5369 = vmatprep.subr.bf16.mxu0 %v3808
        %5370 = vmatpush2.bf16.msra.mxu0 %v3807
        %5371 = vmatprep.subr.bf16.mxu0 %v3806
        %5372 = vmatpush2.bf16.msra.mxu0 %v3805
        %5373 = vmatprep.subr.bf16.mxu0 %v3804
        %5374 = vmatpush2.bf16.msra.mxu0 %v3803
        %5375 = vmatprep.subr.bf16.mxu0 %v3802
        %5376 = vmatpush2.bf16.msra.mxu0 %v3801
        %5377 = vmatprep.subr.bf16.mxu0 %v3800
        %5378 = vmatpush2.bf16.msra.mxu0 %v3799
        %5379 = vmatprep.subr.bf16.mxu0 %v3798
        %5380 = vmatpush2.bf16.msra.mxu0 %v3797
        %5381 = vmatprep.mubr.bf16.mxu0 %v1109
        %5382 = vmatmul.mubr.bf16.gmra.mxu0 %v1095
        %v5383 = vpop.f32.mrf.mxu0
        %v5384 = vadd.f32 0.0, %v5383
        %v5385 = vpop.f32.mrf.mxu0
        %v5386 = vadd.f32 0.0, %v5385
        %v5387 = vpop.f32.mrf.mxu0
        %v5388 = vpop.f32.mrf.mxu0
        %5389 = vdwg.mxu0
        %5390 = vmatprep.subr.bf16.mxu0 %v3828
        %5391 = vmatpush1.bf16.msra.mxu0 %v3827
        %5392 = vmatprep.subr.bf16.mxu0 %v3826
        %5393 = vmatpush1.bf16.msra.mxu0 %v3825
        %5394 = vmatprep.subr.bf16.mxu0 %v3824
        %5395 = vmatpush1.bf16.msra.mxu0 %v3823
        %5396 = vmatprep.subr.bf16.mxu0 %v3822
        %5397 = vmatpush1.bf16.msra.mxu0 %v3821
        %5398 = vmatprep.subr.bf16.mxu0 %v3820
        %5399 = vmatpush1.bf16.msra.mxu0 %v3819
        %5400 = vmatprep.subr.bf16.mxu0 %v3818
        %5401 = vmatpush1.bf16.msra.mxu0 %v3817
        %5402 = vmatprep.subr.bf16.mxu0 %v3816
        %5403 = vmatpush1.bf16.msra.mxu0 %v3815
        %5404 = vmatprep.subr.bf16.mxu0 %v3814
        %5405 = vmatpush1.bf16.msra.mxu0 %v3813
        %5406 = vmatprep.subr.bf16.mxu0 %v3844
        %5407 = vmatpush2.bf16.msra.mxu0 %v3843
        %5408 = vmatprep.subr.bf16.mxu0 %v3842
        %5409 = vmatpush2.bf16.msra.mxu0 %v3841
        %5410 = vmatprep.subr.bf16.mxu0 %v3840
        %5411 = vmatpush2.bf16.msra.mxu0 %v3839
        %5412 = vmatprep.subr.bf16.mxu0 %v3838
        %5413 = vmatpush2.bf16.msra.mxu0 %v3837
        %5414 = vmatprep.subr.bf16.mxu0 %v3836
        %5415 = vmatpush2.bf16.msra.mxu0 %v3835
        %5416 = vmatprep.subr.bf16.mxu0 %v3834
        %5417 = vmatpush2.bf16.msra.mxu0 %v3833
        %5418 = vmatprep.subr.bf16.mxu0 %v3832
        %5419 = vmatpush2.bf16.msra.mxu0 %v3831
        %5420 = vmatprep.subr.bf16.mxu0 %v3830
        %5421 = vmatpush2.bf16.msra.mxu0 %v3829
        %5422 = vmatprep.mubr.bf16.mxu0 %v1119
        %5423 = vmatmul.mubr.bf16.gmra.mxu0 %v1117
        %v5424 = vpop.f32.mrf.mxu0
        %v5425 = vadd.f32 %v5384, %v5424
        %v5426 = vpop.f32.mrf.mxu0
        %v5427 = vadd.f32 %v5386, %v5426
        %v5428 = vpop.f32.mrf.mxu0
        %v5429 = vpop.f32.mrf.mxu0
        %5430 = vdwg.mxu0
        %5431 = vmatprep.subr.bf16.mxu0 %v3860
        %5432 = vmatpush1.bf16.msra.mxu0 %v3859
        %5433 = vmatprep.subr.bf16.mxu0 %v3858
        %5434 = vmatpush1.bf16.msra.mxu0 %v3857
        %5435 = vmatprep.subr.bf16.mxu0 %v3856
        %5436 = vmatpush1.bf16.msra.mxu0 %v3855
        %5437 = vmatprep.subr.bf16.mxu0 %v3854
        %5438 = vmatpush1.bf16.msra.mxu0 %v3853
        %5439 = vmatprep.subr.bf16.mxu0 %v3852
        %5440 = vmatpush1.bf16.msra.mxu0 %v3851
        %5441 = vmatprep.subr.bf16.mxu0 %v3850
        %5442 = vmatpush1.bf16.msra.mxu0 %v3849
        %5443 = vmatprep.subr.bf16.mxu0 %v3848
        %5444 = vmatpush1.bf16.msra.mxu0 %v3847
        %5445 = vmatprep.subr.bf16.mxu0 %v3846
        %5446 = vmatpush1.bf16.msra.mxu0 %v3845
        %5447 = vmatprep.subr.bf16.mxu0 %v3876
        %5448 = vmatpush2.bf16.msra.mxu0 %v3875
        %5449 = vmatprep.subr.bf16.mxu0 %v3874
        %5450 = vmatpush2.bf16.msra.mxu0 %v3873
        %5451 = vmatprep.subr.bf16.mxu0 %v3872
        %5452 = vmatpush2.bf16.msra.mxu0 %v3871
        %5453 = vmatprep.subr.bf16.mxu0 %v3870
        %5454 = vmatpush2.bf16.msra.mxu0 %v3869
        %5455 = vmatprep.subr.bf16.mxu0 %v3868
        %5456 = vmatpush2.bf16.msra.mxu0 %v3867
        %5457 = vmatprep.subr.bf16.mxu0 %v3866
        %5458 = vmatpush2.bf16.msra.mxu0 %v3865
        %5459 = vmatprep.subr.bf16.mxu0 %v3864
        %5460 = vmatpush2.bf16.msra.mxu0 %v3863
        %5461 = vmatprep.subr.bf16.mxu0 %v3862
        %5462 = vmatpush2.bf16.msra.mxu0 %v3861
        %5463 = vmatprep.mubr.bf16.mxu0 %v1116
        %5464 = vmatmul.mubr.bf16.gmra.mxu0 %v1102
        %v5465 = vpop.f32.mrf.mxu0
        %v5466 = vadd.f32 %v5425, %v5465
        %v5467 = vpop.f32.mrf.mxu0
        %v5468 = vadd.f32 %v5427, %v5467
        %v5469 = vpop.f32.mrf.mxu0
        %v5470 = vpop.f32.mrf.mxu0
        %5471 = vdwg.mxu0
        %5472 = vmatprep.subr.bf16.mxu0 %v3892
        %5473 = vmatpush1.bf16.msra.mxu0 %v3891
        %5474 = vmatprep.subr.bf16.mxu0 %v3890
        %5475 = vmatpush1.bf16.msra.mxu0 %v3889
        %5476 = vmatprep.subr.bf16.mxu0 %v3888
        %5477 = vmatpush1.bf16.msra.mxu0 %v3887
        %5478 = vmatprep.subr.bf16.mxu0 %v3886
        %5479 = vmatpush1.bf16.msra.mxu0 %v3885
        %5480 = vmatprep.subr.bf16.mxu0 %v3884
        %5481 = vmatpush1.bf16.msra.mxu0 %v3883
        %5482 = vmatprep.subr.bf16.mxu0 %v3882
        %5483 = vmatpush1.bf16.msra.mxu0 %v3881
        %5484 = vmatprep.subr.bf16.mxu0 %v3880
        %5485 = vmatpush1.bf16.msra.mxu0 %v3879
        %5486 = vmatprep.subr.bf16.mxu0 %v3878
        %5487 = vmatpush1.bf16.msra.mxu0 %v3877
        %5488 = vmatprep.subr.bf16.mxu0 %v3908
        %5489 = vmatpush2.bf16.msra.mxu0 %v3907
        %5490 = vmatprep.subr.bf16.mxu0 %v3906
        %5491 = vmatpush2.bf16.msra.mxu0 %v3905
        %5492 = vmatprep.subr.bf16.mxu0 %v3904
        %5493 = vmatpush2.bf16.msra.mxu0 %v3903
        %5494 = vmatprep.subr.bf16.mxu0 %v3902
        %5495 = vmatpush2.bf16.msra.mxu0 %v3901
        %5496 = vmatprep.subr.bf16.mxu0 %v3900
        %5497 = vmatpush2.bf16.msra.mxu0 %v3899
        %5498 = vmatprep.subr.bf16.mxu0 %v3898
        %5499 = vmatpush2.bf16.msra.mxu0 %v3897
        %5500 = vmatprep.subr.bf16.mxu0 %v3896
        %5501 = vmatpush2.bf16.msra.mxu0 %v3895
        %5502 = vmatprep.subr.bf16.mxu0 %v3894
        %5503 = vmatpush2.bf16.msra.mxu0 %v3893
        %5504 = vmatprep.mubr.bf16.mxu0 %v1120
        %5505 = vmatmul.mubr.bf16.gmra.mxu0 %v1118
        %v5506 = vpop.f32.mrf.mxu0
        %v5507 = vadd.f32 %v5466, %v5506
        %v5508 = vpop.f32.mrf.mxu0
        %v5509 = vadd.f32 %v5468, %v5508
        %v5510 = vpop.f32.mrf.mxu0
        %v5511 = vpop.f32.mrf.mxu0
        %5512 = vdwg.mxu0
        %5513 = vmatprep.subr.bf16.mxu0 %v3924
        %5514 = vmatpush1.bf16.msra.mxu0 %v3923
        %5515 = vmatprep.subr.bf16.mxu0 %v3922
        %5516 = vmatpush1.bf16.msra.mxu0 %v3921
        %5517 = vmatprep.subr.bf16.mxu0 %v3920
        %5518 = vmatpush1.bf16.msra.mxu0 %v3919
        %5519 = vmatprep.subr.bf16.mxu0 %v3918
        %5520 = vmatpush1.bf16.msra.mxu0 %v3917
        %5521 = vmatprep.subr.bf16.mxu0 %v3916
        %5522 = vmatpush1.bf16.msra.mxu0 %v3915
        %5523 = vmatprep.subr.bf16.mxu0 %v3914
        %5524 = vmatpush1.bf16.msra.mxu0 %v3913
        %5525 = vmatprep.subr.bf16.mxu0 %v3912
        %5526 = vmatpush1.bf16.msra.mxu0 %v3911
        %5527 = vmatprep.subr.bf16.mxu0 %v3910
        %5528 = vmatpush1.bf16.msra.mxu0 %v3909
        %5529 = vmatprep.subr.bf16.mxu0 %v3940
        %5530 = vmatpush2.bf16.msra.mxu0 %v3939
        %5531 = vmatprep.subr.bf16.mxu0 %v3938
        %5532 = vmatpush2.bf16.msra.mxu0 %v3937
        %5533 = vmatprep.subr.bf16.mxu0 %v3936
        %5534 = vmatpush2.bf16.msra.mxu0 %v3935
        %5535 = vmatprep.subr.bf16.mxu0 %v3934
        %5536 = vmatpush2.bf16.msra.mxu0 %v3933
        %5537 = vmatprep.subr.bf16.mxu0 %v3932
        %5538 = vmatpush2.bf16.msra.mxu0 %v3931
        %5539 = vmatprep.subr.bf16.mxu0 %v3930
        %5540 = vmatpush2.bf16.msra.mxu0 %v3929
        %5541 = vmatprep.subr.bf16.mxu0 %v3928
        %5542 = vmatpush2.bf16.msra.mxu0 %v3927
        %5543 = vmatprep.subr.bf16.mxu0 %v3926
        %5544 = vmatpush2.bf16.msra.mxu0 %v3925
        %5545 = vmatprep.mubr.bf16.mxu0 %v1158
        %5546 = vmatmul.mubr.bf16.gmra.mxu0 %v1144
        %v5547 = vpop.f32.mrf.mxu0
        %v5548 = vadd.f32 %v5507, %v5547
        %v5549 = vpop.f32.mrf.mxu0
        %v5550 = vadd.f32 %v5509, %v5549
        %v5551 = vpop.f32.mrf.mxu0
        %v5552 = vpop.f32.mrf.mxu0
        %5553 = vdwg.mxu0
        %5554 = vmatprep.subr.bf16.mxu0 %v3956
        %5555 = vmatpush1.bf16.msra.mxu0 %v3955
        %5556 = vmatprep.subr.bf16.mxu0 %v3954
        %5557 = vmatpush1.bf16.msra.mxu0 %v3953
        %5558 = vmatprep.subr.bf16.mxu0 %v3952
        %5559 = vmatpush1.bf16.msra.mxu0 %v3951
        %5560 = vmatprep.subr.bf16.mxu0 %v3950
        %5561 = vmatpush1.bf16.msra.mxu0 %v3949
        %5562 = vmatprep.subr.bf16.mxu0 %v3948
        %5563 = vmatpush1.bf16.msra.mxu0 %v3947
        %5564 = vmatprep.subr.bf16.mxu0 %v3946
        %5565 = vmatpush1.bf16.msra.mxu0 %v3945
        %5566 = vmatprep.subr.bf16.mxu0 %v3944
        %5567 = vmatpush1.bf16.msra.mxu0 %v3943
        %5568 = vmatprep.subr.bf16.mxu0 %v3942
        %5569 = vmatpush1.bf16.msra.mxu0 %v3941
        %5570 = vmatprep.subr.bf16.mxu0 %v3972
        %5571 = vmatpush2.bf16.msra.mxu0 %v3971
        %5572 = vmatprep.subr.bf16.mxu0 %v3970
        %5573 = vmatpush2.bf16.msra.mxu0 %v3969
        %5574 = vmatprep.subr.bf16.mxu0 %v3968
        %5575 = vmatpush2.bf16.msra.mxu0 %v3967
        %5576 = vmatprep.subr.bf16.mxu0 %v3966
        %5577 = vmatpush2.bf16.msra.mxu0 %v3965
        %5578 = vmatprep.subr.bf16.mxu0 %v3964
        %5579 = vmatpush2.bf16.msra.mxu0 %v3963
        %5580 = vmatprep.subr.bf16.mxu0 %v3962
        %5581 = vmatpush2.bf16.msra.mxu0 %v3961
        %5582 = vmatprep.subr.bf16.mxu0 %v3960
        %5583 = vmatpush2.bf16.msra.mxu0 %v3959
        %5584 = vmatprep.subr.bf16.mxu0 %v3958
        %5585 = vmatpush2.bf16.msra.mxu0 %v3957
        %5586 = vmatprep.mubr.bf16.mxu0 %v1168
        %5587 = vmatmul.mubr.bf16.gmra.mxu0 %v1166
        %v5588 = vpop.f32.mrf.mxu0
        %v5589 = vadd.f32 %v5548, %v5588
        %v5590 = vpop.f32.mrf.mxu0
        %v5591 = vadd.f32 %v5550, %v5590
        %v5592 = vpop.f32.mrf.mxu0
        %v5593 = vpop.f32.mrf.mxu0
        %5594 = vdwg.mxu0
        %5595 = vmatprep.subr.bf16.mxu0 %v3988
        %5596 = vmatpush1.bf16.msra.mxu0 %v3987
        %5597 = vmatprep.subr.bf16.mxu0 %v3986
        %5598 = vmatpush1.bf16.msra.mxu0 %v3985
        %5599 = vmatprep.subr.bf16.mxu0 %v3984
        %5600 = vmatpush1.bf16.msra.mxu0 %v3983
        %5601 = vmatprep.subr.bf16.mxu0 %v3982
        %5602 = vmatpush1.bf16.msra.mxu0 %v3981
        %5603 = vmatprep.subr.bf16.mxu0 %v3980
        %5604 = vmatpush1.bf16.msra.mxu0 %v3979
        %5605 = vmatprep.subr.bf16.mxu0 %v3978
        %5606 = vmatpush1.bf16.msra.mxu0 %v3977
        %5607 = vmatprep.subr.bf16.mxu0 %v3976
        %5608 = vmatpush1.bf16.msra.mxu0 %v3975
        %5609 = vmatprep.subr.bf16.mxu0 %v3974
        %5610 = vmatpush1.bf16.msra.mxu0 %v3973
        %5611 = vmatprep.subr.bf16.mxu0 %v4004
        %5612 = vmatpush2.bf16.msra.mxu0 %v4003
        %5613 = vmatprep.subr.bf16.mxu0 %v4002
        %5614 = vmatpush2.bf16.msra.mxu0 %v4001
        %5615 = vmatprep.subr.bf16.mxu0 %v4000
        %5616 = vmatpush2.bf16.msra.mxu0 %v3999
        %5617 = vmatprep.subr.bf16.mxu0 %v3998
        %5618 = vmatpush2.bf16.msra.mxu0 %v3997
        %5619 = vmatprep.subr.bf16.mxu0 %v3996
        %5620 = vmatpush2.bf16.msra.mxu0 %v3995
        %5621 = vmatprep.subr.bf16.mxu0 %v3994
        %5622 = vmatpush2.bf16.msra.mxu0 %v3993
        %5623 = vmatprep.subr.bf16.mxu0 %v3992
        %5624 = vmatpush2.bf16.msra.mxu0 %v3991
        %5625 = vmatprep.subr.bf16.mxu0 %v3990
        %5626 = vmatpush2.bf16.msra.mxu0 %v3989
        %5627 = vmatprep.mubr.bf16.mxu0 %v1165
        %5628 = vmatmul.mubr.bf16.gmra.mxu0 %v1151
        %v5629 = vpop.f32.mrf.mxu0
        %v5630 = vadd.f32 %v5589, %v5629
        %v5631 = vpop.f32.mrf.mxu0
        %v5632 = vadd.f32 %v5591, %v5631
        %v5633 = vpop.f32.mrf.mxu0
        %v5634 = vpop.f32.mrf.mxu0
        %5635 = vdwg.mxu0
        %5636 = vmatprep.subr.bf16.mxu0 %v4020
        %5637 = vmatpush1.bf16.msra.mxu0 %v4019
        %5638 = vmatprep.subr.bf16.mxu0 %v4018
        %5639 = vmatpush1.bf16.msra.mxu0 %v4017
        %5640 = vmatprep.subr.bf16.mxu0 %v4016
        %5641 = vmatpush1.bf16.msra.mxu0 %v4015
        %5642 = vmatprep.subr.bf16.mxu0 %v4014
        %5643 = vmatpush1.bf16.msra.mxu0 %v4013
        %5644 = vmatprep.subr.bf16.mxu0 %v4012
        %5645 = vmatpush1.bf16.msra.mxu0 %v4011
        %5646 = vmatprep.subr.bf16.mxu0 %v4010
        %5647 = vmatpush1.bf16.msra.mxu0 %v4009
        %5648 = vmatprep.subr.bf16.mxu0 %v4008
        %5649 = vmatpush1.bf16.msra.mxu0 %v4007
        %5650 = vmatprep.subr.bf16.mxu0 %v4006
        %5651 = vmatpush1.bf16.msra.mxu0 %v4005
        %5652 = vmatprep.subr.bf16.mxu0 %v4036
        %5653 = vmatpush2.bf16.msra.mxu0 %v4035
        %5654 = vmatprep.subr.bf16.mxu0 %v4034
        %5655 = vmatpush2.bf16.msra.mxu0 %v4033
        %5656 = vmatprep.subr.bf16.mxu0 %v4032
        %5657 = vmatpush2.bf16.msra.mxu0 %v4031
        %5658 = vmatprep.subr.bf16.mxu0 %v4030
        %5659 = vmatpush2.bf16.msra.mxu0 %v4029
        %5660 = vmatprep.subr.bf16.mxu0 %v4028
        %5661 = vmatpush2.bf16.msra.mxu0 %v4027
        %5662 = vmatprep.subr.bf16.mxu0 %v4026
        %5663 = vmatpush2.bf16.msra.mxu0 %v4025
        %5664 = vmatprep.subr.bf16.mxu0 %v4024
        %5665 = vmatpush2.bf16.msra.mxu0 %v4023
        %5666 = vmatprep.subr.bf16.mxu0 %v4022
        %5667 = vmatpush2.bf16.msra.mxu0 %v4021
        %5668 = vmatprep.mubr.bf16.mxu0 %v1169
        %5669 = vmatmul.mubr.bf16.gmra.mxu0 %v1167
        %v5670 = vpop.f32.mrf.mxu0
        %v5671 = vadd.f32 %v5630, %v5670
        %v5672 = vpop.f32.mrf.mxu0
        %v5673 = vadd.f32 %v5632, %v5672
        %v5674 = vpop.f32.mrf.mxu0
        %v5675 = vpop.f32.mrf.mxu0
        %5676 = vdwg.mxu0
        %5677 = vmatprep.subr.bf16.mxu0 %v4052
        %5678 = vmatpush1.bf16.msra.mxu0 %v4051
        %5679 = vmatprep.subr.bf16.mxu0 %v4050
        %5680 = vmatpush1.bf16.msra.mxu0 %v4049
        %5681 = vmatprep.subr.bf16.mxu0 %v4048
        %5682 = vmatpush1.bf16.msra.mxu0 %v4047
        %5683 = vmatprep.subr.bf16.mxu0 %v4046
        %5684 = vmatpush1.bf16.msra.mxu0 %v4045
        %5685 = vmatprep.subr.bf16.mxu0 %v4044
        %5686 = vmatpush1.bf16.msra.mxu0 %v4043
        %5687 = vmatprep.subr.bf16.mxu0 %v4042
        %5688 = vmatpush1.bf16.msra.mxu0 %v4041
        %5689 = vmatprep.subr.bf16.mxu0 %v4040
        %5690 = vmatpush1.bf16.msra.mxu0 %v4039
        %5691 = vmatprep.subr.bf16.mxu0 %v4038
        %5692 = vmatpush1.bf16.msra.mxu0 %v4037
        %5693 = vmatprep.subr.bf16.mxu0 %v4068
        %5694 = vmatpush2.bf16.msra.mxu0 %v4067
        %5695 = vmatprep.subr.bf16.mxu0 %v4066
        %5696 = vmatpush2.bf16.msra.mxu0 %v4065
        %5697 = vmatprep.subr.bf16.mxu0 %v4064
        %5698 = vmatpush2.bf16.msra.mxu0 %v4063
        %5699 = vmatprep.subr.bf16.mxu0 %v4062
        %5700 = vmatpush2.bf16.msra.mxu0 %v4061
        %5701 = vmatprep.subr.bf16.mxu0 %v4060
        %5702 = vmatpush2.bf16.msra.mxu0 %v4059
        %5703 = vmatprep.subr.bf16.mxu0 %v4058
        %5704 = vmatpush2.bf16.msra.mxu0 %v4057
        %5705 = vmatprep.subr.bf16.mxu0 %v4056
        %5706 = vmatpush2.bf16.msra.mxu0 %v4055
        %5707 = vmatprep.subr.bf16.mxu0 %v4054
        %5708 = vmatpush2.bf16.msra.mxu0 %v4053
        %5709 = vmatprep.mubr.bf16.mxu0 %v1207
        %5710 = vmatmul.mubr.bf16.gmra.mxu0 %v1193
        %v5711 = vpop.f32.mrf.mxu0
        %v5712 = vadd.f32 %v5671, %v5711
        %v5713 = vpop.f32.mrf.mxu0
        %v5714 = vadd.f32 %v5673, %v5713
        %v5715 = vpop.f32.mrf.mxu0
        %v5716 = vpop.f32.mrf.mxu0
        %5717 = vdwg.mxu0
        %5718 = vmatprep.subr.bf16.mxu0 %v4084
        %5719 = vmatpush1.bf16.msra.mxu0 %v4083
        %5720 = vmatprep.subr.bf16.mxu0 %v4082
        %5721 = vmatpush1.bf16.msra.mxu0 %v4081
        %5722 = vmatprep.subr.bf16.mxu0 %v4080
        %5723 = vmatpush1.bf16.msra.mxu0 %v4079
        %5724 = vmatprep.subr.bf16.mxu0 %v4078
        %5725 = vmatpush1.bf16.msra.mxu0 %v4077
        %5726 = vmatprep.subr.bf16.mxu0 %v4076
        %5727 = vmatpush1.bf16.msra.mxu0 %v4075
        %5728 = vmatprep.subr.bf16.mxu0 %v4074
        %5729 = vmatpush1.bf16.msra.mxu0 %v4073
        %5730 = vmatprep.subr.bf16.mxu0 %v4072
        %5731 = vmatpush1.bf16.msra.mxu0 %v4071
        %5732 = vmatprep.subr.bf16.mxu0 %v4070
        %5733 = vmatpush1.bf16.msra.mxu0 %v4069
        %5734 = vmatprep.subr.bf16.mxu0 %v4100
        %5735 = vmatpush2.bf16.msra.mxu0 %v4099
        %5736 = vmatprep.subr.bf16.mxu0 %v4098
        %5737 = vmatpush2.bf16.msra.mxu0 %v4097
        %5738 = vmatprep.subr.bf16.mxu0 %v4096
        %5739 = vmatpush2.bf16.msra.mxu0 %v4095
        %5740 = vmatprep.subr.bf16.mxu0 %v4094
        %5741 = vmatpush2.bf16.msra.mxu0 %v4093
        %5742 = vmatprep.subr.bf16.mxu0 %v4092
        %5743 = vmatpush2.bf16.msra.mxu0 %v4091
        %5744 = vmatprep.subr.bf16.mxu0 %v4090
        %5745 = vmatpush2.bf16.msra.mxu0 %v4089
        %5746 = vmatprep.subr.bf16.mxu0 %v4088
        %5747 = vmatpush2.bf16.msra.mxu0 %v4087
        %5748 = vmatprep.subr.bf16.mxu0 %v4086
        %5749 = vmatpush2.bf16.msra.mxu0 %v4085
        %5750 = vmatprep.mubr.bf16.mxu0 %v1217
        %5751 = vmatmul.mubr.bf16.gmra.mxu0 %v1215
        %v5752 = vpop.f32.mrf.mxu0
        %v5753 = vadd.f32 %v5712, %v5752
        %v5754 = vpop.f32.mrf.mxu0
        %v5755 = vadd.f32 %v5714, %v5754
        %v5756 = vpop.f32.mrf.mxu0
        %v5757 = vpop.f32.mrf.mxu0
        %5758 = vdwg.mxu0
        %5759 = vmatprep.subr.bf16.mxu0 %v4116
        %5760 = vmatpush1.bf16.msra.mxu0 %v4115
        %5761 = vmatprep.subr.bf16.mxu0 %v4114
        %5762 = vmatpush1.bf16.msra.mxu0 %v4113
        %5763 = vmatprep.subr.bf16.mxu0 %v4112
        %5764 = vmatpush1.bf16.msra.mxu0 %v4111
        %5765 = vmatprep.subr.bf16.mxu0 %v4110
        %5766 = vmatpush1.bf16.msra.mxu0 %v4109
        %5767 = vmatprep.subr.bf16.mxu0 %v4108
        %5768 = vmatpush1.bf16.msra.mxu0 %v4107
        %5769 = vmatprep.subr.bf16.mxu0 %v4106
        %5770 = vmatpush1.bf16.msra.mxu0 %v4105
        %5771 = vmatprep.subr.bf16.mxu0 %v4104
        %5772 = vmatpush1.bf16.msra.mxu0 %v4103
        %5773 = vmatprep.subr.bf16.mxu0 %v4102
        %5774 = vmatpush1.bf16.msra.mxu0 %v4101
        %5775 = vmatprep.subr.bf16.mxu0 %v4132
        %5776 = vmatpush2.bf16.msra.mxu0 %v4131
        %5777 = vmatprep.subr.bf16.mxu0 %v4130
        %5778 = vmatpush2.bf16.msra.mxu0 %v4129
        %5779 = vmatprep.subr.bf16.mxu0 %v4128
        %5780 = vmatpush2.bf16.msra.mxu0 %v4127
        %5781 = vmatprep.subr.bf16.mxu0 %v4126
        %5782 = vmatpush2.bf16.msra.mxu0 %v4125
        %5783 = vmatprep.subr.bf16.mxu0 %v4124
        %5784 = vmatpush2.bf16.msra.mxu0 %v4123
        %5785 = vmatprep.subr.bf16.mxu0 %v4122
        %5786 = vmatpush2.bf16.msra.mxu0 %v4121
        %5787 = vmatprep.subr.bf16.mxu0 %v4120
        %5788 = vmatpush2.bf16.msra.mxu0 %v4119
        %5789 = vmatprep.subr.bf16.mxu0 %v4118
        %5790 = vmatpush2.bf16.msra.mxu0 %v4117
        %5791 = vmatprep.mubr.bf16.mxu0 %v1214
        %5792 = vmatmul.mubr.bf16.gmra.mxu0 %v1200
        %v5793 = vpop.f32.mrf.mxu0
        %v5794 = vadd.f32 %v5753, %v5793
        %v5795 = vpop.f32.mrf.mxu0
        %v5796 = vadd.f32 %v5755, %v5795
        %v5797 = vpop.f32.mrf.mxu0
        %v5798 = vpop.f32.mrf.mxu0
        %5799 = vdwg.mxu0
        %5800 = vmatprep.subr.bf16.mxu0 %v4148
        %5801 = vmatpush1.bf16.msra.mxu0 %v4147
        %5802 = vmatprep.subr.bf16.mxu0 %v4146
        %5803 = vmatpush1.bf16.msra.mxu0 %v4145
        %5804 = vmatprep.subr.bf16.mxu0 %v4144
        %5805 = vmatpush1.bf16.msra.mxu0 %v4143
        %5806 = vmatprep.subr.bf16.mxu0 %v4142
        %5807 = vmatpush1.bf16.msra.mxu0 %v4141
        %5808 = vmatprep.subr.bf16.mxu0 %v4140
        %5809 = vmatpush1.bf16.msra.mxu0 %v4139
        %5810 = vmatprep.subr.bf16.mxu0 %v4138
        %5811 = vmatpush1.bf16.msra.mxu0 %v4137
        %5812 = vmatprep.subr.bf16.mxu0 %v4136
        %5813 = vmatpush1.bf16.msra.mxu0 %v4135
        %5814 = vmatprep.subr.bf16.mxu0 %v4134
        %5815 = vmatpush1.bf16.msra.mxu0 %v4133
        %5816 = vmatprep.subr.bf16.mxu0 %v4164
        %5817 = vmatpush2.bf16.msra.mxu0 %v4163
        %5818 = vmatprep.subr.bf16.mxu0 %v4162
        %5819 = vmatpush2.bf16.msra.mxu0 %v4161
        %5820 = vmatprep.subr.bf16.mxu0 %v4160
        %5821 = vmatpush2.bf16.msra.mxu0 %v4159
        %5822 = vmatprep.subr.bf16.mxu0 %v4158
        %5823 = vmatpush2.bf16.msra.mxu0 %v4157
        %5824 = vmatprep.subr.bf16.mxu0 %v4156
        %5825 = vmatpush2.bf16.msra.mxu0 %v4155
        %5826 = vmatprep.subr.bf16.mxu0 %v4154
        %5827 = vmatpush2.bf16.msra.mxu0 %v4153
        %5828 = vmatprep.subr.bf16.mxu0 %v4152
        %5829 = vmatpush2.bf16.msra.mxu0 %v4151
        %5830 = vmatprep.subr.bf16.mxu0 %v4150
        %5831 = vmatpush2.bf16.msra.mxu0 %v4149
        %5832 = vmatprep.mubr.bf16.mxu0 %v1218
        %5833 = vmatmul.mubr.bf16.gmra.mxu0 %v1216
        %v5834 = vpop.f32.mrf.mxu0
        %v5835 = vadd.f32 %v5794, %v5834
        %v5836 = vpop.f32.mrf.mxu0
        %v5837 = vadd.f32 %v5796, %v5836
        %v5838 = vpop.f32.mrf.mxu0
        %v5839 = vpop.f32.mrf.mxu0
        %5840 = vdwg.mxu0
        %5841 = vmatprep.subr.bf16.mxu0 %v4180
        %5842 = vmatpush1.bf16.msra.mxu0 %v4179
        %5843 = vmatprep.subr.bf16.mxu0 %v4178
        %5844 = vmatpush1.bf16.msra.mxu0 %v4177
        %5845 = vmatprep.subr.bf16.mxu0 %v4176
        %5846 = vmatpush1.bf16.msra.mxu0 %v4175
        %5847 = vmatprep.subr.bf16.mxu0 %v4174
        %5848 = vmatpush1.bf16.msra.mxu0 %v4173
        %5849 = vmatprep.subr.bf16.mxu0 %v4172
        %5850 = vmatpush1.bf16.msra.mxu0 %v4171
        %5851 = vmatprep.subr.bf16.mxu0 %v4170
        %5852 = vmatpush1.bf16.msra.mxu0 %v4169
        %5853 = vmatprep.subr.bf16.mxu0 %v4168
        %5854 = vmatpush1.bf16.msra.mxu0 %v4167
        %5855 = vmatprep.subr.bf16.mxu0 %v4166
        %5856 = vmatpush1.bf16.msra.mxu0 %v4165
        %5857 = vmatprep.subr.bf16.mxu0 %v4196
        %5858 = vmatpush2.bf16.msra.mxu0 %v4195
        %5859 = vmatprep.subr.bf16.mxu0 %v4194
        %5860 = vmatpush2.bf16.msra.mxu0 %v4193
        %5861 = vmatprep.subr.bf16.mxu0 %v4192
        %5862 = vmatpush2.bf16.msra.mxu0 %v4191
        %5863 = vmatprep.subr.bf16.mxu0 %v4190
        %5864 = vmatpush2.bf16.msra.mxu0 %v4189
        %5865 = vmatprep.subr.bf16.mxu0 %v4188
        %5866 = vmatpush2.bf16.msra.mxu0 %v4187
        %5867 = vmatprep.subr.bf16.mxu0 %v4186
        %5868 = vmatpush2.bf16.msra.mxu0 %v4185
        %5869 = vmatprep.subr.bf16.mxu0 %v4184
        %5870 = vmatpush2.bf16.msra.mxu0 %v4183
        %5871 = vmatprep.subr.bf16.mxu0 %v4182
        %5872 = vmatpush2.bf16.msra.mxu0 %v4181
        %5873 = vmatprep.mubr.bf16.mxu0 %v1256
        %5874 = vmatmul.mubr.bf16.gmra.mxu0 %v1242
        %v5875 = vpop.f32.mrf.mxu0
        %v5876 = vadd.f32 %v5835, %v5875
        %v5877 = vpop.f32.mrf.mxu0
        %v5878 = vadd.f32 %v5837, %v5877
        %v5879 = vpop.f32.mrf.mxu0
        %v5880 = vpop.f32.mrf.mxu0
        %5881 = vdwg.mxu0
        %5882 = vmatprep.subr.bf16.mxu0 %v4212
        %5883 = vmatpush1.bf16.msra.mxu0 %v4211
        %5884 = vmatprep.subr.bf16.mxu0 %v4210
        %5885 = vmatpush1.bf16.msra.mxu0 %v4209
        %5886 = vmatprep.subr.bf16.mxu0 %v4208
        %5887 = vmatpush1.bf16.msra.mxu0 %v4207
        %5888 = vmatprep.subr.bf16.mxu0 %v4206
        %5889 = vmatpush1.bf16.msra.mxu0 %v4205
        %5890 = vmatprep.subr.bf16.mxu0 %v4204
        %5891 = vmatpush1.bf16.msra.mxu0 %v4203
        %5892 = vmatprep.subr.bf16.mxu0 %v4202
        %5893 = vmatpush1.bf16.msra.mxu0 %v4201
        %5894 = vmatprep.subr.bf16.mxu0 %v4200
        %5895 = vmatpush1.bf16.msra.mxu0 %v4199
        %5896 = vmatprep.subr.bf16.mxu0 %v4198
        %5897 = vmatpush1.bf16.msra.mxu0 %v4197
        %5898 = vmatprep.subr.bf16.mxu0 %v4228
        %5899 = vmatpush2.bf16.msra.mxu0 %v4227
        %5900 = vmatprep.subr.bf16.mxu0 %v4226
        %5901 = vmatpush2.bf16.msra.mxu0 %v4225
        %5902 = vmatprep.subr.bf16.mxu0 %v4224
        %5903 = vmatpush2.bf16.msra.mxu0 %v4223
        %5904 = vmatprep.subr.bf16.mxu0 %v4222
        %5905 = vmatpush2.bf16.msra.mxu0 %v4221
        %5906 = vmatprep.subr.bf16.mxu0 %v4220
        %5907 = vmatpush2.bf16.msra.mxu0 %v4219
        %5908 = vmatprep.subr.bf16.mxu0 %v4218
        %5909 = vmatpush2.bf16.msra.mxu0 %v4217
        %5910 = vmatprep.subr.bf16.mxu0 %v4216
        %5911 = vmatpush2.bf16.msra.mxu0 %v4215
        %5912 = vmatprep.subr.bf16.mxu0 %v4214
        %5913 = vmatpush2.bf16.msra.mxu0 %v4213
        %5914 = vmatprep.mubr.bf16.mxu0 %v1266
        %5915 = vmatmul.mubr.bf16.gmra.mxu0 %v1264
        %v5916 = vpop.f32.mrf.mxu0
        %v5917 = vadd.f32 %v5876, %v5916
        %v5918 = vpop.f32.mrf.mxu0
        %v5919 = vadd.f32 %v5878, %v5918
        %v5920 = vpop.f32.mrf.mxu0
        %v5921 = vpop.f32.mrf.mxu0
        %5922 = vdwg.mxu0
        %5923 = vmatprep.subr.bf16.mxu0 %v4244
        %5924 = vmatpush1.bf16.msra.mxu0 %v4243
        %5925 = vmatprep.subr.bf16.mxu0 %v4242
        %5926 = vmatpush1.bf16.msra.mxu0 %v4241
        %5927 = vmatprep.subr.bf16.mxu0 %v4240
        %5928 = vmatpush1.bf16.msra.mxu0 %v4239
        %5929 = vmatprep.subr.bf16.mxu0 %v4238
        %5930 = vmatpush1.bf16.msra.mxu0 %v4237
        %5931 = vmatprep.subr.bf16.mxu0 %v4236
        %5932 = vmatpush1.bf16.msra.mxu0 %v4235
        %5933 = vmatprep.subr.bf16.mxu0 %v4234
        %5934 = vmatpush1.bf16.msra.mxu0 %v4233
        %5935 = vmatprep.subr.bf16.mxu0 %v4232
        %5936 = vmatpush1.bf16.msra.mxu0 %v4231
        %5937 = vmatprep.subr.bf16.mxu0 %v4230
        %5938 = vmatpush1.bf16.msra.mxu0 %v4229
        %5939 = vmatprep.subr.bf16.mxu0 %v4260
        %5940 = vmatpush2.bf16.msra.mxu0 %v4259
        %5941 = vmatprep.subr.bf16.mxu0 %v4258
        %5942 = vmatpush2.bf16.msra.mxu0 %v4257
        %5943 = vmatprep.subr.bf16.mxu0 %v4256
        %5944 = vmatpush2.bf16.msra.mxu0 %v4255
        %5945 = vmatprep.subr.bf16.mxu0 %v4254
        %5946 = vmatpush2.bf16.msra.mxu0 %v4253
        %5947 = vmatprep.subr.bf16.mxu0 %v4252
        %5948 = vmatpush2.bf16.msra.mxu0 %v4251
        %5949 = vmatprep.subr.bf16.mxu0 %v4250
        %5950 = vmatpush2.bf16.msra.mxu0 %v4249
        %5951 = vmatprep.subr.bf16.mxu0 %v4248
        %5952 = vmatpush2.bf16.msra.mxu0 %v4247
        %5953 = vmatprep.subr.bf16.mxu0 %v4246
        %5954 = vmatpush2.bf16.msra.mxu0 %v4245
        %5955 = vmatprep.mubr.bf16.mxu0 %v1263
        %5956 = vmatmul.mubr.bf16.gmra.mxu0 %v1249
        %v5957 = vpop.f32.mrf.mxu0
        %v5958 = vadd.f32 %v5917, %v5957
        %v5959 = vpop.f32.mrf.mxu0
        %v5960 = vadd.f32 %v5919, %v5959
        %v5961 = vpop.f32.mrf.mxu0
        %v5962 = vpop.f32.mrf.mxu0
        %5963 = vdwg.mxu0
        %5964 = vmatprep.subr.bf16.mxu0 %v4276
        %5965 = vmatpush1.bf16.msra.mxu0 %v4275
        %5966 = vmatprep.subr.bf16.mxu0 %v4274
        %5967 = vmatpush1.bf16.msra.mxu0 %v4273
        %5968 = vmatprep.subr.bf16.mxu0 %v4272
        %5969 = vmatpush1.bf16.msra.mxu0 %v4271
        %5970 = vmatprep.subr.bf16.mxu0 %v4270
        %5971 = vmatpush1.bf16.msra.mxu0 %v4269
        %5972 = vmatprep.subr.bf16.mxu0 %v4268
        %5973 = vmatpush1.bf16.msra.mxu0 %v4267
        %5974 = vmatprep.subr.bf16.mxu0 %v4266
        %5975 = vmatpush1.bf16.msra.mxu0 %v4265
        %5976 = vmatprep.subr.bf16.mxu0 %v4264
        %5977 = vmatpush1.bf16.msra.mxu0 %v4263
        %5978 = vmatprep.subr.bf16.mxu0 %v4262
        %5979 = vmatpush1.bf16.msra.mxu0 %v4261
        %5980 = vmatprep.subr.bf16.mxu0 %v4292
        %5981 = vmatpush2.bf16.msra.mxu0 %v4291
        %5982 = vmatprep.subr.bf16.mxu0 %v4290
        %5983 = vmatpush2.bf16.msra.mxu0 %v4289
        %5984 = vmatprep.subr.bf16.mxu0 %v4288
        %5985 = vmatpush2.bf16.msra.mxu0 %v4287
        %5986 = vmatprep.subr.bf16.mxu0 %v4286
        %5987 = vmatpush2.bf16.msra.mxu0 %v4285
        %5988 = vmatprep.subr.bf16.mxu0 %v4284
        %5989 = vmatpush2.bf16.msra.mxu0 %v4283
        %5990 = vmatprep.subr.bf16.mxu0 %v4282
        %5991 = vmatpush2.bf16.msra.mxu0 %v4281
        %5992 = vmatprep.subr.bf16.mxu0 %v4280
        %5993 = vmatpush2.bf16.msra.mxu0 %v4279
        %5994 = vmatprep.subr.bf16.mxu0 %v4278
        %5995 = vmatpush2.bf16.msra.mxu0 %v4277
        %5996 = vmatprep.mubr.bf16.mxu0 %v1267
        %5997 = vmatmul.mubr.bf16.gmra.mxu0 %v1265
        %v5998 = vpop.f32.mrf.mxu0
        %v5999 = vadd.f32 %v5958, %v5998
        %v6000 = vpop.f32.mrf.mxu0
        %v6001 = vadd.f32 %v5960, %v6000
        %v6002 = vpop.f32.mrf.mxu0
        %v6003 = vpop.f32.mrf.mxu0
        %6004 = vdwg.mxu0
        %6005 = vmatprep.subr.bf16.mxu0 %v4308
        %6006 = vmatpush1.bf16.msra.mxu0 %v4307
        %6007 = vmatprep.subr.bf16.mxu0 %v4306
        %6008 = vmatpush1.bf16.msra.mxu0 %v4305
        %6009 = vmatprep.subr.bf16.mxu0 %v4304
        %6010 = vmatpush1.bf16.msra.mxu0 %v4303
        %6011 = vmatprep.subr.bf16.mxu0 %v4302
        %6012 = vmatpush1.bf16.msra.mxu0 %v4301
        %6013 = vmatprep.subr.bf16.mxu0 %v4300
        %6014 = vmatpush1.bf16.msra.mxu0 %v4299
        %6015 = vmatprep.subr.bf16.mxu0 %v4298
        %6016 = vmatpush1.bf16.msra.mxu0 %v4297
        %6017 = vmatprep.subr.bf16.mxu0 %v4296
        %6018 = vmatpush1.bf16.msra.mxu0 %v4295
        %6019 = vmatprep.subr.bf16.mxu0 %v4294
        %6020 = vmatpush1.bf16.msra.mxu0 %v4293
        %6021 = vmatprep.subr.bf16.mxu0 %v4324
        %6022 = vmatpush2.bf16.msra.mxu0 %v4323
        %6023 = vmatprep.subr.bf16.mxu0 %v4322
        %6024 = vmatpush2.bf16.msra.mxu0 %v4321
        %6025 = vmatprep.subr.bf16.mxu0 %v4320
        %6026 = vmatpush2.bf16.msra.mxu0 %v4319
        %6027 = vmatprep.subr.bf16.mxu0 %v4318
        %6028 = vmatpush2.bf16.msra.mxu0 %v4317
        %6029 = vmatprep.subr.bf16.mxu0 %v4316
        %6030 = vmatpush2.bf16.msra.mxu0 %v4315
        %6031 = vmatprep.subr.bf16.mxu0 %v4314
        %6032 = vmatpush2.bf16.msra.mxu0 %v4313
        %6033 = vmatprep.subr.bf16.mxu0 %v4312
        %6034 = vmatpush2.bf16.msra.mxu0 %v4311
        %6035 = vmatprep.subr.bf16.mxu0 %v4310
        %6036 = vmatpush2.bf16.msra.mxu0 %v4309
        %6037 = vmatprep.mubr.bf16.mxu0 %v1305
        %6038 = vmatmul.mubr.bf16.gmra.mxu0 %v1291
        %v6039 = vpop.f32.mrf.mxu0
        %v6040 = vadd.f32 %v5999, %v6039
        %v6041 = vpop.f32.mrf.mxu0
        %v6042 = vadd.f32 %v6001, %v6041
        %v6043 = vpop.f32.mrf.mxu0
        %v6044 = vpop.f32.mrf.mxu0
        %6045 = vdwg.mxu0
        %6046 = vmatprep.subr.bf16.mxu0 %v4340
        %6047 = vmatpush1.bf16.msra.mxu0 %v4339
        %6048 = vmatprep.subr.bf16.mxu0 %v4338
        %6049 = vmatpush1.bf16.msra.mxu0 %v4337
        %6050 = vmatprep.subr.bf16.mxu0 %v4336
        %6051 = vmatpush1.bf16.msra.mxu0 %v4335
        %6052 = vmatprep.subr.bf16.mxu0 %v4334
        %6053 = vmatpush1.bf16.msra.mxu0 %v4333
        %6054 = vmatprep.subr.bf16.mxu0 %v4332
        %6055 = vmatpush1.bf16.msra.mxu0 %v4331
        %6056 = vmatprep.subr.bf16.mxu0 %v4330
        %6057 = vmatpush1.bf16.msra.mxu0 %v4329
        %6058 = vmatprep.subr.bf16.mxu0 %v4328
        %6059 = vmatpush1.bf16.msra.mxu0 %v4327
        %6060 = vmatprep.subr.bf16.mxu0 %v4326
        %6061 = vmatpush1.bf16.msra.mxu0 %v4325
        %6062 = vmatprep.subr.bf16.mxu0 %v4356
        %6063 = vmatpush2.bf16.msra.mxu0 %v4355
        %6064 = vmatprep.subr.bf16.mxu0 %v4354
        %6065 = vmatpush2.bf16.msra.mxu0 %v4353
        %6066 = vmatprep.subr.bf16.mxu0 %v4352
        %6067 = vmatpush2.bf16.msra.mxu0 %v4351
        %6068 = vmatprep.subr.bf16.mxu0 %v4350
        %6069 = vmatpush2.bf16.msra.mxu0 %v4349
        %6070 = vmatprep.subr.bf16.mxu0 %v4348
        %6071 = vmatpush2.bf16.msra.mxu0 %v4347
        %6072 = vmatprep.subr.bf16.mxu0 %v4346
        %6073 = vmatpush2.bf16.msra.mxu0 %v4345
        %6074 = vmatprep.subr.bf16.mxu0 %v4344
        %6075 = vmatpush2.bf16.msra.mxu0 %v4343
        %6076 = vmatprep.subr.bf16.mxu0 %v4342
        %6077 = vmatpush2.bf16.msra.mxu0 %v4341
        %6078 = vmatprep.mubr.bf16.mxu0 %v1315
        %6079 = vmatmul.mubr.bf16.gmra.mxu0 %v1313
        %v6080 = vpop.f32.mrf.mxu0
        %v6081 = vadd.f32 %v6040, %v6080
        %v6082 = vpop.f32.mrf.mxu0
        %v6083 = vadd.f32 %v6042, %v6082
        %v6084 = vpop.f32.mrf.mxu0
        %v6085 = vpop.f32.mrf.mxu0
        %6086 = vdwg.mxu0
        %6087 = vmatprep.subr.bf16.mxu0 %v4372
        %6088 = vmatpush1.bf16.msra.mxu0 %v4371
        %6089 = vmatprep.subr.bf16.mxu0 %v4370
        %6090 = vmatpush1.bf16.msra.mxu0 %v4369
        %6091 = vmatprep.subr.bf16.mxu0 %v4368
        %6092 = vmatpush1.bf16.msra.mxu0 %v4367
        %6093 = vmatprep.subr.bf16.mxu0 %v4366
        %6094 = vmatpush1.bf16.msra.mxu0 %v4365
        %6095 = vmatprep.subr.bf16.mxu0 %v4364
        %6096 = vmatpush1.bf16.msra.mxu0 %v4363
        %6097 = vmatprep.subr.bf16.mxu0 %v4362
        %6098 = vmatpush1.bf16.msra.mxu0 %v4361
        %6099 = vmatprep.subr.bf16.mxu0 %v4360
        %6100 = vmatpush1.bf16.msra.mxu0 %v4359
        %6101 = vmatprep.subr.bf16.mxu0 %v4358
        %6102 = vmatpush1.bf16.msra.mxu0 %v4357
        %6103 = vmatprep.subr.bf16.mxu0 %v4388
        %6104 = vmatpush2.bf16.msra.mxu0 %v4387
        %6105 = vmatprep.subr.bf16.mxu0 %v4386
        %6106 = vmatpush2.bf16.msra.mxu0 %v4385
        %6107 = vmatprep.subr.bf16.mxu0 %v4384
        %6108 = vmatpush2.bf16.msra.mxu0 %v4383
        %6109 = vmatprep.subr.bf16.mxu0 %v4382
        %6110 = vmatpush2.bf16.msra.mxu0 %v4381
        %6111 = vmatprep.subr.bf16.mxu0 %v4380
        %6112 = vmatpush2.bf16.msra.mxu0 %v4379
        %6113 = vmatprep.subr.bf16.mxu0 %v4378
        %6114 = vmatpush2.bf16.msra.mxu0 %v4377
        %6115 = vmatprep.subr.bf16.mxu0 %v4376
        %6116 = vmatpush2.bf16.msra.mxu0 %v4375
        %6117 = vmatprep.subr.bf16.mxu0 %v4374
        %6118 = vmatpush2.bf16.msra.mxu0 %v4373
        %6119 = vmatprep.mubr.bf16.mxu0 %v1312
        %6120 = vmatmul.mubr.bf16.gmra.mxu0 %v1298
        %v6121 = vpop.f32.mrf.mxu0
        %v6122 = vadd.f32 %v6081, %v6121
        %v6123 = vpop.f32.mrf.mxu0
        %v6124 = vadd.f32 %v6083, %v6123
        %v6125 = vpop.f32.mrf.mxu0
        %v6126 = vpop.f32.mrf.mxu0
        %6127 = vdwg.mxu0
        %6128 = vmatprep.subr.bf16.mxu0 %v4404
        %6129 = vmatpush1.bf16.msra.mxu0 %v4403
        %6130 = vmatprep.subr.bf16.mxu0 %v4402
        %6131 = vmatpush1.bf16.msra.mxu0 %v4401
        %6132 = vmatprep.subr.bf16.mxu0 %v4400
        %6133 = vmatpush1.bf16.msra.mxu0 %v4399
        %6134 = vmatprep.subr.bf16.mxu0 %v4398
        %6135 = vmatpush1.bf16.msra.mxu0 %v4397
        %6136 = vmatprep.subr.bf16.mxu0 %v4396
        %6137 = vmatpush1.bf16.msra.mxu0 %v4395
        %6138 = vmatprep.subr.bf16.mxu0 %v4394
        %6139 = vmatpush1.bf16.msra.mxu0 %v4393
        %6140 = vmatprep.subr.bf16.mxu0 %v4392
        %6141 = vmatpush1.bf16.msra.mxu0 %v4391
        %6142 = vmatprep.subr.bf16.mxu0 %v4390
        %6143 = vmatpush1.bf16.msra.mxu0 %v4389
        %6144 = vmatprep.subr.bf16.mxu0 %v4420
        %6145 = vmatpush2.bf16.msra.mxu0 %v4419
        %6146 = vmatprep.subr.bf16.mxu0 %v4418
        %6147 = vmatpush2.bf16.msra.mxu0 %v4417
        %6148 = vmatprep.subr.bf16.mxu0 %v4416
        %6149 = vmatpush2.bf16.msra.mxu0 %v4415
        %6150 = vmatprep.subr.bf16.mxu0 %v4414
        %6151 = vmatpush2.bf16.msra.mxu0 %v4413
        %6152 = vmatprep.subr.bf16.mxu0 %v4412
        %6153 = vmatpush2.bf16.msra.mxu0 %v4411
        %6154 = vmatprep.subr.bf16.mxu0 %v4410
        %6155 = vmatpush2.bf16.msra.mxu0 %v4409
        %6156 = vmatprep.subr.bf16.mxu0 %v4408
        %6157 = vmatpush2.bf16.msra.mxu0 %v4407
        %6158 = vmatprep.subr.bf16.mxu0 %v4406
        %6159 = vmatpush2.bf16.msra.mxu0 %v4405
        %6160 = vmatprep.mubr.bf16.mxu0 %v1316
        %6161 = vmatmul.mubr.bf16.gmra.mxu0 %v1314
        %v6162 = vpop.f32.mrf.mxu0
        %v6163 = vadd.f32 %v6122, %v6162
        %v6164 = vpop.f32.mrf.mxu0
        %v6165 = vadd.f32 %v6124, %v6164
        %v6166 = vpop.f32.mrf.mxu0
        %v6167 = vpop.f32.mrf.mxu0
        %6168 = vdwg.mxu0
        %6169 = vmatprep.subr.bf16.mxu0 %v4436
        %6170 = vmatpush1.bf16.msra.mxu0 %v4435
        %6171 = vmatprep.subr.bf16.mxu0 %v4434
        %6172 = vmatpush1.bf16.msra.mxu0 %v4433
        %6173 = vmatprep.subr.bf16.mxu0 %v4432
        %6174 = vmatpush1.bf16.msra.mxu0 %v4431
        %6175 = vmatprep.subr.bf16.mxu0 %v4430
        %6176 = vmatpush1.bf16.msra.mxu0 %v4429
        %6177 = vmatprep.subr.bf16.mxu0 %v4428
        %6178 = vmatpush1.bf16.msra.mxu0 %v4427
        %6179 = vmatprep.subr.bf16.mxu0 %v4426
        %6180 = vmatpush1.bf16.msra.mxu0 %v4425
        %6181 = vmatprep.subr.bf16.mxu0 %v4424
        %6182 = vmatpush1.bf16.msra.mxu0 %v4423
        %6183 = vmatprep.subr.bf16.mxu0 %v4422
        %6184 = vmatpush1.bf16.msra.mxu0 %v4421
        %6185 = vmatprep.subr.bf16.mxu0 %v4452
        %6186 = vmatpush2.bf16.msra.mxu0 %v4451
        %6187 = vmatprep.subr.bf16.mxu0 %v4450
        %6188 = vmatpush2.bf16.msra.mxu0 %v4449
        %6189 = vmatprep.subr.bf16.mxu0 %v4448
        %6190 = vmatpush2.bf16.msra.mxu0 %v4447
        %6191 = vmatprep.subr.bf16.mxu0 %v4446
        %6192 = vmatpush2.bf16.msra.mxu0 %v4445
        %6193 = vmatprep.subr.bf16.mxu0 %v4444
        %6194 = vmatpush2.bf16.msra.mxu0 %v4443
        %6195 = vmatprep.subr.bf16.mxu0 %v4442
        %6196 = vmatpush2.bf16.msra.mxu0 %v4441
        %6197 = vmatprep.subr.bf16.mxu0 %v4440
        %6198 = vmatpush2.bf16.msra.mxu0 %v4439
        %6199 = vmatprep.subr.bf16.mxu0 %v4438
        %6200 = vmatpush2.bf16.msra.mxu0 %v4437
        %6201 = vmatprep.mubr.bf16.mxu0 %v1354
        %6202 = vmatmul.mubr.bf16.gmra.mxu0 %v1340
        %v6203 = vpop.f32.mrf.mxu0
        %v6204 = vadd.f32 %v6163, %v6203
        %v6205 = vpop.f32.mrf.mxu0
        %v6206 = vadd.f32 %v6165, %v6205
        %v6207 = vpop.f32.mrf.mxu0
        %v6208 = vpop.f32.mrf.mxu0
        %6209 = vdwg.mxu0
        %6210 = vmatprep.subr.bf16.mxu0 %v4468
        %6211 = vmatpush1.bf16.msra.mxu0 %v4467
        %6212 = vmatprep.subr.bf16.mxu0 %v4466
        %6213 = vmatpush1.bf16.msra.mxu0 %v4465
        %6214 = vmatprep.subr.bf16.mxu0 %v4464
        %6215 = vmatpush1.bf16.msra.mxu0 %v4463
        %6216 = vmatprep.subr.bf16.mxu0 %v4462
        %6217 = vmatpush1.bf16.msra.mxu0 %v4461
        %6218 = vmatprep.subr.bf16.mxu0 %v4460
        %6219 = vmatpush1.bf16.msra.mxu0 %v4459
        %6220 = vmatprep.subr.bf16.mxu0 %v4458
        %6221 = vmatpush1.bf16.msra.mxu0 %v4457
        %6222 = vmatprep.subr.bf16.mxu0 %v4456
        %6223 = vmatpush1.bf16.msra.mxu0 %v4455
        %6224 = vmatprep.subr.bf16.mxu0 %v4454
        %6225 = vmatpush1.bf16.msra.mxu0 %v4453
        %6226 = vmatprep.subr.bf16.mxu0 %v4484
        %6227 = vmatpush2.bf16.msra.mxu0 %v4483
        %6228 = vmatprep.subr.bf16.mxu0 %v4482
        %6229 = vmatpush2.bf16.msra.mxu0 %v4481
        %6230 = vmatprep.subr.bf16.mxu0 %v4480
        %6231 = vmatpush2.bf16.msra.mxu0 %v4479
        %6232 = vmatprep.subr.bf16.mxu0 %v4478
        %6233 = vmatpush2.bf16.msra.mxu0 %v4477
        %6234 = vmatprep.subr.bf16.mxu0 %v4476
        %6235 = vmatpush2.bf16.msra.mxu0 %v4475
        %6236 = vmatprep.subr.bf16.mxu0 %v4474
        %6237 = vmatpush2.bf16.msra.mxu0 %v4473
        %6238 = vmatprep.subr.bf16.mxu0 %v4472
        %6239 = vmatpush2.bf16.msra.mxu0 %v4471
        %6240 = vmatprep.subr.bf16.mxu0 %v4470
        %6241 = vmatpush2.bf16.msra.mxu0 %v4469
        %6242 = vmatprep.mubr.bf16.mxu0 %v1364
        %6243 = vmatmul.mubr.bf16.gmra.mxu0 %v1362
        %v6244 = vpop.f32.mrf.mxu0
        %v6245 = vadd.f32 %v6204, %v6244
        %v6246 = vpop.f32.mrf.mxu0
        %v6247 = vadd.f32 %v6206, %v6246
        %v6248 = vpop.f32.mrf.mxu0
        %v6249 = vpop.f32.mrf.mxu0
        %6250 = vdwg.mxu0
        %6251 = vmatprep.subr.bf16.mxu0 %v4500
        %6252 = vmatpush1.bf16.msra.mxu0 %v4499
        %6253 = vmatprep.subr.bf16.mxu0 %v4498
        %6254 = vmatpush1.bf16.msra.mxu0 %v4497
        %6255 = vmatprep.subr.bf16.mxu0 %v4496
        %6256 = vmatpush1.bf16.msra.mxu0 %v4495
        %6257 = vmatprep.subr.bf16.mxu0 %v4494
        %6258 = vmatpush1.bf16.msra.mxu0 %v4493
        %6259 = vmatprep.subr.bf16.mxu0 %v4492
        %6260 = vmatpush1.bf16.msra.mxu0 %v4491
        %6261 = vmatprep.subr.bf16.mxu0 %v4490
        %6262 = vmatpush1.bf16.msra.mxu0 %v4489
        %6263 = vmatprep.subr.bf16.mxu0 %v4488
        %6264 = vmatpush1.bf16.msra.mxu0 %v4487
        %6265 = vmatprep.subr.bf16.mxu0 %v4486
        %6266 = vmatpush1.bf16.msra.mxu0 %v4485
        %6267 = vmatprep.subr.bf16.mxu0 %v4516
        %6268 = vmatpush2.bf16.msra.mxu0 %v4515
        %6269 = vmatprep.subr.bf16.mxu0 %v4514
        %6270 = vmatpush2.bf16.msra.mxu0 %v4513
        %6271 = vmatprep.subr.bf16.mxu0 %v4512
        %6272 = vmatpush2.bf16.msra.mxu0 %v4511
        %6273 = vmatprep.subr.bf16.mxu0 %v4510
        %6274 = vmatpush2.bf16.msra.mxu0 %v4509
        %6275 = vmatprep.subr.bf16.mxu0 %v4508
        %6276 = vmatpush2.bf16.msra.mxu0 %v4507
        %6277 = vmatprep.subr.bf16.mxu0 %v4506
        %6278 = vmatpush2.bf16.msra.mxu0 %v4505
        %6279 = vmatprep.subr.bf16.mxu0 %v4504
        %6280 = vmatpush2.bf16.msra.mxu0 %v4503
        %6281 = vmatprep.subr.bf16.mxu0 %v4502
        %6282 = vmatpush2.bf16.msra.mxu0 %v4501
        %6283 = vmatprep.mubr.bf16.mxu0 %v1361
        %6284 = vmatmul.mubr.bf16.gmra.mxu0 %v1347
        %v6285 = vpop.f32.mrf.mxu0
        %v6286 = vadd.f32 %v6245, %v6285
        %v6287 = vpop.f32.mrf.mxu0
        %v6288 = vadd.f32 %v6247, %v6287
        %v6289 = vpop.f32.mrf.mxu0
        %v6290 = vpop.f32.mrf.mxu0
        %6291 = vdwg.mxu0
        %6292 = vmatprep.subr.bf16.mxu0 %v4532
        %6293 = vmatpush1.bf16.msra.mxu0 %v4531
        %6294 = vmatprep.subr.bf16.mxu0 %v4530
        %6295 = vmatpush1.bf16.msra.mxu0 %v4529
        %6296 = vmatprep.subr.bf16.mxu0 %v4528
        %6297 = vmatpush1.bf16.msra.mxu0 %v4527
        %6298 = vmatprep.subr.bf16.mxu0 %v4526
        %6299 = vmatpush1.bf16.msra.mxu0 %v4525
        %6300 = vmatprep.subr.bf16.mxu0 %v4524
        %6301 = vmatpush1.bf16.msra.mxu0 %v4523
        %6302 = vmatprep.subr.bf16.mxu0 %v4522
        %6303 = vmatpush1.bf16.msra.mxu0 %v4521
        %6304 = vmatprep.subr.bf16.mxu0 %v4520
        %6305 = vmatpush1.bf16.msra.mxu0 %v4519
        %6306 = vmatprep.subr.bf16.mxu0 %v4518
        %6307 = vmatpush1.bf16.msra.mxu0 %v4517
        %6308 = vmatprep.subr.bf16.mxu0 %v4548
        %6309 = vmatpush2.bf16.msra.mxu0 %v4547
        %6310 = vmatprep.subr.bf16.mxu0 %v4546
        %6311 = vmatpush2.bf16.msra.mxu0 %v4545
        %6312 = vmatprep.subr.bf16.mxu0 %v4544
        %6313 = vmatpush2.bf16.msra.mxu0 %v4543
        %6314 = vmatprep.subr.bf16.mxu0 %v4542
        %6315 = vmatpush2.bf16.msra.mxu0 %v4541
        %6316 = vmatprep.subr.bf16.mxu0 %v4540
        %6317 = vmatpush2.bf16.msra.mxu0 %v4539
        %6318 = vmatprep.subr.bf16.mxu0 %v4538
        %6319 = vmatpush2.bf16.msra.mxu0 %v4537
        %6320 = vmatprep.subr.bf16.mxu0 %v4536
        %6321 = vmatpush2.bf16.msra.mxu0 %v4535
        %6322 = vmatprep.subr.bf16.mxu0 %v4534
        %6323 = vmatpush2.bf16.msra.mxu0 %v4533
        %6324 = vmatprep.mubr.bf16.mxu0 %v1365
        %6325 = vmatmul.mubr.bf16.gmra.mxu0 %v1363
        %v6326 = vpop.f32.mrf.mxu0
        %v6327 = vadd.f32 %v6286, %v6326
        %v6328 = vpop.f32.mrf.mxu0
        %v6329 = vadd.f32 %v6288, %v6328
        %v6330 = vpop.f32.mrf.mxu0
        %v6331 = vpop.f32.mrf.mxu0
        %6332 = vdwg.mxu0
        %6333 = vmatprep.subr.bf16.mxu0 %v4564
        %6334 = vmatpush1.bf16.msra.mxu0 %v4563
        %6335 = vmatprep.subr.bf16.mxu0 %v4562
        %6336 = vmatpush1.bf16.msra.mxu0 %v4561
        %6337 = vmatprep.subr.bf16.mxu0 %v4560
        %6338 = vmatpush1.bf16.msra.mxu0 %v4559
        %6339 = vmatprep.subr.bf16.mxu0 %v4558
        %6340 = vmatpush1.bf16.msra.mxu0 %v4557
        %6341 = vmatprep.subr.bf16.mxu0 %v4556
        %6342 = vmatpush1.bf16.msra.mxu0 %v4555
        %6343 = vmatprep.subr.bf16.mxu0 %v4554
        %6344 = vmatpush1.bf16.msra.mxu0 %v4553
        %6345 = vmatprep.subr.bf16.mxu0 %v4552
        %6346 = vmatpush1.bf16.msra.mxu0 %v4551
        %6347 = vmatprep.subr.bf16.mxu0 %v4550
        %6348 = vmatpush1.bf16.msra.mxu0 %v4549
        %6349 = vmatprep.subr.bf16.mxu0 0
        %6350 = vmatpush2.bf16.msra.mxu0 0
        %6351 = vmatprep.subr.bf16.mxu0 0
        %6352 = vmatpush2.bf16.msra.mxu0 0
        %6353 = vmatprep.subr.bf16.mxu0 0
        %6354 = vmatpush2.bf16.msra.mxu0 0
        %6355 = vmatprep.subr.bf16.mxu0 0
        %6356 = vmatpush2.bf16.msra.mxu0 0
        %6357 = vmatprep.subr.bf16.mxu0 0
        %6358 = vmatpush2.bf16.msra.mxu0 0
        %6359 = vmatprep.subr.bf16.mxu0 0
        %6360 = vmatpush2.bf16.msra.mxu0 0
        %6361 = vmatprep.subr.bf16.mxu0 0
        %6362 = vmatpush2.bf16.msra.mxu0 0
        %6363 = vmatprep.subr.bf16.mxu0 0
        %6364 = vmatpush2.bf16.msra.mxu0 0
        %6365 = vmatprep.mubr.bf16.mxu0 0
        %6366 = vmatmul.mubr.bf16.gmra.mxu0 %v1379
        %v6367 = vpop.f32.mrf.mxu0
        %v6368 = vadd.f32 %v6327, %v6367
        %v6369 = vpop.f32.mrf.mxu0
        %v6370 = vadd.f32 %v6329, %v6369
        %v6371 = vpop.f32.mrf.mxu0
        %v6372 = vpop.f32.mrf.mxu0
        %6373 = vdwg.mxu0
        %v6376 = vcombine.low %v6368, %v6370
        %v6378 = vunpack.c.l.s4 1983009808
        %v6379 = vunpack.c.0.s8 %v6378
        %v6380 = vlaneseq
        %v6381 = vshrl.u32 %v6380, 7
        %v6382 = vsub.s32 %v6379, %v6381
        %v6383 = vrot.slane %v6376, %v6382
        %v6385 = vadd.f32 %v273, %v6383
        %6386 = vst [vmem:[#allocation2] sm:$0xf] %v6385
        // Predicated region
        $region49: #{tpu_custom_call.1} parent=31 // pred_check
          %p6387 = pneg %p268
        $region50: #{tpu_custom_call.1} parent=31 // pred_check_branch
          %6389 = sbr.rel (%p6387) target = $region52
        $region51: #{tpu_custom_call.1} parent=31 // pred_region
          %v6390 = vld [vmem:[#allocation2] sm:$0xf]
          %v6391 = vld [vmem:[%s234] sm:$0x3]
          %v6393 = vlaneseq
          %v6394 = vshrl.u32 %v6393, 7
          %v6395 = vsub.s32 0, %v6394
          %v6396 = vrot.slane %v6391, %v6395
          %v6397 = vlaneseq
          %v6398 = vshrl.u32 %v6397, 7
          %v6399 = vsub.s32 1, %v6398
          %v6400 = vrot.slane %v6391, %v6399
          %v6401 = vcombine.low %v6396, %v6400
          %v6403 = vunpack.c.l.s4 1983009808
          %v6404 = vunpack.c.0.s8 %v6403
          %v6405 = vlaneseq
          %v6406 = vshrl.u32 %v6405, 7
          %v6407 = vsub.s32 %v6404, %v6406
          %v6408 = vrot.slane %v6401, %v6407
          %v6410 = vadd.f32 %v6390, %v6408
          %vm6411 = vcmp.ge.f32.partialorder %v6410, 0.0
          %v6412 = vmul.f32 %v6410, 0.01
          %v6413 = vsel %vm6411, %v6410, %v6412
          %v6416 = vunpack.c.l.s4 1983009808
          %v6417 = vunpack.c.0.s8 %v6416
          %v6418 = vlaneseq
          %v6419 = vshrl.u32 %v6418, 7
          %v6420 = vsub.s32 %v6417, %v6419
          %v6421 = vrot.slane %v6413, %v6420
          %v6422 = vcombine.high %v6421, %v6421
          %v6425 = vpack.c.bf16 %v6421, %v6421
          %v6426 = vpack.c.bf16 %v6422, %v6422
          %v6429 = vcombine.low %v6425, %v6426
          %v6431 = vunpack.c.l.s4 1966171168
          %v6432 = vunpack.c.0.s8 %v6431
          %v6433 = vlaneseq
          %v6434 = vshrl.u32 %v6433, 7
          %v6435 = vsub.s32 %v6432, %v6434
          %v6436 = vrot.slane %v6429, %v6435
          %v6438 = vunpack.c.l.s4 1966171168
          %v6439 = vunpack.c.0.s8 %v6438
          %v6440 = vlaneseq
          %v6441 = vshrl.u32 %v6440, 7
          %v6442 = vsub.s32 %v6439, %v6441
          %v6443 = vrot.slane %v6436, %v6442
          %6445 = vst [vmem:[%s261] sm:$0x3] %v6443
        $region52: #{tpu_custom_call.1} parent=31 // pred_fallthru
          _
        %s6446 = sand.u32 %s121, 1
        %s6447 = scalar_lea.sflag [#allocation5], %s6446
        %s6448 = sand.u32 %s121, 1
        %s6449 = smul.addr %s6448, 2
        %s6450 = scalar_lea.vmem [#allocation9], %s6449
        // Predicated region
        $region53: #{tpu_custom_call.1} parent=31 // pred_check
          %p6451 = pneg %p131
        $region54: #{tpu_custom_call.1} parent=31 // pred_check_branch
          %6453 = sbr.rel (%p6451) target = $region56
        $region55: #{tpu_custom_call.1} parent=31 // pred_region
          %s6454 = smul.u32 2, %s25
          %s6456 = ssub.s32 32, 32
          %6457 = vsyncadd %s6447, %s6456
          %s6458 = smul.addr %s6454, 16
          %s6459 = scalar_lea.hbm %s3, %s6458
          %s6461 = sshll.u32 %s6450, 4
          %s6462 = int_to_ptr.vmem [resolvable:$true] %s6461
          %6464 = dma.vmem_to_hbm [thread:$0]  %s6462, 32, %s6459, %s6447
        $region56: #{tpu_custom_call.1} parent=31 // pred_fallthru
          _
      $region32: #{tpu_custom_call.1} parent=5 // pred_fallthru
        _
      %p6465 = scmp.le.s32.totalorder 2, %s16
      // Predicated region
      $region57: #{tpu_custom_call.1} parent=5 // pred_check
        %p6466 = pneg %p6465
      $region58: #{tpu_custom_call.1} parent=5 // pred_check_branch
        %6468 = sbr.rel (%p6466) target = $region60
      $region59: #{tpu_custom_call.1} parent=5 // pred_region
        %s6469 = ssub.s32 %s16, 2
        // Predicated region
        $region61: #{tpu_custom_call.1} parent=59 // pred_check
          %p6470 = pneg %p137
        $region62: #{tpu_custom_call.1} parent=59 // pred_check_branch
          %6472 = sbr.rel (%p6470) target = $region64
        $region63: #{tpu_custom_call.1} parent=59 // pred_region
          %s6473 = sand.u32 %s122, 1
          %s6474 = scalar_lea.sflag [#allocation5], %s6473
          %s6475 = sand.u32 %s122, 1
          %s6476 = smul.addr %s6475, 2
          %s6477 = scalar_lea.vmem [#allocation9], %s6476
          %6478 = dma.done %s6474, 32
        $region64: #{tpu_custom_call.1} parent=59 // pred_fallthru
          _
      $region60: #{tpu_custom_call.1} parent=5 // pred_fallthru
        _
    $region6: #{tpu_custom_call.1} parent=1 // loop_footer
      %s20 = sadd.s32 1, %s16
    $region7: #{tpu_custom_call.1} parent=1 // loop_footer_branch
      %15 = sbr.rel target = $region3
    $region8: #{tpu_custom_call.1} parent=1 // loop_exit
      _
    %6479 = vsyncpa [#allocation4], 1
    %s6480 = scalar_lea.sflag [#allocation4], 1
    %6481 = vsyncpa %s6480, 1
    %6482 = vsyncpa [#allocation7], 1
    %s6483 = scalar_lea.sflag [#allocation7], 1
    %6484 = vsyncpa %s6483, 1
    %6485 = vsyncpa [#allocation5], 1
    %s6486 = scalar_lea.sflag [#allocation5], 1
    %6487 = vsyncpa %s6486, 1

</llo_original>
